<compile_context>
chip_gen: v7x
topology: tpu7x:2x2x1
jax: 0.10.0
libtpu: 0.0.40
codegen_flags: <defaults>
</compile_context>

<pallas_src>
from functools import partial

import jax
import jax.numpy as jnp
from jax import lax
from jax.experimental import pallas as pl
from jax.experimental.pallas import tpu as pltpu

IN_CH = 4       # in_channels
HIDDEN = 64     # fixed by the module (Linear(2*in, 64))
OUT_CH = 8      # out_channels
K = 4           # k nearest neighbors (module default 20; small here for small N)
TQ = 128        # query tile (points padded to a multiple of TQ)
GQ = 8          # queries per program (second grid axis); one (GQ*nc,64) MXU call
NC_MAX = 512    # max candidate chunk per inner step (bounds live VMEM slabs)
BIG = 1e30


def edgeconv_kernel(xq_ref, xaT_ref, bq_ref, ba_ref, ai_ref, aj_ref,
                    w2_ref, b2_ref, o_ref, pen_ref, *, k, gq, nc, big):
    n = aj_ref.shape[0]
    g = pl.program_id(1)

    # ---- k-NN selection: once per query tile, cached in VMEM scratch --------
    @pl.when(g == 0)
    def _():
        xq = xq_ref[...].astype(jnp.float32)                  # (TQ, C) queries
        xaT = xaT_ref[...].astype(jnp.float32)                # (C, N) candidates^T
        sq = jnp.sum(xaT * xaT, axis=0, keepdims=True)        # (1, N)  ||x_j||^2
        # shifted squared distance d[q, n] = ||x_n||^2 - 2<x_q, x_n>
        # (order-preserving per query row; no in-kernel transposes needed)
        cross = jnp.dot(xq, xaT, preferred_element_type=jnp.float32)  # (TQ, N)
        d = sq - 2.0 * cross
        same = bq_ref[...] == ba_ref[...]                     # (TQ,1)==(1,N)
        d = jnp.where(same, d, big)
        # k-th smallest per query via k min-mask passes (k lane-reductions total)
        dwork = d
        kth = None
        for _ in range(k):
            kth = jnp.min(dwork, axis=1, keepdims=True)       # (TQ, 1)
            dwork = jnp.where(dwork <= kth, big, dwork)
        # additive penalty: 0 for selected neighbors, -big otherwise
        pen_ref[...] = jnp.where((d <= kth) & same, 0.0, -big).astype(jnp.float32)

    # ---- edge MLP + masked max aggregation for this group of gq queries -----
    ai_g = ai_ref[...]                                        # (gq, H)
    w2 = w2_ref[...]                                          # (H, OUTP)
    outp = o_ref.shape[1]
    g0 = pl.multiple_of(g * gq, gq)

    def mlp_max(ajc, penc, run):
        m = ajc.shape[0]
        # relu([x_i, x_j - x_i] @ W1 + b1) = relu(a_i + a_j): one broadcast slab
        h1 = jnp.maximum(ai_g[:, None, :] + ajc[None, :, :], 0.0)   # (gq, m, H)
        h2 = jnp.dot(h1.reshape(gq * m, h1.shape[-1]), w2,
                     preferred_element_type=jnp.float32)             # (gq*m, OUTP)
        h2 = h2.reshape(gq, m, outp) + penc[:, :, None]
        return jnp.maximum(run, jnp.max(h2, axis=1))                 # (gq, OUTP)

    init = jnp.full((gq, outp), -big, jnp.float32)
    if n == nc:                                   # single chunk: static path
        res = mlp_max(aj_ref[...], pen_ref[pl.ds(g0, gq), :], init)
    else:                                         # candidate-chunked running max
        def body(c, run):
            c0 = pl.multiple_of(c * nc, nc)
            return mlp_max(aj_ref[pl.ds(c0, nc), :],
                           pen_ref[pl.ds(g0, gq), pl.ds(c0, nc)], run)
        res = lax.fori_loop(0, n // nc, body, init)

    o_ref[...] = res + b2_ref[...]                # b2 added after the max


def edge_conv_block(x, batch, params, *, k=K, tq=TQ, gq=GQ, nc_max=NC_MAX,
                    mlp_dtype=jnp.float32):
    """x: (N, C) float node features; batch: (N,) int graph ids."""
    N, C = x.shape
    w1, b1, w2, b2 = params["w1"], params["b1"], params["w2"], params["b2"]
    H = w1.shape[1]
    out_ch = w2.shape[1]
    assert tq % gq == 0 and tq % 128 == 0 and gq % 8 == 0 and k >= 1
    assert nc_max % 128 == 0

    # pad point count to a multiple of the query tile; pad points get graph
    # id -1 so they never mix with real points (sliced off at the end).
    n_pad = ((N + tq - 1) // tq) * tq
    pad = n_pad - N
    xp = jnp.pad(x.astype(jnp.float32), ((0, pad), (0, 0)))
    bp = jnp.pad(batch.astype(jnp.int32), (0, pad), constant_values=-1)

    # hoisted per-point precompute (plain XLA, once — not once per tile)
    wi = (w1[:C] - w1[C:]).astype(jnp.float32)                 # (C, H) W1a - W1b
    wj = w1[C:].astype(jnp.float32)                            # (C, H) W1b
    ai = (xp @ wi).astype(mlp_dtype)                           # (n_pad, H)
    aj = (xp @ wj + b1.reshape(1, H).astype(jnp.float32)).astype(mlp_dtype)
    xaT = xp.T                                                 # (C, n_pad) lane-dense
    bq = bp.reshape(n_pad, 1)                                  # query ids (column)
    ba = bp.reshape(1, n_pad)                                  # candidate ids (row)

    # lane-dense second Linear / output: pad out_channels to a multiple of 128
    outp = ((out_ch + 127) // 128) * 128
    w2p = jnp.zeros((H, outp), mlp_dtype).at[:, :out_ch].set(w2.astype(mlp_dtype))
    b2p = jnp.zeros((1, outp), jnp.float32).at[:, :out_ch].set(
        b2.reshape(1, out_ch).astype(jnp.float32))

    # candidate chunk: largest multiple of 128 <= nc_max that divides n_pad
    nc = min(n_pad, nc_max)
    while n_pad % nc:
        nc -= 128

    groups = tq // gq
    inv = dict(pipeline_mode=pl.Buffered(1))     # grid-invariant blocks: 1 buffer
    kernel = partial(edgeconv_kernel, k=k, gq=gq, nc=nc, big=BIG)

    out = pl.pallas_call(
        kernel,
        out_shape=jax.ShapeDtypeStruct((n_pad, outp), jnp.float32),
        grid_spec=pltpu.PrefetchScalarGridSpec(
            num_scalar_prefetch=0,
            grid=(n_pad // tq, groups),
            in_specs=[
                pl.BlockSpec((tq, C), lambda t, g: (t, 0)),              # queries
                pl.BlockSpec((C, n_pad), lambda t, g: (0, 0), **inv),    # x^T (all)
                pl.BlockSpec((tq, 1), lambda t, g: (t, 0)),              # query ids
                pl.BlockSpec((1, n_pad), lambda t, g: (0, 0), **inv),    # cand. ids
                pl.BlockSpec((gq, H), lambda t, g: (t * groups + g, 0)),  # a_i group
                pl.BlockSpec((n_pad, H), lambda t, g: (0, 0), **inv),    # a_j (all)
                pl.BlockSpec((H, outp), lambda t, g: (0, 0), **inv),     # W2
                pl.BlockSpec((1, outp), lambda t, g: (0, 0), **inv),     # b2
            ],
            out_specs=pl.BlockSpec((gq, outp), lambda t, g: (t * groups + g, 0)),
            scratch_shapes=[pltpu.VMEM((tq, n_pad), jnp.float32)],  # neighbor penalty
        ),
        compiler_params=pltpu.CompilerParams(
            dimension_semantics=("parallel", "arbitrary"),
            vmem_limit_bytes=48 * 1024 * 1024),
    )(xp, xaT, bq, ba, ai, aj, w2p, b2p)

    return out[:N, :out_ch]


def edge_conv_ref(x, batch, params, *, k=K):
    """Pure-JAX reference matching torch_geometric DynamicEdgeConv semantics."""
    w1, b1, w2, b2 = params["w1"], params["b1"], params["w2"], params["b2"]
    N, C = x.shape
    diff = x[:, None, :] - x[None, :, :]
    d = jnp.sum(diff * diff, axis=-1)
    same = batch[:, None] == batch[None, :]
    d = jnp.where(same, d, jnp.inf)
    _, idx = lax.top_k(-d, k)                                 # includes self
    xi = jnp.broadcast_to(x[:, None, :], (N, k, C))
    xj = x[idx]                                               # (N, k, C)
    feat = jnp.concatenate([xi, xj - xi], axis=-1)            # (N, k, 2C)
    h = jnp.maximum(feat @ w1 + b1, 0.0)
    h = h @ w2 + b2
    return jnp.max(h, axis=1)                                 # "max" aggregation


if __name__ == "__main__":
    key = jax.random.PRNGKey(0)
    k1, k2, k3, k4, kx = jax.random.split(key, 5)

    s1 = 1.0 / (2 * IN_CH) ** 0.5
    s2 = 1.0 / HIDDEN ** 0.5
    params = dict(
        w1=jax.random.uniform(k1, (2 * IN_CH, HIDDEN), jnp.float32, -s1, s1),
        b1=jax.random.uniform(k2, (HIDDEN,), jnp.float32, -s1, s1),
        w2=jax.random.uniform(k3, (HIDDEN, OUT_CH), jnp.float32, -s2, s2),
        b2=jax.random.uniform(k4, (OUT_CH,), jnp.float32, -s2, s2),
    )

    N = 32                                   # two graphs of 16 points each
    x = jax.random.normal(kx, (N, IN_CH), jnp.float32)
    batch = jnp.repeat(jnp.arange(2, dtype=jnp.int32), N // 2)

    out = edge_conv_block(x, batch, params)
    jax.block_until_ready(out)

    ref = edge_conv_ref(x, batch, params)
    assert out.shape == (N, OUT_CH)
    assert jnp.allclose(out, ref, atol=2e-4, rtol=2e-4), "mismatch vs reference"
    print("KERNEL_OK")
</pallas_src>

<mosaic_0001>
module attributes {stable_mosaic.version = 11 : i64} {
  func.func @edgeconv_kernel(%arg0: i32, %arg1: i32, %arg2: memref<128x4xf32, #tpu.memory_space<vmem>>, %arg3: memref<4x128xf32, #tpu.memory_space<vmem>>, %arg4: memref<128x1xi32, #tpu.memory_space<vmem>>, %arg5: memref<1x128xi32, #tpu.memory_space<vmem>>, %arg6: memref<8x64xf32, #tpu.memory_space<vmem>>, %arg7: memref<128x64xf32, #tpu.memory_space<vmem>>, %arg8: memref<64x128xf32, #tpu.memory_space<vmem>>, %arg9: memref<1x128xf32, #tpu.memory_space<vmem>>, %arg10: memref<8x128xf32, #tpu.memory_space<vmem>>, %arg11: memref<128x128xf32, #tpu.memory_space<vmem>>) attributes {dimension_semantics = [#tpu.dimension_semantics<parallel>, #tpu.dimension_semantics<arbitrary>], iteration_bounds = array<i64: 1, 16>, scalar_prefetch = 0 : i64, scratch_operands = 1 : i64, tpu.core_type = #tpu.core_type<tc>, window_params = [{transform_indices = @transform_0, window_bounds = array<i64: 128, 4>}, {pipeline_mode = #tpu.pipeline_mode<synchronous>, transform_indices = @transform_1, window_bounds = array<i64: 4, 128>}, {transform_indices = @transform_2, window_bounds = array<i64: 128, 1>}, {pipeline_mode = #tpu.pipeline_mode<synchronous>, transform_indices = @transform_3, window_bounds = array<i64: 1, 128>}, {transform_indices = @transform_4, window_bounds = array<i64: 8, 64>}, {pipeline_mode = #tpu.pipeline_mode<synchronous>, transform_indices = @transform_5, window_bounds = array<i64: 128, 64>}, {pipeline_mode = #tpu.pipeline_mode<synchronous>, transform_indices = @transform_6, window_bounds = array<i64: 64, 128>}, {pipeline_mode = #tpu.pipeline_mode<synchronous>, transform_indices = @transform_7, window_bounds = array<i64: 1, 128>}, {transform_indices = @transform_8, window_bounds = array<i64: 8, 128>}]} {
    %c0_i32 = arith.constant 0 : i32
    %0 = arith.cmpi eq, %arg1, %c0_i32 : i32
    %1 = arith.extui %0 : i1 to i32
    %c0_i32_0 = arith.constant 0 : i32
    %2 = arith.cmpi ne, %1, %c0_i32_0 : i32
    scf.if %2 {
      %c0_14 = arith.constant 0 : index
      %c0_15 = arith.constant 0 : index
      %30 = vector.load %arg2[%c0_14, %c0_15] : memref<128x4xf32, #tpu.memory_space<vmem>>, vector<128x4xf32>
      %c0_16 = arith.constant 0 : index
      %c0_17 = arith.constant 0 : index
      %31 = vector.load %arg3[%c0_16, %c0_17] : memref<4x128xf32, #tpu.memory_space<vmem>>, vector<4x128xf32>
      %32 = arith.mulf %31, %31 : vector<4x128xf32>
      %cst_18 = arith.constant dense<0.000000e+00> : vector<128xf32>
      %33 = vector.multi_reduction <add>, %32, %cst_18 [0] : vector<4x128xf32> to vector<128xf32>
      %34 = vector.shape_cast %33 : vector<128xf32> to vector<1x128xf32>
      %cst_19 = arith.constant dense<0.000000e+00> : vector<128x128xf32>
      %35 = tpu.matmul %30, %31, %cst_19 {dimension_numbers = #tpu.dot_dimension_numbers<[1], [0], [0], [1], [0, 0, 1, 1], [], []>} : vector<128x4xf32>, vector<4x128xf32>, vector<128x128xf32> -> vector<128x128xf32>
      %cst_20 = arith.constant 2.000000e+00 : f32
      %36 = vector.broadcast %cst_20 : f32 to vector<128x128xf32>
      %37 = arith.mulf %36, %35 : vector<128x128xf32>
      %38 = vector.broadcast %34 : vector<1x128xf32> to vector<128x128xf32>
      %39 = arith.subf %38, %37 : vector<128x128xf32>
      %c0_21 = arith.constant 0 : index
      %c0_22 = arith.constant 0 : index
      %40 = vector.load %arg4[%c0_21, %c0_22] : memref<128x1xi32, #tpu.memory_space<vmem>>, vector<128x1xi32>
      %c0_23 = arith.constant 0 : index
      %c0_24 = arith.constant 0 : index
      %41 = vector.load %arg5[%c0_23, %c0_24] : memref<1x128xi32, #tpu.memory_space<vmem>>, vector<1x128xi32>
      %42 = vector.broadcast %40 : vector<128x1xi32> to vector<128x128xi32>
      %43 = vector.broadcast %41 : vector<1x128xi32> to vector<128x128xi32>
      %44 = arith.cmpi eq, %42, %43 : vector<128x128xi32>
      %cst_25 = arith.constant 1.000000e+30 : f32
      %45 = vector.broadcast %cst_25 : f32 to vector<128x128xf32>
      %46 = arith.select %44, %39, %45 : vector<128x128xi1>, vector<128x128xf32>
      %cst_26 = arith.constant dense<0x7F800000> : vector<128xf32>
      %47 = vector.multi_reduction <minimumf>, %46, %cst_26 [1] : vector<128x128xf32> to vector<128xf32>
      %48 = vector.shape_cast %47 : vector<128xf32> to vector<128x1xf32>
      %49 = vector.broadcast %48 : vector<128x1xf32> to vector<128x128xf32>
      %50 = arith.cmpf ole, %46, %49 : vector<128x128xf32>
      %cst_27 = arith.constant 1.000000e+30 : f32
      %51 = vector.broadcast %cst_27 : f32 to vector<128x128xf32>
      %52 = arith.select %50, %51, %46 : vector<128x128xi1>, vector<128x128xf32>
      %cst_28 = arith.constant dense<0x7F800000> : vector<128xf32>
      %53 = vector.multi_reduction <minimumf>, %52, %cst_28 [1] : vector<128x128xf32> to vector<128xf32>
      %54 = vector.shape_cast %53 : vector<128xf32> to vector<128x1xf32>
      %55 = vector.broadcast %54 : vector<128x1xf32> to vector<128x128xf32>
      %56 = arith.cmpf ole, %52, %55 : vector<128x128xf32>
      %cst_29 = arith.constant 1.000000e+30 : f32
      %57 = vector.broadcast %cst_29 : f32 to vector<128x128xf32>
      %58 = arith.select %56, %57, %52 : vector<128x128xi1>, vector<128x128xf32>
      %cst_30 = arith.constant dense<0x7F800000> : vector<128xf32>
      %59 = vector.multi_reduction <minimumf>, %58, %cst_30 [1] : vector<128x128xf32> to vector<128xf32>
      %60 = vector.shape_cast %59 : vector<128xf32> to vector<128x1xf32>
      %61 = vector.broadcast %60 : vector<128x1xf32> to vector<128x128xf32>
      %62 = arith.cmpf ole, %58, %61 : vector<128x128xf32>
      %cst_31 = arith.constant 1.000000e+30 : f32
      %63 = vector.broadcast %cst_31 : f32 to vector<128x128xf32>
      %64 = arith.select %62, %63, %58 : vector<128x128xi1>, vector<128x128xf32>
      %cst_32 = arith.constant dense<0x7F800000> : vector<128xf32>
      %65 = vector.multi_reduction <minimumf>, %64, %cst_32 [1] : vector<128x128xf32> to vector<128xf32>
      %66 = vector.shape_cast %65 : vector<128xf32> to vector<128x1xf32>
      %67 = vector.broadcast %66 : vector<128x1xf32> to vector<128x128xf32>
      %68 = arith.cmpf ole, %46, %67 : vector<128x128xf32>
      %69 = arith.andi %68, %44 : vector<128x128xi1>
      %cst_33 = arith.constant 0.000000e+00 : f32
      %cst_34 = arith.constant -1.000000e+30 : f32
      %70 = vector.broadcast %cst_33 : f32 to vector<128x128xf32>
      %71 = vector.broadcast %cst_34 : f32 to vector<128x128xf32>
      %72 = arith.select %69, %70, %71 : vector<128x128xi1>, vector<128x128xf32>
      %c0_35 = arith.constant 0 : index
      %c0_36 = arith.constant 0 : index
      %73 = vector.load %arg11[%c0_35, %c0_36] : memref<128x128xf32, #tpu.memory_space<vmem>>, vector<128x128xf32>
      tpu.vector_store %arg11[%c0_35, %c0_36], %72 {strides = array<i32>} : memref<128x128xf32, #tpu.memory_space<vmem>>, vector<128x128xf32>,
    } else {
    }
    %c0 = arith.constant 0 : index
    %c0_1 = arith.constant 0 : index
    %3 = vector.load %arg6[%c0, %c0_1] : memref<8x64xf32, #tpu.memory_space<vmem>>, vector<8x64xf32>
    %c0_2 = arith.constant 0 : index
    %c0_3 = arith.constant 0 : index
    %4 = vector.load %arg8[%c0_2, %c0_3] : memref<64x128xf32, #tpu.memory_space<vmem>>, vector<64x128xf32>
    %c8_i32 = arith.constant 8 : i32
    %5 = arith.muli %arg1, %c8_i32 : i32
    %6 = tpu.assume_multiple %5, 8 : i32
    %cst = arith.constant -1.000000e+30 : f32
    %7 = vector.broadcast %cst : f32 to vector<8x128xf32>
    %c0_4 = arith.constant 0 : index
    %c0_5 = arith.constant 0 : index
    %8 = vector.load %arg7[%c0_4, %c0_5] : memref<128x64xf32, #tpu.memory_space<vmem>>, vector<128x64xf32>
    %9 = arith.index_cast %6 : i32 to index
    %c0_6 = arith.constant 0 : index
    %10 = vector.load %arg11[%9, %c0_6] : memref<128x128xf32, #tpu.memory_space<vmem>>, vector<8x128xf32>
    %11 = vector.shape_cast %3 : vector<8x64xf32> to vector<8x1x64xf32>
    %12 = vector.shape_cast %8 : vector<128x64xf32> to vector<1x128x64xf32>
    %13 = vector.broadcast %11 : vector<8x1x64xf32> to vector<8x128x64xf32>
    %14 = vector.broadcast %12 : vector<1x128x64xf32> to vector<8x128x64xf32>
    %15 = arith.addf %13, %14 : vector<8x128x64xf32>
    %cst_7 = arith.constant 0.000000e+00 : f32
    %16 = vector.broadcast %cst_7 : f32 to vector<8x128x64xf32>
    %17 = arith.maximumf %15, %16 : vector<8x128x64xf32>
    %18 = vector.shape_cast %17 : vector<8x128x64xf32> to vector<1024x64xf32>
    %cst_8 = arith.constant dense<0.000000e+00> : vector<1024x128xf32>
    %19 = tpu.matmul %18, %4, %cst_8 {dimension_numbers = #tpu.dot_dimension_numbers<[1], [0], [0], [1], [0, 0, 1, 1], [], []>} : vector<1024x64xf32>, vector<64x128xf32>, vector<1024x128xf32> -> vector<1024x128xf32>
    %20 = vector.shape_cast %19 : vector<1024x128xf32> to vector<8x128x128xf32>
    %21 = vector.shape_cast %10 : vector<8x128xf32> to vector<8x128x1xf32>
    %22 = vector.broadcast %21 : vector<8x128x1xf32> to vector<8x128x128xf32>
    %23 = arith.addf %20, %22 : vector<8x128x128xf32>
    %cst_9 = arith.constant dense<0xFF800000> : vector<8x128xf32>
    %24 = vector.multi_reduction <maximumf>, %23, %cst_9 [1] : vector<8x128x128xf32> to vector<8x128xf32>
    %25 = arith.maximumf %7, %24 : vector<8x128xf32>
    %c0_10 = arith.constant 0 : index
    %c0_11 = arith.constant 0 : index
    %26 = vector.load %arg9[%c0_10, %c0_11] : memref<1x128xf32, #tpu.memory_space<vmem>>, vector<1x128xf32>
    %27 = vector.broadcast %26 : vector<1x128xf32> to vector<8x128xf32>
    %28 = arith.addf %25, %27 : vector<8x128xf32>
    %c0_12 = arith.constant 0 : index
    %c0_13 = arith.constant 0 : index
    %29 = vector.load %arg10[%c0_12, %c0_13] : memref<8x128xf32, #tpu.memory_space<vmem>>, vector<8x128xf32>
    tpu.vector_store %arg10[%c0_12, %c0_13], %28 {strides = array<i32>} : memref<8x128xf32, #tpu.memory_space<vmem>>, vector<8x128xf32>,
    return
  }
  func.func @transform_0(%arg0: i32, %arg1: i32) -> (i32, i32) {
    %c0_i32 = arith.constant 0 : i32
    %c0_i32_0 = arith.constant 0 : i32
    return %arg0, %c0_i32 : i32, i32
  }
  func.func @transform_1(%arg0: i32, %arg1: i32) -> (i32, i32) {
    %c0_i32 = arith.constant 0 : i32
    %c0_i32_0 = arith.constant 0 : i32
    %c0_i32_1 = arith.constant 0 : i32
    return %c0_i32, %c0_i32_0 : i32, i32
  }
  func.func @transform_2(%arg0: i32, %arg1: i32) -> (i32, i32) {
    %c0_i32 = arith.constant 0 : i32
    %c0_i32_0 = arith.constant 0 : i32
    return %arg0, %c0_i32 : i32, i32
  }
  func.func @transform_3(%arg0: i32, %arg1: i32) -> (i32, i32) {
    %c0_i32 = arith.constant 0 : i32
    %c0_i32_0 = arith.constant 0 : i32
    %c0_i32_1 = arith.constant 0 : i32
    return %c0_i32, %c0_i32_0 : i32, i32
  }
  func.func @transform_4(%arg0: i32, %arg1: i32) -> (i32, i32) {
    %c16_i32 = arith.constant 16 : i32
    %0 = arith.muli %arg0, %c16_i32 : i32
    %1 = arith.addi %0, %arg1 : i32
    %c0_i32 = arith.constant 0 : i32
    %c0_i32_0 = arith.constant 0 : i32
    return %1, %c0_i32 : i32, i32
  }
  func.func @transform_5(%arg0: i32, %arg1: i32) -> (i32, i32) {
    %c0_i32 = arith.constant 0 : i32
    %c0_i32_0 = arith.constant 0 : i32
    %c0_i32_1 = arith.constant 0 : i32
    return %c0_i32, %c0_i32_0 : i32, i32
  }
  func.func @transform_6(%arg0: i32, %arg1: i32) -> (i32, i32) {
    %c0_i32 = arith.constant 0 : i32
    %c0_i32_0 = arith.constant 0 : i32
    %c0_i32_1 = arith.constant 0 : i32
    return %c0_i32, %c0_i32_0 : i32, i32
  }
  func.func @transform_7(%arg0: i32, %arg1: i32) -> (i32, i32) {
    %c0_i32 = arith.constant 0 : i32
    %c0_i32_0 = arith.constant 0 : i32
    %c0_i32_1 = arith.constant 0 : i32
    return %c0_i32, %c0_i32_0 : i32, i32
  }
  func.func @transform_8(%arg0: i32, %arg1: i32) -> (i32, i32) {
    %c16_i32 = arith.constant 16 : i32
    %0 = arith.muli %arg0, %c16_i32 : i32
    %1 = arith.addi %0, %arg1 : i32
    %c0_i32 = arith.constant 0 : i32
    %c0_i32_0 = arith.constant 0 : i32
    return %1, %c0_i32 : i32, i32
  }
}

</mosaic_0001>

<llo_original>
// kernel: tpu_custom_call.1
$region0: #{tpu_custom_call.1}
  #allocation0 [shape = 'u32[]', space=smem, size = 0x4, offset = 0x4, fixed_abs, tag = 'smem constant byte address 0x4 - core index']
  #allocation1 [shape = 'u32[144,128]{1,0:T(1,128)}', space=vmem, size = 0x12000, scoped, tag = 'internal scratch']
  #allocation2 [shape = 'f32[128,128]{1,0:T(8,128)}', space=vmem, size = 0x10000, scoped, tag = 'scratch operand']
  %s0 = inlined_call_operand.vmem [shape: f32[128,4], index: 0, kind: input, shape index: {}]
  %s1 = inlined_call_operand.vmem [shape: f32[4,128], index: 1, kind: input, shape index: {}]
  %s2 = inlined_call_operand.vmem [shape: s32[128,1], index: 2, kind: input, shape index: {}]
  %s3 = inlined_call_operand.vmem [shape: s32[1,128], index: 3, kind: input, shape index: {}]
  %s4 = inlined_call_operand.vmem [shape: f32[128,64], index: 4, kind: input, shape index: {}]
  %s5 = inlined_call_operand.vmem [shape: f32[128,64], index: 5, kind: input, shape index: {}]
  %s6 = inlined_call_operand.vmem [shape: f32[64,128], index: 6, kind: input, shape index: {}]
  %s7 = inlined_call_operand.vmem [shape: f32[1,128], index: 7, kind: input, shape index: {}]
  %s8 = inlined_call_operand.hbm [shape: f32[128,128], index: 8, kind: output, shape index: {}]
  %s9 = sld [smem:[#allocation0]]
  $region69: #{tpu_custom_call.1} parent=0
    _
  %s11 = ssub.s32 1, %s9
  %s12 = scalar_select 0, %s11, %s9
  $region1: #{tpu_custom_call.1} parent=0
    #allocation3 [shape = 'u8[8192]{0}', space=vmem, size = 0x2000, scoped, tag = 'output window, operand 0']
    #allocation4 [shape = 's32[2]{0}', space=sflag, size = 0x8, scoped, tag = 'scoped memory for tpu_custom_call.1']
    %13 = vsyncpa [#allocation4], 0
    %s14 = scalar_lea.sflag [#allocation4], 1
    %15 = vsyncpa %s14, 0
    loop: start=0, step=1, limit=18
    $region2: #{tpu_custom_call.1} parent=1 // loop_pre_header
      _
    $region3: #{tpu_custom_call.1} parent=1 // loop_header
      %s17 = sphi 0, %s21
      %p18 = scmp.ge.s32.totalorder %s17, 18
      %s24 = sphi 0, %s36
      %s25 = sphi 0, %s32
      %s26 = sphi 0, %s24
      %s27 = sphi 0, %s25
      %s28 = sphi 0, %s26
      %s29 = sphi 0, %s27
      %s39 = sphi 0, %s41
      %s42 = sphi 0, %s39
      %s43 = sphi 0, %s42
      %s59 = sphi 0, %s43
      %s63 = sphi 0, %s63
      %s65 = sphi 0, %s63
      %s66 = sphi 0, %s65
      %s80 = sphi 0, %s66
      %s86 = sphi 0, %s88
      %s89 = sphi 0, %s86
      %s90 = sphi 0, %s89
      %s106 = sphi 0, %s90
      %s110 = sphi 0, %s110
      %s112 = sphi 0, %s110
      %s113 = sphi 0, %s112
      %s127 = sphi 0, %s113
      %s137 = sphi 0, %s139
      %s140 = sphi 0, %s137
      %s141 = sphi 0, %s140
      %s157 = sphi 0, %s141
      %s161 = sphi 0, %s161
      %s163 = sphi 0, %s161
      %s164 = sphi 0, %s163
      %s178 = sphi 0, %s164
      %s182 = sphi 0, %s182
      %s184 = sphi 0, %s182
      %s185 = sphi 0, %s184
      %s199 = sphi 0, %s185
      %s203 = sphi 0, %s203
      %s205 = sphi 0, %s203
      %s206 = sphi 0, %s205
      %s220 = sphi 0, %s206
      %s230 = sphi 0, %s232
      %s233 = sphi 0, %s230
      %s234 = sphi 0, %s233
      %s250 = sphi 0, %s234
    $region4: #{tpu_custom_call.1} parent=1 // loop_header_branch
      %20 = sbr.rel (%p18) target = $region8
    $region5: #{tpu_custom_call.1} parent=1 // loop_body
      %s22 = ssub.s32 %s17, 1
      %s23 = ssub.s32 %s17, 2
      %s30 = sadd.s32 1, %s25
      %p31 = scmp.ge.s32.totalorder %s30, 16
      %s32 = scalar_select %p31, 0, %s30
      %s33 = sadd.s32 1, %s24
      %s34 = scalar_select %p31, %s33, %s24
      %p35 = scmp.ge.s32.totalorder %s34, 1
      %s36 = scalar_select %p35, 0, %s34
      %s37 = ssub.s32 %s24, %s36
      %p38 = scmp.eq.s32.totalorder %s37, 0
      %s40 = sadd.s32 %s39, 1
      %s41 = scalar_select %p38, %s39, %s40
      %p44 = pneg %p38
      %p45 = scmp.eq.s32.totalorder %s17, 15
      %p46 = por %p44, %p45
      %p47 = scmp.ne.s32.totalorder %s39, %s42
      %p48 = scmp.eq.s32.totalorder %s17, 0
      %p49 = por %p47, %p48
      %p50 = scmp.ne.s32.totalorder %s39, %s42
      %p51 = scmp.eq.s32.totalorder %s22, 15
      %p52 = por %p50, %p51
      %p53 = scmp.ne.s32.totalorder %s42, %s43
      %p54 = scmp.eq.s32.totalorder %s22, 0
      %p55 = por %p53, %p54
      %p56 = scmp.ne.s32.totalorder %s42, %s43
      %p57 = scmp.eq.s32.totalorder %s23, 15
      %p58 = por %p56, %p57
      %p60 = scmp.ne.s32.totalorder %s43, %s59
      %p61 = scmp.eq.s32.totalorder %s23, 0
      %p62 = por %p60, %p61
      %s64 = sadd.s32 %s63, 1
      %p67 = scmp.eq.s32.totalorder %s17, 15
      %p68 = scmp.ne.s32.totalorder %s63, %s65
      %p69 = scmp.eq.s32.totalorder %s17, 0
      %p70 = por %p68, %p69
      %p71 = scmp.ne.s32.totalorder %s63, %s65
      %p72 = scmp.eq.s32.totalorder %s22, 15
      %p73 = por %p71, %p72
      %p74 = scmp.ne.s32.totalorder %s65, %s66
      %p75 = scmp.eq.s32.totalorder %s22, 0
      %p76 = por %p74, %p75
      %p77 = scmp.ne.s32.totalorder %s65, %s66
      %p78 = scmp.eq.s32.totalorder %s23, 15
      %p79 = por %p77, %p78
      %p81 = scmp.ne.s32.totalorder %s66, %s80
      %p82 = scmp.eq.s32.totalorder %s23, 0
      %p83 = por %p81, %p82
      %s84 = ssub.s32 %s24, %s36
      %p85 = scmp.eq.s32.totalorder %s84, 0
      %s87 = sadd.s32 %s86, 1
      %s88 = scalar_select %p85, %s86, %s87
      %p91 = pneg %p85
      %p92 = scmp.eq.s32.totalorder %s17, 15
      %p93 = por %p91, %p92
      %p94 = scmp.ne.s32.totalorder %s86, %s89
      %p95 = scmp.eq.s32.totalorder %s17, 0
      %p96 = por %p94, %p95
      %p97 = scmp.ne.s32.totalorder %s86, %s89
      %p98 = scmp.eq.s32.totalorder %s22, 15
      %p99 = por %p97, %p98
      %p100 = scmp.ne.s32.totalorder %s89, %s90
      %p101 = scmp.eq.s32.totalorder %s22, 0
      %p102 = por %p100, %p101
      %p103 = scmp.ne.s32.totalorder %s89, %s90
      %p104 = scmp.eq.s32.totalorder %s23, 15
      %p105 = por %p103, %p104
      %p107 = scmp.ne.s32.totalorder %s90, %s106
      %p108 = scmp.eq.s32.totalorder %s23, 0
      %p109 = por %p107, %p108
      %s111 = sadd.s32 %s110, 1
      %p114 = scmp.eq.s32.totalorder %s17, 15
      %p115 = scmp.ne.s32.totalorder %s110, %s112
      %p116 = scmp.eq.s32.totalorder %s17, 0
      %p117 = por %p115, %p116
      %p118 = scmp.ne.s32.totalorder %s110, %s112
      %p119 = scmp.eq.s32.totalorder %s22, 15
      %p120 = por %p118, %p119
      %p121 = scmp.ne.s32.totalorder %s112, %s113
      %p122 = scmp.eq.s32.totalorder %s22, 0
      %p123 = por %p121, %p122
      %p124 = scmp.ne.s32.totalorder %s112, %s113
      %p125 = scmp.eq.s32.totalorder %s23, 15
      %p126 = por %p124, %p125
      %p128 = scmp.ne.s32.totalorder %s113, %s127
      %p129 = scmp.eq.s32.totalorder %s23, 0
      %p130 = por %p128, %p129
      %s131 = smul.u32 %s24, 16
      %s132 = sadd.s32 %s131, %s25
      %s133 = smul.u32 %s36, 16
      %s134 = sadd.s32 %s133, %s32
      %s135 = ssub.s32 %s132, %s134
      %p136 = scmp.eq.s32.totalorder %s135, 0
      %s138 = sadd.s32 %s137, 1
      %s139 = scalar_select %p136, %s137, %s138
      %p142 = pneg %p136
      %p143 = scmp.eq.s32.totalorder %s17, 15
      %p144 = por %p142, %p143
      %p145 = scmp.ne.s32.totalorder %s137, %s140
      %p146 = scmp.eq.s32.totalorder %s17, 0
      %p147 = por %p145, %p146
      %p148 = scmp.ne.s32.totalorder %s137, %s140
      %p149 = scmp.eq.s32.totalorder %s22, 15
      %p150 = por %p148, %p149
      %p151 = scmp.ne.s32.totalorder %s140, %s141
      %p152 = scmp.eq.s32.totalorder %s22, 0
      %p153 = por %p151, %p152
      %p154 = scmp.ne.s32.totalorder %s140, %s141
      %p155 = scmp.eq.s32.totalorder %s23, 15
      %p156 = por %p154, %p155
      %p158 = scmp.ne.s32.totalorder %s141, %s157
      %p159 = scmp.eq.s32.totalorder %s23, 0
      %p160 = por %p158, %p159
      %s162 = sadd.s32 %s161, 1
      %p165 = scmp.eq.s32.totalorder %s17, 15
      %p166 = scmp.ne.s32.totalorder %s161, %s163
      %p167 = scmp.eq.s32.totalorder %s17, 0
      %p168 = por %p166, %p167
      %p169 = scmp.ne.s32.totalorder %s161, %s163
      %p170 = scmp.eq.s32.totalorder %s22, 15
      %p171 = por %p169, %p170
      %p172 = scmp.ne.s32.totalorder %s163, %s164
      %p173 = scmp.eq.s32.totalorder %s22, 0
      %p174 = por %p172, %p173
      %p175 = scmp.ne.s32.totalorder %s163, %s164
      %p176 = scmp.eq.s32.totalorder %s23, 15
      %p177 = por %p175, %p176
      %p179 = scmp.ne.s32.totalorder %s164, %s178
      %p180 = scmp.eq.s32.totalorder %s23, 0
      %p181 = por %p179, %p180
      %s183 = sadd.s32 %s182, 1
      %p186 = scmp.eq.s32.totalorder %s17, 15
      %p187 = scmp.ne.s32.totalorder %s182, %s184
      %p188 = scmp.eq.s32.totalorder %s17, 0
      %p189 = por %p187, %p188
      %p190 = scmp.ne.s32.totalorder %s182, %s184
      %p191 = scmp.eq.s32.totalorder %s22, 15
      %p192 = por %p190, %p191
      %p193 = scmp.ne.s32.totalorder %s184, %s185
      %p194 = scmp.eq.s32.totalorder %s22, 0
      %p195 = por %p193, %p194
      %p196 = scmp.ne.s32.totalorder %s184, %s185
      %p197 = scmp.eq.s32.totalorder %s23, 15
      %p198 = por %p196, %p197
      %p200 = scmp.ne.s32.totalorder %s185, %s199
      %p201 = scmp.eq.s32.totalorder %s23, 0
      %p202 = por %p200, %p201
      %s204 = sadd.s32 %s203, 1
      %p207 = scmp.eq.s32.totalorder %s17, 15
      %p208 = scmp.ne.s32.totalorder %s203, %s205
      %p209 = scmp.eq.s32.totalorder %s17, 0
      %p210 = por %p208, %p209
      %p211 = scmp.ne.s32.totalorder %s203, %s205
      %p212 = scmp.eq.s32.totalorder %s22, 15
      %p213 = por %p211, %p212
      %p214 = scmp.ne.s32.totalorder %s205, %s206
      %p215 = scmp.eq.s32.totalorder %s22, 0
      %p216 = por %p214, %p215
      %p217 = scmp.ne.s32.totalorder %s205, %s206
      %p218 = scmp.eq.s32.totalorder %s23, 15
      %p219 = por %p217, %p218
      %p221 = scmp.ne.s32.totalorder %s206, %s220
      %p222 = scmp.eq.s32.totalorder %s23, 0
      %p223 = por %p221, %p222
      %s224 = smul.u32 %s24, 16
      %s225 = sadd.s32 %s224, %s25
      %s226 = smul.u32 %s36, 16
      %s227 = sadd.s32 %s226, %s32
      %s228 = ssub.s32 %s225, %s227
      %p229 = scmp.eq.s32.totalorder %s228, 0
      %s231 = sadd.s32 %s230, 1
      %s232 = scalar_select %p229, %s230, %s231
      %p235 = pneg %p229
      %p236 = scmp.eq.s32.totalorder %s17, 15
      %p237 = por %p235, %p236
      %p238 = scmp.ne.s32.totalorder %s230, %s233
      %p239 = scmp.eq.s32.totalorder %s17, 0
      %p240 = por %p238, %p239
      %p241 = scmp.ne.s32.totalorder %s230, %s233
      %p242 = scmp.eq.s32.totalorder %s22, 15
      %p243 = por %p241, %p242
      %p244 = scmp.ne.s32.totalorder %s233, %s234
      %p245 = scmp.eq.s32.totalorder %s22, 0
      %p246 = por %p244, %p245
      %p247 = scmp.ne.s32.totalorder %s233, %s234
      %p248 = scmp.eq.s32.totalorder %s23, 15
      %p249 = por %p247, %p248
      %p251 = scmp.ne.s32.totalorder %s234, %s250
      %p252 = scmp.eq.s32.totalorder %s23, 0
      %p253 = por %p251, %p252
      %p254 = scmp.le.s32.totalorder 1, %s17
      %p255 = scmp.lt.s32.totalorder %s17, 17
      %p256 = pnand %p254, %p255
      %p257 = pneg %p256
      // Predicated region
      $region9: #{tpu_custom_call.1} parent=5 // pred_check
        _
      $region10: #{tpu_custom_call.1} parent=5 // pred_check_branch
        %259 = sbr.rel (%p256) target = $region12
      $region11: #{tpu_custom_call.1} parent=5 // pred_region
        %s260 = ssub.s32 %s17, 1
        // Predicated region
        $region13: #{tpu_custom_call.1} parent=11 // pred_check
          %p261 = pneg %p55
        $region14: #{tpu_custom_call.1} parent=11 // pred_check_branch
          %263 = sbr.rel (%p261) target = $region16
        $region15: #{tpu_custom_call.1} parent=11 // pred_region
          %s264 = smul.u32 16, %s26
          %p265 = scmp.lt.s32.totalorder %s264, 15
          %s266 = scalar_select %p265, %s264, 15
          %s267 = smul.addr %s266, 8
          %s268 = scalar_lea.vmem %s0, %s267
          %s269 = smul.u32 16, %s26
        $region16: #{tpu_custom_call.1} parent=11 // pred_fallthru
          _
        // Predicated region
        $region17: #{tpu_custom_call.1} parent=11 // pred_check
          %p270 = pneg %p76
        $region18: #{tpu_custom_call.1} parent=11 // pred_check_branch
          %272 = sbr.rel (%p270) target = $region20
        $region19: #{tpu_custom_call.1} parent=11 // pred_region
          _
        $region20: #{tpu_custom_call.1} parent=11 // pred_fallthru
          _
        // Predicated region
        $region21: #{tpu_custom_call.1} parent=11 // pred_check
          %p273 = pneg %p102
        $region22: #{tpu_custom_call.1} parent=11 // pred_check_branch
          %275 = sbr.rel (%p273) target = $region24
        $region23: #{tpu_custom_call.1} parent=11 // pred_region
          %s276 = smul.u32 16, %s26
          %p277 = scmp.lt.s32.totalorder %s276, 15
          %s278 = scalar_select %p277, %s276, 15
          %s279 = smul.addr %s278, 8
          %s280 = scalar_lea.vmem %s2, %s279
          %s281 = smul.u32 16, %s26
        $region24: #{tpu_custom_call.1} parent=11 // pred_fallthru
          _
        // Predicated region
        $region25: #{tpu_custom_call.1} parent=11 // pred_check
          %p282 = pneg %p123
        $region26: #{tpu_custom_call.1} parent=11 // pred_check_branch
          %284 = sbr.rel (%p282) target = $region28
        $region27: #{tpu_custom_call.1} parent=11 // pred_region
          _
        $region28: #{tpu_custom_call.1} parent=11 // pred_fallthru
          _
        // Predicated region
        $region29: #{tpu_custom_call.1} parent=11 // pred_check
          %p285 = pneg %p174
        $region30: #{tpu_custom_call.1} parent=11 // pred_check_branch
          %287 = sbr.rel (%p285) target = $region32
        $region31: #{tpu_custom_call.1} parent=11 // pred_region
          _
        $region32: #{tpu_custom_call.1} parent=11 // pred_fallthru
          _
        // Predicated region
        $region33: #{tpu_custom_call.1} parent=11 // pred_check
          %p288 = pneg %p195
        $region34: #{tpu_custom_call.1} parent=11 // pred_check_branch
          %290 = sbr.rel (%p288) target = $region36
        $region35: #{tpu_custom_call.1} parent=11 // pred_region
          _
        $region36: #{tpu_custom_call.1} parent=11 // pred_fallthru
          _
        // Predicated region
        $region37: #{tpu_custom_call.1} parent=11 // pred_check
          %p291 = pneg %p216
        $region38: #{tpu_custom_call.1} parent=11 // pred_check_branch
          %293 = sbr.rel (%p291) target = $region40
        $region39: #{tpu_custom_call.1} parent=11 // pred_region
          _
        $region40: #{tpu_custom_call.1} parent=11 // pred_fallthru
          _
      $region12: #{tpu_custom_call.1} parent=5 // pred_fallthru
        _
      %p294 = scmp.lt.s32.totalorder %s17, 16
      // Predicated region
      $region41: #{tpu_custom_call.1} parent=5 // pred_check
        %p295 = pneg %p294
      $region42: #{tpu_custom_call.1} parent=5 // pred_check_branch
        %297 = sbr.rel (%p295) target = $region44
      $region43: #{tpu_custom_call.1} parent=5 // pred_region
        // Predicated region
        $region45: #{tpu_custom_call.1} parent=43 // pred_check
          %p298 = pneg %p147
        $region46: #{tpu_custom_call.1} parent=43 // pred_check_branch
          %300 = sbr.rel (%p298) target = $region48
        $region47: #{tpu_custom_call.1} parent=43 // pred_region
          %s301 = smul.u32 %s24, 16
          %s302 = sadd.s32 %s301, %s25
          %p303 = scmp.lt.s32.totalorder %s302, 15
          %s304 = scalar_select %p303, %s302, 15
          %s305 = smul.addr %s304, 8
          %s306 = scalar_lea.vmem %s4, %s305
          %s307 = smul.u32 %s24, 16
          %s308 = sadd.s32 %s307, %s25
        $region48: #{tpu_custom_call.1} parent=43 // pred_fallthru
          _
      $region44: #{tpu_custom_call.1} parent=5 // pred_fallthru
        _
      %p309 = scmp.le.s32.totalorder 1, %s17
      %p310 = scmp.lt.s32.totalorder %s17, 17
      %p311 = pnand %p309, %p310
      %p312 = pneg %p311
      // Predicated region
      $region49: #{tpu_custom_call.1} parent=5 // pred_check
        _
      $region50: #{tpu_custom_call.1} parent=5 // pred_check_branch
        %314 = sbr.rel (%p311) target = $region52
      $region51: #{tpu_custom_call.1} parent=5 // pred_region
        %s315 = ssub.s32 %s17, 1
        %s316 = smul.u32 16, %s26
        %p317 = scmp.lt.s32.totalorder %s316, 15
        %s318 = scalar_select %p317, %s316, 15
        %s319 = smul.addr %s318, 8
        %s320 = scalar_lea.vmem %s0, %s319
        %p321 = pneg %p55
        %p322 = pneg %p52
        %p323 = pneg %p76
        %p324 = pneg %p73
        %s325 = smul.u32 16, %s26
        %p326 = scmp.lt.s32.totalorder %s325, 15
        %s327 = scalar_select %p326, %s325, 15
        %s328 = smul.addr %s327, 8
        %s329 = scalar_lea.vmem %s2, %s328
        %p330 = pneg %p102
        %p331 = pneg %p99
        %p332 = pneg %p123
        %p333 = pneg %p120
        %s334 = smul.u32 %s26, 16
        %s335 = sadd.s32 %s334, %s27
        %p336 = scmp.lt.s32.totalorder %s335, 15
        %s337 = scalar_select %p336, %s335, 15
        %s338 = smul.addr %s337, 8
        %s339 = scalar_lea.vmem %s4, %s338
        %p340 = pneg %p153
        %p341 = pneg %p150
        %p342 = pneg %p174
        %p343 = pneg %p171
        %p344 = pneg %p195
        %p345 = pneg %p192
        %p346 = pneg %p216
        %p347 = pneg %p213
        %p348 = pneg %p246
        %p349 = pneg %p243
        %s350 = sand.u32 %s233, 1
        %s351 = scalar_lea.sflag [#allocation4], %s350
        %s352 = sand.u32 %s233, 1
        %s353 = smul.addr %s352, 8
        %s354 = scalar_lea.vmem [#allocation3], %s353
        %s355 = smul.u32 16, %s26
        %p356 = scmp.lt.s32.totalorder %s355, 15
        %s357 = scalar_select %p356, %s355, 15
        %s358 = smul.addr %s357, 8
        %s359 = scalar_lea.vmem %s0, %s358
        %s360 = smul.u32 16, %s26
        %s361 = smul.u32 16, %s26
        %p362 = scmp.lt.s32.totalorder %s361, 15
        %s363 = scalar_select %p362, %s361, 15
        %s364 = smul.addr %s363, 8
        %s365 = scalar_lea.vmem %s2, %s364
        %s366 = smul.u32 16, %s26
        %s367 = smul.u32 %s26, 16
        %s368 = sadd.s32 %s367, %s27
        %p369 = scmp.lt.s32.totalorder %s368, 15
        %s370 = scalar_select %p369, %s368, 15
        %s371 = smul.addr %s370, 8
        %s372 = scalar_lea.vmem %s4, %s371
        %s373 = smul.u32 %s26, 16
        %s374 = sadd.s32 %s373, %s27
        %s375 = smul.u32 %s26, 16
        %s376 = sadd.s32 %s375, %s27
        %p377 = scmp.eq.s32.totalorder %s27, 0
        // Predicated region
        $region53: #{tpu_custom_call.1} parent=51 // pred_check
          %p378 = pneg %p377
        $region54: #{tpu_custom_call.1} parent=51 // pred_check_branch
          %380 = sbr.rel (%p378) target = $region56
        $region55: #{tpu_custom_call.1} parent=51 // pred_region
          %v381 = vld [vmem:[%s359] sm:$0xff]
          %v382 = vld [vmem:[%s359 + $0x8] sm:$0xff]
          %v383 = vld [vmem:[%s359 + $0x10] sm:$0xff]
          %v384 = vld [vmem:[%s359 + $0x18] sm:$0xff]
          %v385 = vld [vmem:[%s359 + $0x20] sm:$0xff]
          %v386 = vld [vmem:[%s359 + $0x28] sm:$0xff]
          %v387 = vld [vmem:[%s359 + $0x30] sm:$0xff]
          %v388 = vld [vmem:[%s359 + $0x38] sm:$0xff]
          %v389 = vld [vmem:[%s359 + $0x40] sm:$0xff]
          %v390 = vld [vmem:[%s359 + $0x48] sm:$0xff]
          %v391 = vld [vmem:[%s359 + $0x50] sm:$0xff]
          %v392 = vld [vmem:[%s359 + $0x58] sm:$0xff]
          %v393 = vld [vmem:[%s359 + $0x60] sm:$0xff]
          %v394 = vld [vmem:[%s359 + $0x68] sm:$0xff]
          %v395 = vld [vmem:[%s359 + $0x70] sm:$0xff]
          %v396 = vld [vmem:[%s359 + $0x78] sm:$0xff]
          %v397 = vld [vmem:[%s1] sm:$0xf]
          %v398 = vmul.f32 %v397, %v397
          %vm399 = vcmask 1043456
          %v400 = vsel %vm399, %v398, 0.0
          %v401 = vrot.slane %v400, 4
          %v402 = vadd.f32 %v400, %v401
          %v403 = vrot.slane %v402, 2
          %v404 = vadd.f32 %v402, %v403
          %v405 = vrot.slane %v404, 1
          %v406 = vadd.f32 %v404, %v405
          %vm407 = vcmask 31744
          %v409 = vsel %vm407, %v381, 0
          %v412 = vsel %vm407, %v382, 0
          %v415 = vsel %vm407, %v383, 0
          %v418 = vsel %vm407, %v384, 0
          %v421 = vsel %vm407, %v385, 0
          %v424 = vsel %vm407, %v386, 0
          %v427 = vsel %vm407, %v387, 0
          %v430 = vsel %vm407, %v388, 0
          %v433 = vsel %vm407, %v389, 0
          %v436 = vsel %vm407, %v390, 0
          %v439 = vsel %vm407, %v391, 0
          %v442 = vsel %vm407, %v392, 0
          %v445 = vsel %vm407, %v393, 0
          %v448 = vsel %vm407, %v394, 0
          %v451 = vsel %vm407, %v395, 0
          %v454 = vsel %vm407, %v396, 0
          %v457 = vsel %vm399, %v397, 0
          %459 = vmatprep.subr.mxu0 0.0
          %460 = vmatpush1.msra.mxu0 %v457
          %461 = vmatprep.subr.mxu0 0.0
          %462 = vmatpush1.msra.mxu0 0.0
          %463 = vmatprep.subr.mxu0 0.0
          %464 = vmatpush1.msra.mxu0 0.0
          %465 = vmatprep.subr.mxu0 0.0
          %466 = vmatpush1.msra.mxu0 0.0
          %467 = vmatprep.subr.mxu0 0.0
          %468 = vmatpush1.msra.mxu0 0.0
          %469 = vmatprep.subr.mxu0 0.0
          %470 = vmatpush1.msra.mxu0 0.0
          %471 = vmatprep.subr.mxu0 0.0
          %472 = vmatpush1.msra.mxu0 0.0
          %473 = vmatprep.subr.mxu0 0.0
          %474 = vmatpush1.msra.mxu0 0.0
          %475 = vmatprep.subr.mxu0 0.0
          %476 = vmatpush1.msra.mxu0 0.0
          %477 = vmatprep.subr.mxu0 0.0
          %478 = vmatpush1.msra.mxu0 0.0
          %479 = vmatprep.subr.mxu0 0.0
          %480 = vmatpush1.msra.mxu0 0.0
          %481 = vmatprep.subr.mxu0 0.0
          %482 = vmatpush1.msra.mxu0 0.0
          %483 = vmatprep.subr.mxu0 0.0
          %484 = vmatpush1.msra.mxu0 0.0
          %485 = vmatprep.subr.mxu0 0.0
          %486 = vmatpush1.msra.mxu0 0.0
          %487 = vmatprep.subr.mxu0 0.0
          %488 = vmatpush1.msra.mxu0 0.0
          %489 = vmatprep.subr.mxu0 0.0
          %490 = vmatpush1.msra.mxu0 0.0
          %491 = vmatprep.subr.mxu0 0.0
          %492 = vmatpush1.msra.mxu0 0.0
          %493 = vmatprep.subr.mxu0 0.0
          %494 = vmatpush1.msra.mxu0 0.0
          %495 = vmatprep.subr.mxu0 0.0
          %496 = vmatpush1.msra.mxu0 0.0
          %497 = vmatprep.subr.mxu0 0.0
          %498 = vmatpush1.msra.mxu0 0.0
          %499 = vmatprep.subr.mxu0 0.0
          %500 = vmatpush1.msra.mxu0 0.0
          %501 = vmatprep.subr.mxu0 0.0
          %502 = vmatpush1.msra.mxu0 0.0
          %503 = vmatprep.subr.mxu0 0.0
          %504 = vmatpush1.msra.mxu0 0.0
          %505 = vmatprep.subr.mxu0 0.0
          %506 = vmatpush1.msra.mxu0 0.0
          %507 = vmatprep.subr.mxu0 0.0
          %508 = vmatpush1.msra.mxu0 0.0
          %509 = vmatprep.subr.mxu0 0.0
          %510 = vmatpush1.msra.mxu0 0.0
          %511 = vmatprep.subr.mxu0 0.0
          %512 = vmatpush1.msra.mxu0 0.0
          %513 = vmatprep.subr.mxu0 0.0
          %514 = vmatpush1.msra.mxu0 0.0
          %515 = vmatprep.subr.mxu0 0.0
          %516 = vmatpush1.msra.mxu0 0.0
          %517 = vmatprep.subr.mxu0 0.0
          %518 = vmatpush1.msra.mxu0 0.0
          %519 = vmatprep.subr.mxu0 0.0
          %520 = vmatpush1.msra.mxu0 0.0
          %521 = vmatprep.subr.mxu0 0.0
          %522 = vmatpush1.msra.mxu0 0.0
          %523 = vmatprep.mubr.f32.mxu0 0.0
          %524 = vmatmul.mubr.f32.gmra.mrb[0].mxu0 %v409
          %v525 = vpop.f32.mrb[0].mxu0
          %v526 = vadd.f32 0.0, %v525
          %v527 = vpop.f32.mrb[0].mxu0
          %528 = vmatprep.mubr.f32.mxu0 0.0
          %529 = vmatmul.mubr.f32.gmra.mrb[0].mxu0 %v412
          %v530 = vpop.f32.mrb[0].mxu0
          %v531 = vadd.f32 0.0, %v530
          %v532 = vpop.f32.mrb[0].mxu0
          %533 = vmatprep.mubr.f32.mxu0 0.0
          %534 = vmatmul.mubr.f32.gmra.mrb[0].mxu0 %v415
          %v535 = vpop.f32.mrb[0].mxu0
          %v536 = vadd.f32 0.0, %v535
          %v537 = vpop.f32.mrb[0].mxu0
          %538 = vmatprep.mubr.f32.mxu0 0.0
          %539 = vmatmul.mubr.f32.gmra.mrb[0].mxu0 %v418
          %v540 = vpop.f32.mrb[0].mxu0
          %v541 = vadd.f32 0.0, %v540
          %v542 = vpop.f32.mrb[0].mxu0
          %543 = vmatprep.mubr.f32.mxu0 0.0
          %544 = vmatmul.mubr.f32.gmra.mrb[0].mxu0 %v421
          %v545 = vpop.f32.mrb[0].mxu0
          %v546 = vadd.f32 0.0, %v545
          %v547 = vpop.f32.mrb[0].mxu0
          %548 = vmatprep.mubr.f32.mxu0 0.0
          %549 = vmatmul.mubr.f32.gmra.mrb[0].mxu0 %v424
          %v550 = vpop.f32.mrb[0].mxu0
          %v551 = vadd.f32 0.0, %v550
          %v552 = vpop.f32.mrb[0].mxu0
          %553 = vmatprep.mubr.f32.mxu0 0.0
          %554 = vmatmul.mubr.f32.gmra.mrb[0].mxu0 %v427
          %v555 = vpop.f32.mrb[0].mxu0
          %v556 = vadd.f32 0.0, %v555
          %v557 = vpop.f32.mrb[0].mxu0
          %558 = vmatprep.mubr.f32.mxu0 0.0
          %559 = vmatmul.mubr.f32.gmra.mrb[0].mxu0 %v430
          %v560 = vpop.f32.mrb[0].mxu0
          %v561 = vadd.f32 0.0, %v560
          %v562 = vpop.f32.mrb[0].mxu0
          %563 = vmatprep.mubr.f32.mxu0 0.0
          %564 = vmatmul.mubr.f32.gmra.mrb[0].mxu0 %v433
          %v565 = vpop.f32.mrb[0].mxu0
          %v566 = vadd.f32 0.0, %v565
          %v567 = vpop.f32.mrb[0].mxu0
          %568 = vmatprep.mubr.f32.mxu0 0.0
          %569 = vmatmul.mubr.f32.gmra.mrb[0].mxu0 %v436
          %v570 = vpop.f32.mrb[0].mxu0
          %v571 = vadd.f32 0.0, %v570
          %v572 = vpop.f32.mrb[0].mxu0
          %573 = vmatprep.mubr.f32.mxu0 0.0
          %574 = vmatmul.mubr.f32.gmra.mrb[0].mxu0 %v439
          %v575 = vpop.f32.mrb[0].mxu0
          %v576 = vadd.f32 0.0, %v575
          %v577 = vpop.f32.mrb[0].mxu0
          %578 = vmatprep.mubr.f32.mxu0 0.0
          %579 = vmatmul.mubr.f32.gmra.mrb[0].mxu0 %v442
          %v580 = vpop.f32.mrb[0].mxu0
          %v581 = vadd.f32 0.0, %v580
          %v582 = vpop.f32.mrb[0].mxu0
          %583 = vmatprep.mubr.f32.mxu0 0.0
          %584 = vmatmul.mubr.f32.gmra.mrb[0].mxu0 %v445
          %v585 = vpop.f32.mrb[0].mxu0
          %v586 = vadd.f32 0.0, %v585
          %v587 = vpop.f32.mrb[0].mxu0
          %588 = vmatprep.mubr.f32.mxu0 0.0
          %589 = vmatmul.mubr.f32.gmra.mrb[0].mxu0 %v448
          %v590 = vpop.f32.mrb[0].mxu0
          %v591 = vadd.f32 0.0, %v590
          %v592 = vpop.f32.mrb[0].mxu0
          %593 = vmatprep.mubr.f32.mxu0 0.0
          %594 = vmatmul.mubr.f32.gmra.mrb[0].mxu0 %v451
          %v595 = vpop.f32.mrb[0].mxu0
          %v596 = vadd.f32 0.0, %v595
          %v597 = vpop.f32.mrb[0].mxu0
          %598 = vmatprep.mubr.f32.mxu0 0.0
          %599 = vmatmul.mubr.f32.gmra.mrb[0].mxu0 %v454
          %v600 = vpop.f32.mrb[0].mxu0
          %v601 = vadd.f32 0.0, %v600
          %v602 = vpop.f32.mrb[0].mxu0
          %603 = vdwg.mxu0
          %v604 = vmul.f32 %v526, 2.0
          %v605 = vmul.f32 %v531, 2.0
          %v606 = vmul.f32 %v536, 2.0
          %v607 = vmul.f32 %v541, 2.0
          %v608 = vmul.f32 %v546, 2.0
          %v609 = vmul.f32 %v551, 2.0
          %v610 = vmul.f32 %v556, 2.0
          %v611 = vmul.f32 %v561, 2.0
          %v612 = vmul.f32 %v566, 2.0
          %v613 = vmul.f32 %v571, 2.0
          %v614 = vmul.f32 %v576, 2.0
          %v615 = vmul.f32 %v581, 2.0
          %v616 = vmul.f32 %v586, 2.0
          %v617 = vmul.f32 %v591, 2.0
          %v618 = vmul.f32 %v596, 2.0
          %v619 = vmul.f32 %v601, 2.0
          %v620 = vsub.f32 %v406, %v604
          %v621 = vsub.f32 %v406, %v605
          %v622 = vsub.f32 %v406, %v606
          %v623 = vsub.f32 %v406, %v607
          %v624 = vsub.f32 %v406, %v608
          %v625 = vsub.f32 %v406, %v609
          %v626 = vsub.f32 %v406, %v610
          %v627 = vsub.f32 %v406, %v611
          %v628 = vsub.f32 %v406, %v612
          %v629 = vsub.f32 %v406, %v613
          %v630 = vsub.f32 %v406, %v614
          %v631 = vsub.f32 %v406, %v615
          %v632 = vsub.f32 %v406, %v616
          %v633 = vsub.f32 %v406, %v617
          %v634 = vsub.f32 %v406, %v618
          %v635 = vsub.f32 %v406, %v619
          %v636 = vld [vmem:[%s365] sm:$0xff]
          %v637 = vld [vmem:[%s365 + $0x8] sm:$0xff]
          %v638 = vld [vmem:[%s365 + $0x10] sm:$0xff]
          %v639 = vld [vmem:[%s365 + $0x18] sm:$0xff]
          %v640 = vld [vmem:[%s365 + $0x20] sm:$0xff]
          %v641 = vld [vmem:[%s365 + $0x28] sm:$0xff]
          %v642 = vld [vmem:[%s365 + $0x30] sm:$0xff]
          %v643 = vld [vmem:[%s365 + $0x38] sm:$0xff]
          %v644 = vld [vmem:[%s365 + $0x40] sm:$0xff]
          %v645 = vld [vmem:[%s365 + $0x48] sm:$0xff]
          %v646 = vld [vmem:[%s365 + $0x50] sm:$0xff]
          %v647 = vld [vmem:[%s365 + $0x58] sm:$0xff]
          %v648 = vld [vmem:[%s365 + $0x60] sm:$0xff]
          %v649 = vld [vmem:[%s365 + $0x68] sm:$0xff]
          %v650 = vld [vmem:[%s365 + $0x70] sm:$0xff]
          %v651 = vld [vmem:[%s365 + $0x78] sm:$0xff]
          %v652 = vld [vmem:[%s3] sm:$0x1]
          %653 = vset.pattern.permute.xlu0 0
          %654 = vperm.xlu0 %653, %v636
          %v655 = vpop.permute.xlu0 %654
          %656 = vset.pattern.permute.xlu0 0
          %657 = vperm.xlu0 %656, %v637
          %v658 = vpop.permute.xlu0 %657
          %659 = vset.pattern.permute.xlu0 0
          %660 = vperm.xlu0 %659, %v638
          %v661 = vpop.permute.xlu0 %660
          %662 = vset.pattern.permute.xlu0 0
          %663 = vperm.xlu0 %662, %v639
          %v664 = vpop.permute.xlu0 %663
          %665 = vset.pattern.permute.xlu0 0
          %666 = vperm.xlu0 %665, %v640
          %v667 = vpop.permute.xlu0 %666
          %668 = vset.pattern.permute.xlu0 0
          %669 = vperm.xlu0 %668, %v641
          %v670 = vpop.permute.xlu0 %669
          %671 = vset.pattern.permute.xlu0 0
          %672 = vperm.xlu0 %671, %v642
          %v673 = vpop.permute.xlu0 %672
          %674 = vset.pattern.permute.xlu0 0
          %675 = vperm.xlu0 %674, %v643
          %v676 = vpop.permute.xlu0 %675
          %677 = vset.pattern.permute.xlu0 0
          %678 = vperm.xlu0 %677, %v644
          %v679 = vpop.permute.xlu0 %678
          %680 = vset.pattern.permute.xlu0 0
          %681 = vperm.xlu0 %680, %v645
          %v682 = vpop.permute.xlu0 %681
          %683 = vset.pattern.permute.xlu0 0
          %684 = vperm.xlu0 %683, %v646
          %v685 = vpop.permute.xlu0 %684
          %686 = vset.pattern.permute.xlu0 0
          %687 = vperm.xlu0 %686, %v647
          %v688 = vpop.permute.xlu0 %687
          %689 = vset.pattern.permute.xlu0 0
          %690 = vperm.xlu0 %689, %v648
          %v691 = vpop.permute.xlu0 %690
          %692 = vset.pattern.permute.xlu0 0
          %693 = vperm.xlu0 %692, %v649
          %v694 = vpop.permute.xlu0 %693
          %695 = vset.pattern.permute.xlu0 0
          %696 = vperm.xlu0 %695, %v650
          %v697 = vpop.permute.xlu0 %696
          %698 = vset.pattern.permute.xlu0 0
          %699 = vperm.xlu0 %698, %v651
          %v700 = vpop.permute.xlu0 %699
          %v701 = vlaneseq
          %v702 = vshrl.u32 %v701, 7
          %v703 = vsub.s32 0, %v702
          %v704 = vrot.slane %v652, %v703
          %vm705 = vcmp.eq.s32.totalorder %v655, %v704
          %vm706 = vcmp.eq.s32.totalorder %v658, %v704
          %vm707 = vcmp.eq.s32.totalorder %v661, %v704
          %vm708 = vcmp.eq.s32.totalorder %v664, %v704
          %vm709 = vcmp.eq.s32.totalorder %v667, %v704
          %vm710 = vcmp.eq.s32.totalorder %v670, %v704
          %vm711 = vcmp.eq.s32.totalorder %v673, %v704
          %vm712 = vcmp.eq.s32.totalorder %v676, %v704
          %vm713 = vcmp.eq.s32.totalorder %v679, %v704
          %vm714 = vcmp.eq.s32.totalorder %v682, %v704
          %vm715 = vcmp.eq.s32.totalorder %v685, %v704
          %vm716 = vcmp.eq.s32.totalorder %v688, %v704
          %vm717 = vcmp.eq.s32.totalorder %v691, %v704
          %vm718 = vcmp.eq.s32.totalorder %v694, %v704
          %vm719 = vcmp.eq.s32.totalorder %v697, %v704
          %vm720 = vcmp.eq.s32.totalorder %v700, %v704
          %v721 = vsel %vm705, %v620, 1e+30
          %v722 = vsel %vm706, %v621, 1e+30
          %v723 = vsel %vm707, %v622, 1e+30
          %v724 = vsel %vm708, %v623, 1e+30
          %v725 = vsel %vm709, %v624, 1e+30
          %v726 = vsel %vm710, %v625, 1e+30
          %v727 = vsel %vm711, %v626, 1e+30
          %v728 = vsel %vm712, %v627, 1e+30
          %v729 = vsel %vm713, %v628, 1e+30
          %v730 = vsel %vm714, %v629, 1e+30
          %v731 = vsel %vm715, %v630, 1e+30
          %v732 = vsel %vm716, %v631, 1e+30
          %v733 = vsel %vm717, %v632, 1e+30
          %v734 = vsel %vm718, %v633, 1e+30
          %v735 = vsel %vm719, %v634, 1e+30
          %v736 = vsel %vm720, %v635, 1e+30
          %737 = vmin.xlane.f32.xlu0 %v721
          %v738 = vpop.xlane.xlu0 %737
          %739 = vmin.xlane.f32.xlu0 %v722
          %v740 = vpop.xlane.xlu0 %739
          %741 = vmin.xlane.f32.xlu0 %v723
          %v742 = vpop.xlane.xlu0 %741
          %743 = vmin.xlane.f32.xlu0 %v724
          %v744 = vpop.xlane.xlu0 %743
          %745 = vmin.xlane.f32.xlu0 %v725
          %v746 = vpop.xlane.xlu0 %745
          %747 = vmin.xlane.f32.xlu0 %v726
          %v748 = vpop.xlane.xlu0 %747
          %749 = vmin.xlane.f32.xlu0 %v727
          %v750 = vpop.xlane.xlu0 %749
          %751 = vmin.xlane.f32.xlu0 %v728
          %v752 = vpop.xlane.xlu0 %751
          %753 = vmin.xlane.f32.xlu0 %v729
          %v754 = vpop.xlane.xlu0 %753
          %755 = vmin.xlane.f32.xlu0 %v730
          %v756 = vpop.xlane.xlu0 %755
          %757 = vmin.xlane.f32.xlu0 %v731
          %v758 = vpop.xlane.xlu0 %757
          %759 = vmin.xlane.f32.xlu0 %v732
          %v760 = vpop.xlane.xlu0 %759
          %761 = vmin.xlane.f32.xlu0 %v733
          %v762 = vpop.xlane.xlu0 %761
          %763 = vmin.xlane.f32.xlu0 %v734
          %v764 = vpop.xlane.xlu0 %763
          %765 = vmin.xlane.f32.xlu0 %v735
          %v766 = vpop.xlane.xlu0 %765
          %767 = vmin.xlane.f32.xlu0 %v736
          %v768 = vpop.xlane.xlu0 %767
          %vm769 = vcmp.le.f32.partialorder %v721, %v738
          %vm770 = vcmp.le.f32.partialorder %v722, %v740
          %vm771 = vcmp.le.f32.partialorder %v723, %v742
          %vm772 = vcmp.le.f32.partialorder %v724, %v744
          %vm773 = vcmp.le.f32.partialorder %v725, %v746
          %vm774 = vcmp.le.f32.partialorder %v726, %v748
          %vm775 = vcmp.le.f32.partialorder %v727, %v750
          %vm776 = vcmp.le.f32.partialorder %v728, %v752
          %vm777 = vcmp.le.f32.partialorder %v729, %v754
          %vm778 = vcmp.le.f32.partialorder %v730, %v756
          %vm779 = vcmp.le.f32.partialorder %v731, %v758
          %vm780 = vcmp.le.f32.partialorder %v732, %v760
          %vm781 = vcmp.le.f32.partialorder %v733, %v762
          %vm782 = vcmp.le.f32.partialorder %v734, %v764
          %vm783 = vcmp.le.f32.partialorder %v735, %v766
          %vm784 = vcmp.le.f32.partialorder %v736, %v768
          %v785 = vsel %vm769, 1e+30, %v721
          %v786 = vsel %vm770, 1e+30, %v722
          %v787 = vsel %vm771, 1e+30, %v723
          %v788 = vsel %vm772, 1e+30, %v724
          %v789 = vsel %vm773, 1e+30, %v725
          %v790 = vsel %vm774, 1e+30, %v726
          %v791 = vsel %vm775, 1e+30, %v727
          %v792 = vsel %vm776, 1e+30, %v728
          %v793 = vsel %vm777, 1e+30, %v729
          %v794 = vsel %vm778, 1e+30, %v730
          %v795 = vsel %vm779, 1e+30, %v731
          %v796 = vsel %vm780, 1e+30, %v732
          %v797 = vsel %vm781, 1e+30, %v733
          %v798 = vsel %vm782, 1e+30, %v734
          %v799 = vsel %vm783, 1e+30, %v735
          %v800 = vsel %vm784, 1e+30, %v736
          %801 = vmin.xlane.f32.xlu0 %v785
          %v802 = vpop.xlane.xlu0 %801
          %803 = vmin.xlane.f32.xlu0 %v786
          %v804 = vpop.xlane.xlu0 %803
          %805 = vmin.xlane.f32.xlu0 %v787
          %v806 = vpop.xlane.xlu0 %805
          %807 = vmin.xlane.f32.xlu0 %v788
          %v808 = vpop.xlane.xlu0 %807
          %809 = vmin.xlane.f32.xlu0 %v789
          %v810 = vpop.xlane.xlu0 %809
          %811 = vmin.xlane.f32.xlu0 %v790
          %v812 = vpop.xlane.xlu0 %811
          %813 = vmin.xlane.f32.xlu0 %v791
          %v814 = vpop.xlane.xlu0 %813
          %815 = vmin.xlane.f32.xlu0 %v792
          %v816 = vpop.xlane.xlu0 %815
          %817 = vmin.xlane.f32.xlu0 %v793
          %v818 = vpop.xlane.xlu0 %817
          %819 = vmin.xlane.f32.xlu0 %v794
          %v820 = vpop.xlane.xlu0 %819
          %821 = vmin.xlane.f32.xlu0 %v795
          %v822 = vpop.xlane.xlu0 %821
          %823 = vmin.xlane.f32.xlu0 %v796
          %v824 = vpop.xlane.xlu0 %823
          %825 = vmin.xlane.f32.xlu0 %v797
          %v826 = vpop.xlane.xlu0 %825
          %827 = vmin.xlane.f32.xlu0 %v798
          %v828 = vpop.xlane.xlu0 %827
          %829 = vmin.xlane.f32.xlu0 %v799
          %v830 = vpop.xlane.xlu0 %829
          %831 = vmin.xlane.f32.xlu0 %v800
          %v832 = vpop.xlane.xlu0 %831
          %vm833 = vcmp.le.f32.partialorder %v785, %v802
          %vm834 = vcmp.le.f32.partialorder %v786, %v804
          %vm835 = vcmp.le.f32.partialorder %v787, %v806
          %vm836 = vcmp.le.f32.partialorder %v788, %v808
          %vm837 = vcmp.le.f32.partialorder %v789, %v810
          %vm838 = vcmp.le.f32.partialorder %v790, %v812
          %vm839 = vcmp.le.f32.partialorder %v791, %v814
          %vm840 = vcmp.le.f32.partialorder %v792, %v816
          %vm841 = vcmp.le.f32.partialorder %v793, %v818
          %vm842 = vcmp.le.f32.partialorder %v794, %v820
          %vm843 = vcmp.le.f32.partialorder %v795, %v822
          %vm844 = vcmp.le.f32.partialorder %v796, %v824
          %vm845 = vcmp.le.f32.partialorder %v797, %v826
          %vm846 = vcmp.le.f32.partialorder %v798, %v828
          %vm847 = vcmp.le.f32.partialorder %v799, %v830
          %vm848 = vcmp.le.f32.partialorder %v800, %v832
          %v849 = vsel %vm833, 1e+30, %v785
          %v850 = vsel %vm834, 1e+30, %v786
          %v851 = vsel %vm835, 1e+30, %v787
          %v852 = vsel %vm836, 1e+30, %v788
          %v853 = vsel %vm837, 1e+30, %v789
          %v854 = vsel %vm838, 1e+30, %v790
          %v855 = vsel %vm839, 1e+30, %v791
          %v856 = vsel %vm840, 1e+30, %v792
          %v857 = vsel %vm841, 1e+30, %v793
          %v858 = vsel %vm842, 1e+30, %v794
          %v859 = vsel %vm843, 1e+30, %v795
          %v860 = vsel %vm844, 1e+30, %v796
          %v861 = vsel %vm845, 1e+30, %v797
          %v862 = vsel %vm846, 1e+30, %v798
          %v863 = vsel %vm847, 1e+30, %v799
          %v864 = vsel %vm848, 1e+30, %v800
          %865 = vmin.xlane.f32.xlu0 %v849
          %v866 = vpop.xlane.xlu0 %865
          %867 = vmin.xlane.f32.xlu0 %v850
          %v868 = vpop.xlane.xlu0 %867
          %869 = vmin.xlane.f32.xlu0 %v851
          %v870 = vpop.xlane.xlu0 %869
          %871 = vmin.xlane.f32.xlu0 %v852
          %v872 = vpop.xlane.xlu0 %871
          %873 = vmin.xlane.f32.xlu0 %v853
          %v874 = vpop.xlane.xlu0 %873
          %875 = vmin.xlane.f32.xlu0 %v854
          %v876 = vpop.xlane.xlu0 %875
          %877 = vmin.xlane.f32.xlu0 %v855
          %v878 = vpop.xlane.xlu0 %877
          %879 = vmin.xlane.f32.xlu0 %v856
          %v880 = vpop.xlane.xlu0 %879
          %881 = vmin.xlane.f32.xlu0 %v857
          %v882 = vpop.xlane.xlu0 %881
          %883 = vmin.xlane.f32.xlu0 %v858
          %v884 = vpop.xlane.xlu0 %883
          %885 = vmin.xlane.f32.xlu0 %v859
          %v886 = vpop.xlane.xlu0 %885
          %887 = vmin.xlane.f32.xlu0 %v860
          %v888 = vpop.xlane.xlu0 %887
          %889 = vmin.xlane.f32.xlu0 %v861
          %v890 = vpop.xlane.xlu0 %889
          %891 = vmin.xlane.f32.xlu0 %v862
          %v892 = vpop.xlane.xlu0 %891
          %893 = vmin.xlane.f32.xlu0 %v863
          %v894 = vpop.xlane.xlu0 %893
          %895 = vmin.xlane.f32.xlu0 %v864
          %v896 = vpop.xlane.xlu0 %895
          %vm897 = vcmp.le.f32.partialorder %v849, %v866
          %vm898 = vcmp.le.f32.partialorder %v850, %v868
          %vm899 = vcmp.le.f32.partialorder %v851, %v870
          %vm900 = vcmp.le.f32.partialorder %v852, %v872
          %vm901 = vcmp.le.f32.partialorder %v853, %v874
          %vm902 = vcmp.le.f32.partialorder %v854, %v876
          %vm903 = vcmp.le.f32.partialorder %v855, %v878
          %vm904 = vcmp.le.f32.partialorder %v856, %v880
          %vm905 = vcmp.le.f32.partialorder %v857, %v882
          %vm906 = vcmp.le.f32.partialorder %v858, %v884
          %vm907 = vcmp.le.f32.partialorder %v859, %v886
          %vm908 = vcmp.le.f32.partialorder %v860, %v888
          %vm909 = vcmp.le.f32.partialorder %v861, %v890
          %vm910 = vcmp.le.f32.partialorder %v862, %v892
          %vm911 = vcmp.le.f32.partialorder %v863, %v894
          %vm912 = vcmp.le.f32.partialorder %v864, %v896
          %v913 = vsel %vm897, 1e+30, %v849
          %v914 = vsel %vm898, 1e+30, %v850
          %v915 = vsel %vm899, 1e+30, %v851
          %v916 = vsel %vm900, 1e+30, %v852
          %v917 = vsel %vm901, 1e+30, %v853
          %v918 = vsel %vm902, 1e+30, %v854
          %v919 = vsel %vm903, 1e+30, %v855
          %v920 = vsel %vm904, 1e+30, %v856
          %v921 = vsel %vm905, 1e+30, %v857
          %v922 = vsel %vm906, 1e+30, %v858
          %v923 = vsel %vm907, 1e+30, %v859
          %v924 = vsel %vm908, 1e+30, %v860
          %v925 = vsel %vm909, 1e+30, %v861
          %v926 = vsel %vm910, 1e+30, %v862
          %v927 = vsel %vm911, 1e+30, %v863
          %v928 = vsel %vm912, 1e+30, %v864
          %929 = vmin.xlane.f32.xlu0 %v913
          %v930 = vpop.xlane.xlu0 %929
          %931 = vmin.xlane.f32.xlu0 %v914
          %v932 = vpop.xlane.xlu0 %931
          %933 = vmin.xlane.f32.xlu0 %v915
          %v934 = vpop.xlane.xlu0 %933
          %935 = vmin.xlane.f32.xlu0 %v916
          %v936 = vpop.xlane.xlu0 %935
          %937 = vmin.xlane.f32.xlu0 %v917
          %v938 = vpop.xlane.xlu0 %937
          %939 = vmin.xlane.f32.xlu0 %v918
          %v940 = vpop.xlane.xlu0 %939
          %941 = vmin.xlane.f32.xlu0 %v919
          %v942 = vpop.xlane.xlu0 %941
          %943 = vmin.xlane.f32.xlu0 %v920
          %v944 = vpop.xlane.xlu0 %943
          %945 = vmin.xlane.f32.xlu0 %v921
          %v946 = vpop.xlane.xlu0 %945
          %947 = vmin.xlane.f32.xlu0 %v922
          %v948 = vpop.xlane.xlu0 %947
          %949 = vmin.xlane.f32.xlu0 %v923
          %v950 = vpop.xlane.xlu0 %949
          %951 = vmin.xlane.f32.xlu0 %v924
          %v952 = vpop.xlane.xlu0 %951
          %953 = vmin.xlane.f32.xlu0 %v925
          %v954 = vpop.xlane.xlu0 %953
          %955 = vmin.xlane.f32.xlu0 %v926
          %v956 = vpop.xlane.xlu0 %955
          %957 = vmin.xlane.f32.xlu0 %v927
          %v958 = vpop.xlane.xlu0 %957
          %959 = vmin.xlane.f32.xlu0 %v928
          %v960 = vpop.xlane.xlu0 %959
          %vm961 = vcmp.le.f32.partialorder %v721, %v930
          %vm962 = vcmp.le.f32.partialorder %v722, %v932
          %vm963 = vcmp.le.f32.partialorder %v723, %v934
          %vm964 = vcmp.le.f32.partialorder %v724, %v936
          %vm965 = vcmp.le.f32.partialorder %v725, %v938
          %vm966 = vcmp.le.f32.partialorder %v726, %v940
          %vm967 = vcmp.le.f32.partialorder %v727, %v942
          %vm968 = vcmp.le.f32.partialorder %v728, %v944
          %vm969 = vcmp.le.f32.partialorder %v729, %v946
          %vm970 = vcmp.le.f32.partialorder %v730, %v948
          %vm971 = vcmp.le.f32.partialorder %v731, %v950
          %vm972 = vcmp.le.f32.partialorder %v732, %v952
          %vm973 = vcmp.le.f32.partialorder %v733, %v954
          %vm974 = vcmp.le.f32.partialorder %v734, %v956
          %vm975 = vcmp.le.f32.partialorder %v735, %v958
          %vm976 = vcmp.le.f32.partialorder %v736, %v960
          %vm977 = vmand %vm961, %vm705
          %vm978 = vmand %vm962, %vm706
          %vm979 = vmand %vm963, %vm707
          %vm980 = vmand %vm964, %vm708
          %vm981 = vmand %vm965, %vm709
          %vm982 = vmand %vm966, %vm710
          %vm983 = vmand %vm967, %vm711
          %vm984 = vmand %vm968, %vm712
          %vm985 = vmand %vm969, %vm713
          %vm986 = vmand %vm970, %vm714
          %vm987 = vmand %vm971, %vm715
          %vm988 = vmand %vm972, %vm716
          %vm989 = vmand %vm973, %vm717
          %vm990 = vmand %vm974, %vm718
          %vm991 = vmand %vm975, %vm719
          %vm992 = vmand %vm976, %vm720
          %v993 = vsel %vm977, 0.0, -1e+30
          %v994 = vsel %vm978, 0.0, -1e+30
          %v995 = vsel %vm979, 0.0, -1e+30
          %v996 = vsel %vm980, 0.0, -1e+30
          %v997 = vsel %vm981, 0.0, -1e+30
          %v998 = vsel %vm982, 0.0, -1e+30
          %v999 = vsel %vm983, 0.0, -1e+30
          %v1000 = vsel %vm984, 0.0, -1e+30
          %v1001 = vsel %vm985, 0.0, -1e+30
          %v1002 = vsel %vm986, 0.0, -1e+30
          %v1003 = vsel %vm987, 0.0, -1e+30
          %v1004 = vsel %vm988, 0.0, -1e+30
          %v1005 = vsel %vm989, 0.0, -1e+30
          %v1006 = vsel %vm990, 0.0, -1e+30
          %v1007 = vsel %vm991, 0.0, -1e+30
          %v1008 = vsel %vm992, 0.0, -1e+30
          %1009 = vst [vmem:[#allocation2] sm:$0xff] %v993
          %1010 = vst [vmem:[#allocation2 + $0x8] sm:$0xff] %v994
          %1011 = vst [vmem:[#allocation2 + $0x10] sm:$0xff] %v995
          %1012 = vst [vmem:[#allocation2 + $0x18] sm:$0xff] %v996
          %1013 = vst [vmem:[#allocation2 + $0x20] sm:$0xff] %v997
          %1014 = vst [vmem:[#allocation2 + $0x28] sm:$0xff] %v998
          %1015 = vst [vmem:[#allocation2 + $0x30] sm:$0xff] %v999
          %1016 = vst [vmem:[#allocation2 + $0x38] sm:$0xff] %v1000
          %1017 = vst [vmem:[#allocation2 + $0x40] sm:$0xff] %v1001
          %1018 = vst [vmem:[#allocation2 + $0x48] sm:$0xff] %v1002
          %1019 = vst [vmem:[#allocation2 + $0x50] sm:$0xff] %v1003
          %1020 = vst [vmem:[#allocation2 + $0x58] sm:$0xff] %v1004
          %1021 = vst [vmem:[#allocation2 + $0x60] sm:$0xff] %v1005
          %1022 = vst [vmem:[#allocation2 + $0x68] sm:$0xff] %v1006
          %1023 = vst [vmem:[#allocation2 + $0x70] sm:$0xff] %v1007
          %1024 = vst [vmem:[#allocation2 + $0x78] sm:$0xff] %v1008
        $region56: #{tpu_custom_call.1} parent=51 // pred_fallthru
          _
        %v1025 = vld [vmem:[%s372] sm:$0xff]
        %v1026 = vld [vmem:[%s6] sm:$0xff]
        %v1027 = vld [vmem:[%s6 + $0x8] sm:$0xff]
        %v1028 = vld [vmem:[%s6 + $0x10] sm:$0xff]
        %v1029 = vld [vmem:[%s6 + $0x18] sm:$0xff]
        %v1030 = vld [vmem:[%s6 + $0x20] sm:$0xff]
        %v1031 = vld [vmem:[%s6 + $0x28] sm:$0xff]
        %v1032 = vld [vmem:[%s6 + $0x30] sm:$0xff]
        %v1033 = vld [vmem:[%s6 + $0x38] sm:$0xff]
        %s1034 = smul.u32 %s27, 8
        %v1035 = vld [vmem:[%s5] sm:$0xff]
        %v1036 = vld [vmem:[%s5 + $0x8] sm:$0xff]
        %v1037 = vld [vmem:[%s5 + $0x10] sm:$0xff]
        %v1038 = vld [vmem:[%s5 + $0x18] sm:$0xff]
        %v1039 = vld [vmem:[%s5 + $0x20] sm:$0xff]
        %v1040 = vld [vmem:[%s5 + $0x28] sm:$0xff]
        %v1041 = vld [vmem:[%s5 + $0x30] sm:$0xff]
        %v1042 = vld [vmem:[%s5 + $0x38] sm:$0xff]
        %v1043 = vld [vmem:[%s5 + $0x40] sm:$0xff]
        %v1044 = vld [vmem:[%s5 + $0x48] sm:$0xff]
        %v1045 = vld [vmem:[%s5 + $0x50] sm:$0xff]
        %v1046 = vld [vmem:[%s5 + $0x58] sm:$0xff]
        %v1047 = vld [vmem:[%s5 + $0x60] sm:$0xff]
        %v1048 = vld [vmem:[%s5 + $0x68] sm:$0xff]
        %v1049 = vld [vmem:[%s5 + $0x70] sm:$0xff]
        %v1050 = vld [vmem:[%s5 + $0x78] sm:$0xff]
        %s1051 = scalar_lea.vmem [#allocation2], %s1034
        %v1052 = vld [vmem:[%s1051] sm:$0xff]
        %v1054 = vcombine.high %v1025, %v1025
        %v1056 = vunpack.c.l.s4 1966171168
        %v1057 = vunpack.c.0.s8 %v1056
        %v1058 = vlaneseq
        %v1059 = vshrl.u32 %v1058, 7
        %v1060 = vsub.s32 %v1057, %v1059
        %v1061 = vrot.slane %v1025, %v1060
        %v1063 = vunpack.c.l.s4 1966171168
        %v1064 = vunpack.c.0.s8 %v1063
        %v1065 = vlaneseq
        %v1066 = vshrl.u32 %v1065, 7
        %v1067 = vsub.s32 %v1064, %v1066
        %v1068 = vrot.slane %v1054, %v1067
        %v1069 = vcombine.high %v1061, %v1061
        %v1070 = vcombine.high %v1068, %v1068
        %v1072 = vunpack.c.l.s4 1966171168
        %v1073 = vunpack.c.0.s8 %v1072
        %v1074 = vlaneseq
        %v1075 = vshrl.u32 %v1074, 7
        %v1076 = vsub.s32 %v1073, %v1075
        %v1077 = vrot.slane %v1061, %v1076
        %v1079 = vunpack.c.l.s4 1966171168
        %v1080 = vunpack.c.0.s8 %v1079
        %v1081 = vlaneseq
        %v1082 = vshrl.u32 %v1081, 7
        %v1083 = vsub.s32 %v1080, %v1082
        %v1084 = vrot.slane %v1068, %v1083
        %v1086 = vunpack.c.l.s4 1966171168
        %v1087 = vunpack.c.0.s8 %v1086
        %v1088 = vlaneseq
        %v1089 = vshrl.u32 %v1088, 7
        %v1090 = vsub.s32 %v1087, %v1089
        %v1091 = vrot.slane %v1069, %v1090
        %v1093 = vunpack.c.l.s4 1966171168
        %v1094 = vunpack.c.0.s8 %v1093
        %v1095 = vlaneseq
        %v1096 = vshrl.u32 %v1095, 7
        %v1097 = vsub.s32 %v1094, %v1096
        %v1098 = vrot.slane %v1070, %v1097
        %v1099 = vcombine.high %v1077, %v1077
        %v1100 = vcombine.high %v1084, %v1084
        %v1101 = vcombine.high %v1091, %v1091
        %v1102 = vcombine.high %v1098, %v1098
        %v1103 = vlaneseq
        %v1104 = vshrl.u32 %v1103, 7
        %v1105 = vsub.s32 0, %v1104
        %v1106 = vrot.slane %v1077, %v1105
        %v1107 = vlaneseq
        %v1108 = vshrl.u32 %v1107, 7
        %v1109 = vsub.s32 0, %v1108
        %v1110 = vrot.slane %v1091, %v1109
        %v1111 = vlaneseq
        %v1112 = vshrl.u32 %v1111, 7
        %v1113 = vsub.s32 0, %v1112
        %v1114 = vrot.slane %v1099, %v1113
        %v1115 = vlaneseq
        %v1116 = vshrl.u32 %v1115, 7
        %v1117 = vsub.s32 0, %v1116
        %v1118 = vrot.slane %v1101, %v1117
        %v1119 = vlaneseq
        %v1120 = vshrl.u32 %v1119, 7
        %v1121 = vsub.s32 0, %v1120
        %v1122 = vrot.slane %v1084, %v1121
        %v1123 = vlaneseq
        %v1124 = vshrl.u32 %v1123, 7
        %v1125 = vsub.s32 0, %v1124
        %v1126 = vrot.slane %v1098, %v1125
        %v1127 = vlaneseq
        %v1128 = vshrl.u32 %v1127, 7
        %v1129 = vsub.s32 0, %v1128
        %v1130 = vrot.slane %v1100, %v1129
        %v1131 = vlaneseq
        %v1132 = vshrl.u32 %v1131, 7
        %v1133 = vsub.s32 0, %v1132
        %v1134 = vrot.slane %v1102, %v1133
        %v1143 = vadd.f32 %v1106, %v1035
        %v1144 = vadd.f32 %v1106, %v1036
        %v1145 = vadd.f32 %v1106, %v1037
        %v1146 = vadd.f32 %v1106, %v1038
        %v1147 = vadd.f32 %v1106, %v1039
        %v1148 = vadd.f32 %v1106, %v1040
        %v1149 = vadd.f32 %v1106, %v1041
        %v1150 = vadd.f32 %v1106, %v1042
        %v1151 = vadd.f32 %v1106, %v1043
        %v1152 = vadd.f32 %v1106, %v1044
        %v1153 = vadd.f32 %v1106, %v1045
        %v1154 = vadd.f32 %v1106, %v1046
        %v1155 = vadd.f32 %v1106, %v1047
        %v1156 = vadd.f32 %v1106, %v1048
        %v1157 = vadd.f32 %v1106, %v1049
        %v1158 = vadd.f32 %v1106, %v1050
        %v1159 = vadd.f32 %v1110, %v1035
        %v1160 = vadd.f32 %v1110, %v1036
        %v1161 = vadd.f32 %v1110, %v1037
        %v1162 = vadd.f32 %v1110, %v1038
        %v1163 = vadd.f32 %v1110, %v1039
        %v1164 = vadd.f32 %v1110, %v1040
        %v1165 = vadd.f32 %v1110, %v1041
        %v1166 = vadd.f32 %v1110, %v1042
        %v1167 = vadd.f32 %v1110, %v1043
        %v1168 = vadd.f32 %v1110, %v1044
        %v1169 = vadd.f32 %v1110, %v1045
        %v1170 = vadd.f32 %v1110, %v1046
        %v1171 = vadd.f32 %v1110, %v1047
        %v1172 = vadd.f32 %v1110, %v1048
        %v1173 = vadd.f32 %v1110, %v1049
        %v1174 = vadd.f32 %v1110, %v1050
        %v1175 = vadd.f32 %v1114, %v1035
        %v1176 = vadd.f32 %v1114, %v1036
        %v1177 = vadd.f32 %v1114, %v1037
        %v1178 = vadd.f32 %v1114, %v1038
        %v1179 = vadd.f32 %v1114, %v1039
        %v1180 = vadd.f32 %v1114, %v1040
        %v1181 = vadd.f32 %v1114, %v1041
        %v1182 = vadd.f32 %v1114, %v1042
        %v1183 = vadd.f32 %v1114, %v1043
        %v1184 = vadd.f32 %v1114, %v1044
        %v1185 = vadd.f32 %v1114, %v1045
        %v1186 = vadd.f32 %v1114, %v1046
        %v1187 = vadd.f32 %v1114, %v1047
        %v1188 = vadd.f32 %v1114, %v1048
        %v1189 = vadd.f32 %v1114, %v1049
        %v1190 = vadd.f32 %v1114, %v1050
        %v1191 = vadd.f32 %v1118, %v1035
        %v1192 = vadd.f32 %v1118, %v1036
        %v1193 = vadd.f32 %v1118, %v1037
        %v1194 = vadd.f32 %v1118, %v1038
        %v1195 = vadd.f32 %v1118, %v1039
        %v1196 = vadd.f32 %v1118, %v1040
        %v1197 = vadd.f32 %v1118, %v1041
        %v1198 = vadd.f32 %v1118, %v1042
        %v1199 = vadd.f32 %v1118, %v1043
        %v1200 = vadd.f32 %v1118, %v1044
        %v1201 = vadd.f32 %v1118, %v1045
        %v1202 = vadd.f32 %v1118, %v1046
        %v1203 = vadd.f32 %v1118, %v1047
        %v1204 = vadd.f32 %v1118, %v1048
        %v1205 = vadd.f32 %v1118, %v1049
        %v1206 = vadd.f32 %v1118, %v1050
        %v1207 = vadd.f32 %v1122, %v1035
        %v1208 = vadd.f32 %v1122, %v1036
        %v1209 = vadd.f32 %v1122, %v1037
        %v1210 = vadd.f32 %v1122, %v1038
        %v1211 = vadd.f32 %v1122, %v1039
        %v1212 = vadd.f32 %v1122, %v1040
        %v1213 = vadd.f32 %v1122, %v1041
        %v1214 = vadd.f32 %v1122, %v1042
        %v1215 = vadd.f32 %v1122, %v1043
        %v1216 = vadd.f32 %v1122, %v1044
        %v1217 = vadd.f32 %v1122, %v1045
        %v1218 = vadd.f32 %v1122, %v1046
        %v1219 = vadd.f32 %v1122, %v1047
        %v1220 = vadd.f32 %v1122, %v1048
        %v1221 = vadd.f32 %v1122, %v1049
        %v1222 = vadd.f32 %v1122, %v1050
        %v1223 = vadd.f32 %v1126, %v1035
        %v1224 = vadd.f32 %v1126, %v1036
        %v1225 = vadd.f32 %v1126, %v1037
        %v1226 = vadd.f32 %v1126, %v1038
        %v1227 = vadd.f32 %v1126, %v1039
        %v1228 = vadd.f32 %v1126, %v1040
        %v1229 = vadd.f32 %v1126, %v1041
        %v1230 = vadd.f32 %v1126, %v1042
        %v1231 = vadd.f32 %v1126, %v1043
        %v1232 = vadd.f32 %v1126, %v1044
        %v1233 = vadd.f32 %v1126, %v1045
        %v1234 = vadd.f32 %v1126, %v1046
        %v1235 = vadd.f32 %v1126, %v1047
        %v1236 = vadd.f32 %v1126, %v1048
        %v1237 = vadd.f32 %v1126, %v1049
        %v1238 = vadd.f32 %v1126, %v1050
        %v1239 = vadd.f32 %v1130, %v1035
        %v1240 = vadd.f32 %v1130, %v1036
        %v1241 = vadd.f32 %v1130, %v1037
        %v1242 = vadd.f32 %v1130, %v1038
        %v1243 = vadd.f32 %v1130, %v1039
        %v1244 = vadd.f32 %v1130, %v1040
        %v1245 = vadd.f32 %v1130, %v1041
        %v1246 = vadd.f32 %v1130, %v1042
        %v1247 = vadd.f32 %v1130, %v1043
        %v1248 = vadd.f32 %v1130, %v1044
        %v1249 = vadd.f32 %v1130, %v1045
        %v1250 = vadd.f32 %v1130, %v1046
        %v1251 = vadd.f32 %v1130, %v1047
        %v1252 = vadd.f32 %v1130, %v1048
        %v1253 = vadd.f32 %v1130, %v1049
        %v1254 = vadd.f32 %v1130, %v1050
        %v1255 = vadd.f32 %v1134, %v1035
        %v1256 = vadd.f32 %v1134, %v1036
        %v1257 = vadd.f32 %v1134, %v1037
        %v1258 = vadd.f32 %v1134, %v1038
        %v1259 = vadd.f32 %v1134, %v1039
        %v1260 = vadd.f32 %v1134, %v1040
        %v1261 = vadd.f32 %v1134, %v1041
        %v1262 = vadd.f32 %v1134, %v1042
        %v1263 = vadd.f32 %v1134, %v1043
        %v1264 = vadd.f32 %v1134, %v1044
        %v1265 = vadd.f32 %v1134, %v1045
        %v1266 = vadd.f32 %v1134, %v1046
        %v1267 = vadd.f32 %v1134, %v1047
        %v1268 = vadd.f32 %v1134, %v1048
        %v1269 = vadd.f32 %v1134, %v1049
        %v1270 = vadd.f32 %v1134, %v1050
        %v1271 = vmax.f32 %v1143, 0.0
        %v1272 = vmax.f32 %v1144, 0.0
        %v1273 = vmax.f32 %v1145, 0.0
        %v1274 = vmax.f32 %v1146, 0.0
        %v1275 = vmax.f32 %v1147, 0.0
        %v1276 = vmax.f32 %v1148, 0.0
        %v1277 = vmax.f32 %v1149, 0.0
        %v1278 = vmax.f32 %v1150, 0.0
        %v1279 = vmax.f32 %v1151, 0.0
        %v1280 = vmax.f32 %v1152, 0.0
        %v1281 = vmax.f32 %v1153, 0.0
        %v1282 = vmax.f32 %v1154, 0.0
        %v1283 = vmax.f32 %v1155, 0.0
        %v1284 = vmax.f32 %v1156, 0.0
        %v1285 = vmax.f32 %v1157, 0.0
        %v1286 = vmax.f32 %v1158, 0.0
        %v1287 = vmax.f32 %v1159, 0.0
        %v1288 = vmax.f32 %v1160, 0.0
        %v1289 = vmax.f32 %v1161, 0.0
        %v1290 = vmax.f32 %v1162, 0.0
        %v1291 = vmax.f32 %v1163, 0.0
        %v1292 = vmax.f32 %v1164, 0.0
        %v1293 = vmax.f32 %v1165, 0.0
        %v1294 = vmax.f32 %v1166, 0.0
        %v1295 = vmax.f32 %v1167, 0.0
        %v1296 = vmax.f32 %v1168, 0.0
        %v1297 = vmax.f32 %v1169, 0.0
        %v1298 = vmax.f32 %v1170, 0.0
        %v1299 = vmax.f32 %v1171, 0.0
        %v1300 = vmax.f32 %v1172, 0.0
        %v1301 = vmax.f32 %v1173, 0.0
        %v1302 = vmax.f32 %v1174, 0.0
        %v1303 = vmax.f32 %v1175, 0.0
        %v1304 = vmax.f32 %v1176, 0.0
        %v1305 = vmax.f32 %v1177, 0.0
        %v1306 = vmax.f32 %v1178, 0.0
        %v1307 = vmax.f32 %v1179, 0.0
        %v1308 = vmax.f32 %v1180, 0.0
        %v1309 = vmax.f32 %v1181, 0.0
        %v1310 = vmax.f32 %v1182, 0.0
        %v1311 = vmax.f32 %v1183, 0.0
        %v1312 = vmax.f32 %v1184, 0.0
        %v1313 = vmax.f32 %v1185, 0.0
        %v1314 = vmax.f32 %v1186, 0.0
        %v1315 = vmax.f32 %v1187, 0.0
        %v1316 = vmax.f32 %v1188, 0.0
        %v1317 = vmax.f32 %v1189, 0.0
        %v1318 = vmax.f32 %v1190, 0.0
        %v1319 = vmax.f32 %v1191, 0.0
        %v1320 = vmax.f32 %v1192, 0.0
        %v1321 = vmax.f32 %v1193, 0.0
        %v1322 = vmax.f32 %v1194, 0.0
        %v1323 = vmax.f32 %v1195, 0.0
        %v1324 = vmax.f32 %v1196, 0.0
        %v1325 = vmax.f32 %v1197, 0.0
        %v1326 = vmax.f32 %v1198, 0.0
        %v1327 = vmax.f32 %v1199, 0.0
        %v1328 = vmax.f32 %v1200, 0.0
        %v1329 = vmax.f32 %v1201, 0.0
        %v1330 = vmax.f32 %v1202, 0.0
        %v1331 = vmax.f32 %v1203, 0.0
        %v1332 = vmax.f32 %v1204, 0.0
        %v1333 = vmax.f32 %v1205, 0.0
        %v1334 = vmax.f32 %v1206, 0.0
        %v1335 = vmax.f32 %v1207, 0.0
        %v1336 = vmax.f32 %v1208, 0.0
        %v1337 = vmax.f32 %v1209, 0.0
        %v1338 = vmax.f32 %v1210, 0.0
        %v1339 = vmax.f32 %v1211, 0.0
        %v1340 = vmax.f32 %v1212, 0.0
        %v1341 = vmax.f32 %v1213, 0.0
        %v1342 = vmax.f32 %v1214, 0.0
        %v1343 = vmax.f32 %v1215, 0.0
        %v1344 = vmax.f32 %v1216, 0.0
        %v1345 = vmax.f32 %v1217, 0.0
        %v1346 = vmax.f32 %v1218, 0.0
        %v1347 = vmax.f32 %v1219, 0.0
        %v1348 = vmax.f32 %v1220, 0.0
        %v1349 = vmax.f32 %v1221, 0.0
        %v1350 = vmax.f32 %v1222, 0.0
        %v1351 = vmax.f32 %v1223, 0.0
        %v1352 = vmax.f32 %v1224, 0.0
        %v1353 = vmax.f32 %v1225, 0.0
        %v1354 = vmax.f32 %v1226, 0.0
        %v1355 = vmax.f32 %v1227, 0.0
        %v1356 = vmax.f32 %v1228, 0.0
        %v1357 = vmax.f32 %v1229, 0.0
        %v1358 = vmax.f32 %v1230, 0.0
        %v1359 = vmax.f32 %v1231, 0.0
        %v1360 = vmax.f32 %v1232, 0.0
        %v1361 = vmax.f32 %v1233, 0.0
        %v1362 = vmax.f32 %v1234, 0.0
        %v1363 = vmax.f32 %v1235, 0.0
        %v1364 = vmax.f32 %v1236, 0.0
        %v1365 = vmax.f32 %v1237, 0.0
        %v1366 = vmax.f32 %v1238, 0.0
        %v1367 = vmax.f32 %v1239, 0.0
        %v1368 = vmax.f32 %v1240, 0.0
        %v1369 = vmax.f32 %v1241, 0.0
        %v1370 = vmax.f32 %v1242, 0.0
        %v1371 = vmax.f32 %v1243, 0.0
        %v1372 = vmax.f32 %v1244, 0.0
        %v1373 = vmax.f32 %v1245, 0.0
        %v1374 = vmax.f32 %v1246, 0.0
        %v1375 = vmax.f32 %v1247, 0.0
        %v1376 = vmax.f32 %v1248, 0.0
        %v1377 = vmax.f32 %v1249, 0.0
        %v1378 = vmax.f32 %v1250, 0.0
        %v1379 = vmax.f32 %v1251, 0.0
        %v1380 = vmax.f32 %v1252, 0.0
        %v1381 = vmax.f32 %v1253, 0.0
        %v1382 = vmax.f32 %v1254, 0.0
        %v1383 = vmax.f32 %v1255, 0.0
        %v1384 = vmax.f32 %v1256, 0.0
        %v1385 = vmax.f32 %v1257, 0.0
        %v1386 = vmax.f32 %v1258, 0.0
        %v1387 = vmax.f32 %v1259, 0.0
        %v1388 = vmax.f32 %v1260, 0.0
        %v1389 = vmax.f32 %v1261, 0.0
        %v1390 = vmax.f32 %v1262, 0.0
        %v1391 = vmax.f32 %v1263, 0.0
        %v1392 = vmax.f32 %v1264, 0.0
        %v1393 = vmax.f32 %v1265, 0.0
        %v1394 = vmax.f32 %v1266, 0.0
        %v1395 = vmax.f32 %v1267, 0.0
        %v1396 = vmax.f32 %v1268, 0.0
        %v1397 = vmax.f32 %v1269, 0.0
        %v1398 = vmax.f32 %v1270, 0.0
        %vm1399 = vcmask 523264
        %v1401 = vsel %vm1399, %v1271, 0
        %v1404 = vsel %vm1399, %v1272, 0
        %v1407 = vsel %vm1399, %v1273, 0
        %v1410 = vsel %vm1399, %v1274, 0
        %v1413 = vsel %vm1399, %v1275, 0
        %v1416 = vsel %vm1399, %v1276, 0
        %v1419 = vsel %vm1399, %v1277, 0
        %v1422 = vsel %vm1399, %v1278, 0
        %v1425 = vsel %vm1399, %v1279, 0
        %v1428 = vsel %vm1399, %v1280, 0
        %v1431 = vsel %vm1399, %v1281, 0
        %v1434 = vsel %vm1399, %v1282, 0
        %v1437 = vsel %vm1399, %v1283, 0
        %v1440 = vsel %vm1399, %v1284, 0
        %v1443 = vsel %vm1399, %v1285, 0
        %v1446 = vsel %vm1399, %v1286, 0
        %v1449 = vsel %vm1399, %v1287, 0
        %v1452 = vsel %vm1399, %v1288, 0
        %v1455 = vsel %vm1399, %v1289, 0
        %v1458 = vsel %vm1399, %v1290, 0
        %v1461 = vsel %vm1399, %v1291, 0
        %v1464 = vsel %vm1399, %v1292, 0
        %v1467 = vsel %vm1399, %v1293, 0
        %v1470 = vsel %vm1399, %v1294, 0
        %v1473 = vsel %vm1399, %v1295, 0
        %v1476 = vsel %vm1399, %v1296, 0
        %v1479 = vsel %vm1399, %v1297, 0
        %v1482 = vsel %vm1399, %v1298, 0
        %v1485 = vsel %vm1399, %v1299, 0
        %v1488 = vsel %vm1399, %v1300, 0
        %v1491 = vsel %vm1399, %v1301, 0
        %v1494 = vsel %vm1399, %v1302, 0
        %v1497 = vsel %vm1399, %v1303, 0
        %v1500 = vsel %vm1399, %v1304, 0
        %v1503 = vsel %vm1399, %v1305, 0
        %v1506 = vsel %vm1399, %v1306, 0
        %v1509 = vsel %vm1399, %v1307, 0
        %v1512 = vsel %vm1399, %v1308, 0
        %v1515 = vsel %vm1399, %v1309, 0
        %v1518 = vsel %vm1399, %v1310, 0
        %v1521 = vsel %vm1399, %v1311, 0
        %v1524 = vsel %vm1399, %v1312, 0
        %v1527 = vsel %vm1399, %v1313, 0
        %v1530 = vsel %vm1399, %v1314, 0
        %v1533 = vsel %vm1399, %v1315, 0
        %v1536 = vsel %vm1399, %v1316, 0
        %v1539 = vsel %vm1399, %v1317, 0
        %v1542 = vsel %vm1399, %v1318, 0
        %v1545 = vsel %vm1399, %v1319, 0
        %v1548 = vsel %vm1399, %v1320, 0
        %v1551 = vsel %vm1399, %v1321, 0
        %v1554 = vsel %vm1399, %v1322, 0
        %v1557 = vsel %vm1399, %v1323, 0
        %v1560 = vsel %vm1399, %v1324, 0
        %v1563 = vsel %vm1399, %v1325, 0
        %v1566 = vsel %vm1399, %v1326, 0
        %v1569 = vsel %vm1399, %v1327, 0
        %v1572 = vsel %vm1399, %v1328, 0
        %v1575 = vsel %vm1399, %v1329, 0
        %v1578 = vsel %vm1399, %v1330, 0
        %v1581 = vsel %vm1399, %v1331, 0
        %v1584 = vsel %vm1399, %v1332, 0
        %v1587 = vsel %vm1399, %v1333, 0
        %v1590 = vsel %vm1399, %v1334, 0
        %v1593 = vsel %vm1399, %v1335, 0
        %v1596 = vsel %vm1399, %v1336, 0
        %v1599 = vsel %vm1399, %v1337, 0
        %v1602 = vsel %vm1399, %v1338, 0
        %v1605 = vsel %vm1399, %v1339, 0
        %v1608 = vsel %vm1399, %v1340, 0
        %v1611 = vsel %vm1399, %v1341, 0
        %v1614 = vsel %vm1399, %v1342, 0
        %v1617 = vsel %vm1399, %v1343, 0
        %v1620 = vsel %vm1399, %v1344, 0
        %v1623 = vsel %vm1399, %v1345, 0
        %v1626 = vsel %vm1399, %v1346, 0
        %v1629 = vsel %vm1399, %v1347, 0
        %v1632 = vsel %vm1399, %v1348, 0
        %v1635 = vsel %vm1399, %v1349, 0
        %v1638 = vsel %vm1399, %v1350, 0
        %v1641 = vsel %vm1399, %v1351, 0
        %v1644 = vsel %vm1399, %v1352, 0
        %v1647 = vsel %vm1399, %v1353, 0
        %v1650 = vsel %vm1399, %v1354, 0
        %v1653 = vsel %vm1399, %v1355, 0
        %v1656 = vsel %vm1399, %v1356, 0
        %v1659 = vsel %vm1399, %v1357, 0
        %v1662 = vsel %vm1399, %v1358, 0
        %v1665 = vsel %vm1399, %v1359, 0
        %v1668 = vsel %vm1399, %v1360, 0
        %v1671 = vsel %vm1399, %v1361, 0
        %v1674 = vsel %vm1399, %v1362, 0
        %v1677 = vsel %vm1399, %v1363, 0
        %v1680 = vsel %vm1399, %v1364, 0
        %v1683 = vsel %vm1399, %v1365, 0
        %v1686 = vsel %vm1399, %v1366, 0
        %v1689 = vsel %vm1399, %v1367, 0
        %v1692 = vsel %vm1399, %v1368, 0
        %v1695 = vsel %vm1399, %v1369, 0
        %v1698 = vsel %vm1399, %v1370, 0
        %v1701 = vsel %vm1399, %v1371, 0
        %v1704 = vsel %vm1399, %v1372, 0
        %v1707 = vsel %vm1399, %v1373, 0
        %v1710 = vsel %vm1399, %v1374, 0
        %v1713 = vsel %vm1399, %v1375, 0
        %v1716 = vsel %vm1399, %v1376, 0
        %v1719 = vsel %vm1399, %v1377, 0
        %v1722 = vsel %vm1399, %v1378, 0
        %v1725 = vsel %vm1399, %v1379, 0
        %v1728 = vsel %vm1399, %v1380, 0
        %v1731 = vsel %vm1399, %v1381, 0
        %v1734 = vsel %vm1399, %v1382, 0
        %v1737 = vsel %vm1399, %v1383, 0
        %v1740 = vsel %vm1399, %v1384, 0
        %v1743 = vsel %vm1399, %v1385, 0
        %v1746 = vsel %vm1399, %v1386, 0
        %v1749 = vsel %vm1399, %v1387, 0
        %v1752 = vsel %vm1399, %v1388, 0
        %v1755 = vsel %vm1399, %v1389, 0
        %v1758 = vsel %vm1399, %v1390, 0
        %v1761 = vsel %vm1399, %v1391, 0
        %v1764 = vsel %vm1399, %v1392, 0
        %v1767 = vsel %vm1399, %v1393, 0
        %v1770 = vsel %vm1399, %v1394, 0
        %v1773 = vsel %vm1399, %v1395, 0
        %v1776 = vsel %vm1399, %v1396, 0
        %v1779 = vsel %vm1399, %v1397, 0
        %v1782 = vsel %vm1399, %v1398, 0
        %1784 = vmatprep.subr.mxu0 0.0
        %1785 = vmatpush1.msra.mxu0 %v1026
        %1786 = vmatprep.subr.mxu0 0.0
        %1787 = vmatpush1.msra.mxu0 %v1027
        %1788 = vmatprep.subr.mxu0 0.0
        %1789 = vmatpush1.msra.mxu0 %v1028
        %1790 = vmatprep.subr.mxu0 0.0
        %1791 = vmatpush1.msra.mxu0 %v1029
        %1792 = vmatprep.subr.mxu0 0.0
        %1793 = vmatpush1.msra.mxu0 %v1030
        %1794 = vmatprep.subr.mxu0 0.0
        %1795 = vmatpush1.msra.mxu0 %v1031
        %1796 = vmatprep.subr.mxu0 0.0
        %1797 = vmatpush1.msra.mxu0 %v1032
        %1798 = vmatprep.subr.mxu0 0.0
        %1799 = vmatpush1.msra.mxu0 %v1033
        %1800 = vmatprep.subr.mxu0 0.0
        %1801 = vmatpush1.msra.mxu0 0.0
        %1802 = vmatprep.subr.mxu0 0.0
        %1803 = vmatpush1.msra.mxu0 0.0
        %1804 = vmatprep.subr.mxu0 0.0
        %1805 = vmatpush1.msra.mxu0 0.0
        %1806 = vmatprep.subr.mxu0 0.0
        %1807 = vmatpush1.msra.mxu0 0.0
        %1808 = vmatprep.subr.mxu0 0.0
        %1809 = vmatpush1.msra.mxu0 0.0
        %1810 = vmatprep.subr.mxu0 0.0
        %1811 = vmatpush1.msra.mxu0 0.0
        %1812 = vmatprep.subr.mxu0 0.0
        %1813 = vmatpush1.msra.mxu0 0.0
        %1814 = vmatprep.subr.mxu0 0.0
        %1815 = vmatpush1.msra.mxu0 0.0
        %1816 = vmatprep.subr.mxu0 0.0
        %1817 = vmatpush1.msra.mxu0 0.0
        %1818 = vmatprep.subr.mxu0 0.0
        %1819 = vmatpush1.msra.mxu0 0.0
        %1820 = vmatprep.subr.mxu0 0.0
        %1821 = vmatpush1.msra.mxu0 0.0
        %1822 = vmatprep.subr.mxu0 0.0
        %1823 = vmatpush1.msra.mxu0 0.0
        %1824 = vmatprep.subr.mxu0 0.0
        %1825 = vmatpush1.msra.mxu0 0.0
        %1826 = vmatprep.subr.mxu0 0.0
        %1827 = vmatpush1.msra.mxu0 0.0
        %1828 = vmatprep.subr.mxu0 0.0
        %1829 = vmatpush1.msra.mxu0 0.0
        %1830 = vmatprep.subr.mxu0 0.0
        %1831 = vmatpush1.msra.mxu0 0.0
        %1832 = vmatprep.subr.mxu0 0.0
        %1833 = vmatpush1.msra.mxu0 0.0
        %1834 = vmatprep.subr.mxu0 0.0
        %1835 = vmatpush1.msra.mxu0 0.0
        %1836 = vmatprep.subr.mxu0 0.0
        %1837 = vmatpush1.msra.mxu0 0.0
        %1838 = vmatprep.subr.mxu0 0.0
        %1839 = vmatpush1.msra.mxu0 0.0
        %1840 = vmatprep.subr.mxu0 0.0
        %1841 = vmatpush1.msra.mxu0 0.0
        %1842 = vmatprep.subr.mxu0 0.0
        %1843 = vmatpush1.msra.mxu0 0.0
        %1844 = vmatprep.subr.mxu0 0.0
        %1845 = vmatpush1.msra.mxu0 0.0
        %1846 = vmatprep.subr.mxu0 0.0
        %1847 = vmatpush1.msra.mxu0 0.0
        %1848 = vmatprep.mubr.f32.mxu0 0.0
        %1849 = vmatmul.mubr.f32.gmra.mrb[0].mxu0 %v1401
        %v1850 = vpop.f32.mrb[0].mxu0
        %v1851 = vadd.f32 0.0, %v1850
        %v1852 = vpop.f32.mrb[0].mxu0
        %1853 = vmatprep.mubr.f32.mxu0 0.0
        %1854 = vmatmul.mubr.f32.gmra.mrb[0].mxu0 %v1404
        %v1855 = vpop.f32.mrb[0].mxu0
        %v1856 = vadd.f32 0.0, %v1855
        %v1857 = vpop.f32.mrb[0].mxu0
        %1858 = vmatprep.mubr.f32.mxu0 0.0
        %1859 = vmatmul.mubr.f32.gmra.mrb[0].mxu0 %v1407
        %v1860 = vpop.f32.mrb[0].mxu0
        %v1861 = vadd.f32 0.0, %v1860
        %v1862 = vpop.f32.mrb[0].mxu0
        %1863 = vmatprep.mubr.f32.mxu0 0.0
        %1864 = vmatmul.mubr.f32.gmra.mrb[0].mxu0 %v1410
        %v1865 = vpop.f32.mrb[0].mxu0
        %v1866 = vadd.f32 0.0, %v1865
        %v1867 = vpop.f32.mrb[0].mxu0
        %1868 = vmatprep.mubr.f32.mxu0 0.0
        %1869 = vmatmul.mubr.f32.gmra.mrb[0].mxu0 %v1413
        %v1870 = vpop.f32.mrb[0].mxu0
        %v1871 = vadd.f32 0.0, %v1870
        %v1872 = vpop.f32.mrb[0].mxu0
        %1873 = vmatprep.mubr.f32.mxu0 0.0
        %1874 = vmatmul.mubr.f32.gmra.mrb[0].mxu0 %v1416
        %v1875 = vpop.f32.mrb[0].mxu0
        %v1876 = vadd.f32 0.0, %v1875
        %v1877 = vpop.f32.mrb[0].mxu0
        %1878 = vmatprep.mubr.f32.mxu0 0.0
        %1879 = vmatmul.mubr.f32.gmra.mrb[0].mxu0 %v1419
        %v1880 = vpop.f32.mrb[0].mxu0
        %v1881 = vadd.f32 0.0, %v1880
        %v1882 = vpop.f32.mrb[0].mxu0
        %1883 = vmatprep.mubr.f32.mxu0 0.0
        %1884 = vmatmul.mubr.f32.gmra.mrb[0].mxu0 %v1422
        %v1885 = vpop.f32.mrb[0].mxu0
        %v1886 = vadd.f32 0.0, %v1885
        %v1887 = vpop.f32.mrb[0].mxu0
        %1888 = vmatprep.mubr.f32.mxu0 0.0
        %1889 = vmatmul.mubr.f32.gmra.mrb[0].mxu0 %v1425
        %v1890 = vpop.f32.mrb[0].mxu0
        %v1891 = vadd.f32 0.0, %v1890
        %v1892 = vpop.f32.mrb[0].mxu0
        %1893 = vmatprep.mubr.f32.mxu0 0.0
        %1894 = vmatmul.mubr.f32.gmra.mrb[0].mxu0 %v1428
        %v1895 = vpop.f32.mrb[0].mxu0
        %v1896 = vadd.f32 0.0, %v1895
        %v1897 = vpop.f32.mrb[0].mxu0
        %1898 = vmatprep.mubr.f32.mxu0 0.0
        %1899 = vmatmul.mubr.f32.gmra.mrb[0].mxu0 %v1431
        %v1900 = vpop.f32.mrb[0].mxu0
        %v1901 = vadd.f32 0.0, %v1900
        %v1902 = vpop.f32.mrb[0].mxu0
        %1903 = vmatprep.mubr.f32.mxu0 0.0
        %1904 = vmatmul.mubr.f32.gmra.mrb[0].mxu0 %v1434
        %v1905 = vpop.f32.mrb[0].mxu0
        %v1906 = vadd.f32 0.0, %v1905
        %v1907 = vpop.f32.mrb[0].mxu0
        %1908 = vmatprep.mubr.f32.mxu0 0.0
        %1909 = vmatmul.mubr.f32.gmra.mrb[0].mxu0 %v1437
        %v1910 = vpop.f32.mrb[0].mxu0
        %v1911 = vadd.f32 0.0, %v1910
        %v1912 = vpop.f32.mrb[0].mxu0
        %1913 = vmatprep.mubr.f32.mxu0 0.0
        %1914 = vmatmul.mubr.f32.gmra.mrb[0].mxu0 %v1440
        %v1915 = vpop.f32.mrb[0].mxu0
        %v1916 = vadd.f32 0.0, %v1915
        %v1917 = vpop.f32.mrb[0].mxu0
        %1918 = vmatprep.mubr.f32.mxu0 0.0
        %1919 = vmatmul.mubr.f32.gmra.mrb[0].mxu0 %v1443
        %v1920 = vpop.f32.mrb[0].mxu0
        %v1921 = vadd.f32 0.0, %v1920
        %v1922 = vpop.f32.mrb[0].mxu0
        %1923 = vmatprep.mubr.f32.mxu0 0.0
        %1924 = vmatmul.mubr.f32.gmra.mrb[0].mxu0 %v1446
        %v1925 = vpop.f32.mrb[0].mxu0
        %v1926 = vadd.f32 0.0, %v1925
        %v1927 = vpop.f32.mrb[0].mxu0
        %1928 = vmatprep.mubr.f32.mxu0 0.0
        %1929 = vmatmul.mubr.f32.gmra.mrb[0].mxu0 %v1449
        %v1930 = vpop.f32.mrb[0].mxu0
        %v1931 = vadd.f32 0.0, %v1930
        %v1932 = vpop.f32.mrb[0].mxu0
        %1933 = vmatprep.mubr.f32.mxu0 0.0
        %1934 = vmatmul.mubr.f32.gmra.mrb[0].mxu0 %v1452
        %v1935 = vpop.f32.mrb[0].mxu0
        %v1936 = vadd.f32 0.0, %v1935
        %v1937 = vpop.f32.mrb[0].mxu0
        %1938 = vmatprep.mubr.f32.mxu0 0.0
        %1939 = vmatmul.mubr.f32.gmra.mrb[0].mxu0 %v1455
        %v1940 = vpop.f32.mrb[0].mxu0
        %v1941 = vadd.f32 0.0, %v1940
        %v1942 = vpop.f32.mrb[0].mxu0
        %1943 = vmatprep.mubr.f32.mxu0 0.0
        %1944 = vmatmul.mubr.f32.gmra.mrb[0].mxu0 %v1458
        %v1945 = vpop.f32.mrb[0].mxu0
        %v1946 = vadd.f32 0.0, %v1945
        %v1947 = vpop.f32.mrb[0].mxu0
        %1948 = vmatprep.mubr.f32.mxu0 0.0
        %1949 = vmatmul.mubr.f32.gmra.mrb[0].mxu0 %v1461
        %v1950 = vpop.f32.mrb[0].mxu0
        %v1951 = vadd.f32 0.0, %v1950
        %v1952 = vpop.f32.mrb[0].mxu0
        %1953 = vmatprep.mubr.f32.mxu0 0.0
        %1954 = vmatmul.mubr.f32.gmra.mrb[0].mxu0 %v1464
        %v1955 = vpop.f32.mrb[0].mxu0
        %v1956 = vadd.f32 0.0, %v1955
        %v1957 = vpop.f32.mrb[0].mxu0
        %1958 = vmatprep.mubr.f32.mxu0 0.0
        %1959 = vmatmul.mubr.f32.gmra.mrb[0].mxu0 %v1467
        %v1960 = vpop.f32.mrb[0].mxu0
        %v1961 = vadd.f32 0.0, %v1960
        %v1962 = vpop.f32.mrb[0].mxu0
        %1963 = vmatprep.mubr.f32.mxu0 0.0
        %1964 = vmatmul.mubr.f32.gmra.mrb[0].mxu0 %v1470
        %v1965 = vpop.f32.mrb[0].mxu0
        %v1966 = vadd.f32 0.0, %v1965
        %v1967 = vpop.f32.mrb[0].mxu0
        %1968 = vmatprep.mubr.f32.mxu0 0.0
        %1969 = vmatmul.mubr.f32.gmra.mrb[0].mxu0 %v1473
        %v1970 = vpop.f32.mrb[0].mxu0
        %v1971 = vadd.f32 0.0, %v1970
        %v1972 = vpop.f32.mrb[0].mxu0
        %1973 = vmatprep.mubr.f32.mxu0 0.0
        %1974 = vmatmul.mubr.f32.gmra.mrb[0].mxu0 %v1476
        %v1975 = vpop.f32.mrb[0].mxu0
        %v1976 = vadd.f32 0.0, %v1975
        %v1977 = vpop.f32.mrb[0].mxu0
        %1978 = vmatprep.mubr.f32.mxu0 0.0
        %1979 = vmatmul.mubr.f32.gmra.mrb[0].mxu0 %v1479
        %v1980 = vpop.f32.mrb[0].mxu0
        %v1981 = vadd.f32 0.0, %v1980
        %v1982 = vpop.f32.mrb[0].mxu0
        %1983 = vmatprep.mubr.f32.mxu0 0.0
        %1984 = vmatmul.mubr.f32.gmra.mrb[0].mxu0 %v1482
        %v1985 = vpop.f32.mrb[0].mxu0
        %v1986 = vadd.f32 0.0, %v1985
        %v1987 = vpop.f32.mrb[0].mxu0
        %1988 = vmatprep.mubr.f32.mxu0 0.0
        %1989 = vmatmul.mubr.f32.gmra.mrb[0].mxu0 %v1485
        %v1990 = vpop.f32.mrb[0].mxu0
        %v1991 = vadd.f32 0.0, %v1990
        %v1992 = vpop.f32.mrb[0].mxu0
        %1993 = vmatprep.mubr.f32.mxu0 0.0
        %1994 = vmatmul.mubr.f32.gmra.mrb[0].mxu0 %v1488
        %v1995 = vpop.f32.mrb[0].mxu0
        %v1996 = vadd.f32 0.0, %v1995
        %v1997 = vpop.f32.mrb[0].mxu0
        %1998 = vmatprep.mubr.f32.mxu0 0.0
        %1999 = vmatmul.mubr.f32.gmra.mrb[0].mxu0 %v1491
        %v2000 = vpop.f32.mrb[0].mxu0
        %v2001 = vadd.f32 0.0, %v2000
        %v2002 = vpop.f32.mrb[0].mxu0
        %2003 = vmatprep.mubr.f32.mxu0 0.0
        %2004 = vmatmul.mubr.f32.gmra.mrb[0].mxu0 %v1494
        %v2005 = vpop.f32.mrb[0].mxu0
        %v2006 = vadd.f32 0.0, %v2005
        %v2007 = vpop.f32.mrb[0].mxu0
        %2008 = vmatprep.mubr.f32.mxu0 0.0
        %2009 = vmatmul.mubr.f32.gmra.mrb[0].mxu0 %v1497
        %v2010 = vpop.f32.mrb[0].mxu0
        %v2011 = vadd.f32 0.0, %v2010
        %v2012 = vpop.f32.mrb[0].mxu0
        %2013 = vmatprep.mubr.f32.mxu0 0.0
        %2014 = vmatmul.mubr.f32.gmra.mrb[0].mxu0 %v1500
        %v2015 = vpop.f32.mrb[0].mxu0
        %v2016 = vadd.f32 0.0, %v2015
        %v2017 = vpop.f32.mrb[0].mxu0
        %2018 = vmatprep.mubr.f32.mxu0 0.0
        %2019 = vmatmul.mubr.f32.gmra.mrb[0].mxu0 %v1503
        %v2020 = vpop.f32.mrb[0].mxu0
        %v2021 = vadd.f32 0.0, %v2020
        %v2022 = vpop.f32.mrb[0].mxu0
        %2023 = vmatprep.mubr.f32.mxu0 0.0
        %2024 = vmatmul.mubr.f32.gmra.mrb[0].mxu0 %v1506
        %v2025 = vpop.f32.mrb[0].mxu0
        %v2026 = vadd.f32 0.0, %v2025
        %v2027 = vpop.f32.mrb[0].mxu0
        %2028 = vmatprep.mubr.f32.mxu0 0.0
        %2029 = vmatmul.mubr.f32.gmra.mrb[0].mxu0 %v1509
        %v2030 = vpop.f32.mrb[0].mxu0
        %v2031 = vadd.f32 0.0, %v2030
        %v2032 = vpop.f32.mrb[0].mxu0
        %2033 = vmatprep.mubr.f32.mxu0 0.0
        %2034 = vmatmul.mubr.f32.gmra.mrb[0].mxu0 %v1512
        %v2035 = vpop.f32.mrb[0].mxu0
        %v2036 = vadd.f32 0.0, %v2035
        %v2037 = vpop.f32.mrb[0].mxu0
        %2038 = vmatprep.mubr.f32.mxu0 0.0
        %2039 = vmatmul.mubr.f32.gmra.mrb[0].mxu0 %v1515
        %v2040 = vpop.f32.mrb[0].mxu0
        %v2041 = vadd.f32 0.0, %v2040
        %v2042 = vpop.f32.mrb[0].mxu0
        %2043 = vmatprep.mubr.f32.mxu0 0.0
        %2044 = vmatmul.mubr.f32.gmra.mrb[0].mxu0 %v1518
        %v2045 = vpop.f32.mrb[0].mxu0
        %v2046 = vadd.f32 0.0, %v2045
        %v2047 = vpop.f32.mrb[0].mxu0
        %2048 = vmatprep.mubr.f32.mxu0 0.0
        %2049 = vmatmul.mubr.f32.gmra.mrb[0].mxu0 %v1521
        %v2050 = vpop.f32.mrb[0].mxu0
        %v2051 = vadd.f32 0.0, %v2050
        %v2052 = vpop.f32.mrb[0].mxu0
        %2053 = vmatprep.mubr.f32.mxu0 0.0
        %2054 = vmatmul.mubr.f32.gmra.mrb[0].mxu0 %v1524
        %v2055 = vpop.f32.mrb[0].mxu0
        %v2056 = vadd.f32 0.0, %v2055
        %v2057 = vpop.f32.mrb[0].mxu0
        %2058 = vmatprep.mubr.f32.mxu0 0.0
        %2059 = vmatmul.mubr.f32.gmra.mrb[0].mxu0 %v1527
        %v2060 = vpop.f32.mrb[0].mxu0
        %v2061 = vadd.f32 0.0, %v2060
        %v2062 = vpop.f32.mrb[0].mxu0
        %2063 = vmatprep.mubr.f32.mxu0 0.0
        %2064 = vmatmul.mubr.f32.gmra.mrb[0].mxu0 %v1530
        %v2065 = vpop.f32.mrb[0].mxu0
        %v2066 = vadd.f32 0.0, %v2065
        %v2067 = vpop.f32.mrb[0].mxu0
        %2068 = vmatprep.mubr.f32.mxu0 0.0
        %2069 = vmatmul.mubr.f32.gmra.mrb[0].mxu0 %v1533
        %v2070 = vpop.f32.mrb[0].mxu0
        %v2071 = vadd.f32 0.0, %v2070
        %v2072 = vpop.f32.mrb[0].mxu0
        %2073 = vmatprep.mubr.f32.mxu0 0.0
        %2074 = vmatmul.mubr.f32.gmra.mrb[0].mxu0 %v1536
        %v2075 = vpop.f32.mrb[0].mxu0
        %v2076 = vadd.f32 0.0, %v2075
        %v2077 = vpop.f32.mrb[0].mxu0
        %2078 = vmatprep.mubr.f32.mxu0 0.0
        %2079 = vmatmul.mubr.f32.gmra.mrb[0].mxu0 %v1539
        %v2080 = vpop.f32.mrb[0].mxu0
        %v2081 = vadd.f32 0.0, %v2080
        %v2082 = vpop.f32.mrb[0].mxu0
        %2083 = vmatprep.mubr.f32.mxu0 0.0
        %2084 = vmatmul.mubr.f32.gmra.mrb[0].mxu0 %v1542
        %v2085 = vpop.f32.mrb[0].mxu0
        %v2086 = vadd.f32 0.0, %v2085
        %v2087 = vpop.f32.mrb[0].mxu0
        %2088 = vmatprep.mubr.f32.mxu0 0.0
        %2089 = vmatmul.mubr.f32.gmra.mrb[0].mxu0 %v1545
        %v2090 = vpop.f32.mrb[0].mxu0
        %v2091 = vadd.f32 0.0, %v2090
        %v2092 = vpop.f32.mrb[0].mxu0
        %2093 = vmatprep.mubr.f32.mxu0 0.0
        %2094 = vmatmul.mubr.f32.gmra.mrb[0].mxu0 %v1548
        %v2095 = vpop.f32.mrb[0].mxu0
        %v2096 = vadd.f32 0.0, %v2095
        %v2097 = vpop.f32.mrb[0].mxu0
        %2098 = vmatprep.mubr.f32.mxu0 0.0
        %2099 = vmatmul.mubr.f32.gmra.mrb[0].mxu0 %v1551
        %v2100 = vpop.f32.mrb[0].mxu0
        %v2101 = vadd.f32 0.0, %v2100
        %v2102 = vpop.f32.mrb[0].mxu0
        %2103 = vmatprep.mubr.f32.mxu0 0.0
        %2104 = vmatmul.mubr.f32.gmra.mrb[0].mxu0 %v1554
        %v2105 = vpop.f32.mrb[0].mxu0
        %v2106 = vadd.f32 0.0, %v2105
        %v2107 = vpop.f32.mrb[0].mxu0
        %2108 = vmatprep.mubr.f32.mxu0 0.0
        %2109 = vmatmul.mubr.f32.gmra.mrb[0].mxu0 %v1557
        %v2110 = vpop.f32.mrb[0].mxu0
        %v2111 = vadd.f32 0.0, %v2110
        %v2112 = vpop.f32.mrb[0].mxu0
        %2113 = vmatprep.mubr.f32.mxu0 0.0
        %2114 = vmatmul.mubr.f32.gmra.mrb[0].mxu0 %v1560
        %v2115 = vpop.f32.mrb[0].mxu0
        %v2116 = vadd.f32 0.0, %v2115
        %v2117 = vpop.f32.mrb[0].mxu0
        %2118 = vmatprep.mubr.f32.mxu0 0.0
        %2119 = vmatmul.mubr.f32.gmra.mrb[0].mxu0 %v1563
        %v2120 = vpop.f32.mrb[0].mxu0
        %v2121 = vadd.f32 0.0, %v2120
        %v2122 = vpop.f32.mrb[0].mxu0
        %2123 = vmatprep.mubr.f32.mxu0 0.0
        %2124 = vmatmul.mubr.f32.gmra.mrb[0].mxu0 %v1566
        %v2125 = vpop.f32.mrb[0].mxu0
        %v2126 = vadd.f32 0.0, %v2125
        %v2127 = vpop.f32.mrb[0].mxu0
        %2128 = vmatprep.mubr.f32.mxu0 0.0
        %2129 = vmatmul.mubr.f32.gmra.mrb[0].mxu0 %v1569
        %v2130 = vpop.f32.mrb[0].mxu0
        %v2131 = vadd.f32 0.0, %v2130
        %v2132 = vpop.f32.mrb[0].mxu0
        %2133 = vmatprep.mubr.f32.mxu0 0.0
        %2134 = vmatmul.mubr.f32.gmra.mrb[0].mxu0 %v1572
        %v2135 = vpop.f32.mrb[0].mxu0
        %v2136 = vadd.f32 0.0, %v2135
        %v2137 = vpop.f32.mrb[0].mxu0
        %2138 = vmatprep.mubr.f32.mxu0 0.0
        %2139 = vmatmul.mubr.f32.gmra.mrb[0].mxu0 %v1575
        %v2140 = vpop.f32.mrb[0].mxu0
        %v2141 = vadd.f32 0.0, %v2140
        %v2142 = vpop.f32.mrb[0].mxu0
        %2143 = vmatprep.mubr.f32.mxu0 0.0
        %2144 = vmatmul.mubr.f32.gmra.mrb[0].mxu0 %v1578
        %v2145 = vpop.f32.mrb[0].mxu0
        %v2146 = vadd.f32 0.0, %v2145
        %v2147 = vpop.f32.mrb[0].mxu0
        %2148 = vmatprep.mubr.f32.mxu0 0.0
        %2149 = vmatmul.mubr.f32.gmra.mrb[0].mxu0 %v1581
        %v2150 = vpop.f32.mrb[0].mxu0
        %v2151 = vadd.f32 0.0, %v2150
        %v2152 = vpop.f32.mrb[0].mxu0
        %2153 = vmatprep.mubr.f32.mxu0 0.0
        %2154 = vmatmul.mubr.f32.gmra.mrb[0].mxu0 %v1584
        %v2155 = vpop.f32.mrb[0].mxu0
        %v2156 = vadd.f32 0.0, %v2155
        %v2157 = vpop.f32.mrb[0].mxu0
        %2158 = vmatprep.mubr.f32.mxu0 0.0
        %2159 = vmatmul.mubr.f32.gmra.mrb[0].mxu0 %v1587
        %v2160 = vpop.f32.mrb[0].mxu0
        %v2161 = vadd.f32 0.0, %v2160
        %v2162 = vpop.f32.mrb[0].mxu0
        %2163 = vmatprep.mubr.f32.mxu0 0.0
        %2164 = vmatmul.mubr.f32.gmra.mrb[0].mxu0 %v1590
        %v2165 = vpop.f32.mrb[0].mxu0
        %v2166 = vadd.f32 0.0, %v2165
        %v2167 = vpop.f32.mrb[0].mxu0
        %2168 = vmatprep.mubr.f32.mxu0 0.0
        %2169 = vmatmul.mubr.f32.gmra.mrb[0].mxu0 %v1593
        %v2170 = vpop.f32.mrb[0].mxu0
        %v2171 = vadd.f32 0.0, %v2170
        %v2172 = vpop.f32.mrb[0].mxu0
        %2173 = vmatprep.mubr.f32.mxu0 0.0
        %2174 = vmatmul.mubr.f32.gmra.mrb[0].mxu0 %v1596
        %v2175 = vpop.f32.mrb[0].mxu0
        %v2176 = vadd.f32 0.0, %v2175
        %v2177 = vpop.f32.mrb[0].mxu0
        %2178 = vmatprep.mubr.f32.mxu0 0.0
        %2179 = vmatmul.mubr.f32.gmra.mrb[0].mxu0 %v1599
        %v2180 = vpop.f32.mrb[0].mxu0
        %v2181 = vadd.f32 0.0, %v2180
        %v2182 = vpop.f32.mrb[0].mxu0
        %2183 = vmatprep.mubr.f32.mxu0 0.0
        %2184 = vmatmul.mubr.f32.gmra.mrb[0].mxu0 %v1602
        %v2185 = vpop.f32.mrb[0].mxu0
        %v2186 = vadd.f32 0.0, %v2185
        %v2187 = vpop.f32.mrb[0].mxu0
        %2188 = vmatprep.mubr.f32.mxu0 0.0
        %2189 = vmatmul.mubr.f32.gmra.mrb[0].mxu0 %v1605
        %v2190 = vpop.f32.mrb[0].mxu0
        %v2191 = vadd.f32 0.0, %v2190
        %v2192 = vpop.f32.mrb[0].mxu0
        %2193 = vmatprep.mubr.f32.mxu0 0.0
        %2194 = vmatmul.mubr.f32.gmra.mrb[0].mxu0 %v1608
        %v2195 = vpop.f32.mrb[0].mxu0
        %v2196 = vadd.f32 0.0, %v2195
        %v2197 = vpop.f32.mrb[0].mxu0
        %2198 = vmatprep.mubr.f32.mxu0 0.0
        %2199 = vmatmul.mubr.f32.gmra.mrb[0].mxu0 %v1611
        %v2200 = vpop.f32.mrb[0].mxu0
        %v2201 = vadd.f32 0.0, %v2200
        %v2202 = vpop.f32.mrb[0].mxu0
        %2203 = vmatprep.mubr.f32.mxu0 0.0
        %2204 = vmatmul.mubr.f32.gmra.mrb[0].mxu0 %v1614
        %v2205 = vpop.f32.mrb[0].mxu0
        %v2206 = vadd.f32 0.0, %v2205
        %v2207 = vpop.f32.mrb[0].mxu0
        %2208 = vmatprep.mubr.f32.mxu0 0.0
        %2209 = vmatmul.mubr.f32.gmra.mrb[0].mxu0 %v1617
        %v2210 = vpop.f32.mrb[0].mxu0
        %v2211 = vadd.f32 0.0, %v2210
        %v2212 = vpop.f32.mrb[0].mxu0
        %2213 = vmatprep.mubr.f32.mxu0 0.0
        %2214 = vmatmul.mubr.f32.gmra.mrb[0].mxu0 %v1620
        %v2215 = vpop.f32.mrb[0].mxu0
        %v2216 = vadd.f32 0.0, %v2215
        %v2217 = vpop.f32.mrb[0].mxu0
        %2218 = vmatprep.mubr.f32.mxu0 0.0
        %2219 = vmatmul.mubr.f32.gmra.mrb[0].mxu0 %v1623
        %v2220 = vpop.f32.mrb[0].mxu0
        %v2221 = vadd.f32 0.0, %v2220
        %v2222 = vpop.f32.mrb[0].mxu0
        %2223 = vmatprep.mubr.f32.mxu0 0.0
        %2224 = vmatmul.mubr.f32.gmra.mrb[0].mxu0 %v1626
        %v2225 = vpop.f32.mrb[0].mxu0
        %v2226 = vadd.f32 0.0, %v2225
        %v2227 = vpop.f32.mrb[0].mxu0
        %2228 = vmatprep.mubr.f32.mxu0 0.0
        %2229 = vmatmul.mubr.f32.gmra.mrb[0].mxu0 %v1629
        %v2230 = vpop.f32.mrb[0].mxu0
        %v2231 = vadd.f32 0.0, %v2230
        %v2232 = vpop.f32.mrb[0].mxu0
        %2233 = vmatprep.mubr.f32.mxu0 0.0
        %2234 = vmatmul.mubr.f32.gmra.mrb[0].mxu0 %v1632
        %v2235 = vpop.f32.mrb[0].mxu0
        %v2236 = vadd.f32 0.0, %v2235
        %v2237 = vpop.f32.mrb[0].mxu0
        %2238 = vmatprep.mubr.f32.mxu0 0.0
        %2239 = vmatmul.mubr.f32.gmra.mrb[0].mxu0 %v1635
        %v2240 = vpop.f32.mrb[0].mxu0
        %v2241 = vadd.f32 0.0, %v2240
        %v2242 = vpop.f32.mrb[0].mxu0
        %2243 = vmatprep.mubr.f32.mxu0 0.0
        %2244 = vmatmul.mubr.f32.gmra.mrb[0].mxu0 %v1638
        %v2245 = vpop.f32.mrb[0].mxu0
        %v2246 = vadd.f32 0.0, %v2245
        %v2247 = vpop.f32.mrb[0].mxu0
        %2248 = vmatprep.mubr.f32.mxu0 0.0
        %2249 = vmatmul.mubr.f32.gmra.mrb[0].mxu0 %v1641
        %v2250 = vpop.f32.mrb[0].mxu0
        %v2251 = vadd.f32 0.0, %v2250
        %v2252 = vpop.f32.mrb[0].mxu0
        %2253 = vmatprep.mubr.f32.mxu0 0.0
        %2254 = vmatmul.mubr.f32.gmra.mrb[0].mxu0 %v1644
        %v2255 = vpop.f32.mrb[0].mxu0
        %v2256 = vadd.f32 0.0, %v2255
        %v2257 = vpop.f32.mrb[0].mxu0
        %2258 = vmatprep.mubr.f32.mxu0 0.0
        %2259 = vmatmul.mubr.f32.gmra.mrb[0].mxu0 %v1647
        %v2260 = vpop.f32.mrb[0].mxu0
        %v2261 = vadd.f32 0.0, %v2260
        %v2262 = vpop.f32.mrb[0].mxu0
        %2263 = vmatprep.mubr.f32.mxu0 0.0
        %2264 = vmatmul.mubr.f32.gmra.mrb[0].mxu0 %v1650
        %v2265 = vpop.f32.mrb[0].mxu0
        %v2266 = vadd.f32 0.0, %v2265
        %v2267 = vpop.f32.mrb[0].mxu0
        %2268 = vmatprep.mubr.f32.mxu0 0.0
        %2269 = vmatmul.mubr.f32.gmra.mrb[0].mxu0 %v1653
        %v2270 = vpop.f32.mrb[0].mxu0
        %v2271 = vadd.f32 0.0, %v2270
        %v2272 = vpop.f32.mrb[0].mxu0
        %2273 = vmatprep.mubr.f32.mxu0 0.0
        %2274 = vmatmul.mubr.f32.gmra.mrb[0].mxu0 %v1656
        %v2275 = vpop.f32.mrb[0].mxu0
        %v2276 = vadd.f32 0.0, %v2275
        %v2277 = vpop.f32.mrb[0].mxu0
        %2278 = vmatprep.mubr.f32.mxu0 0.0
        %2279 = vmatmul.mubr.f32.gmra.mrb[0].mxu0 %v1659
        %v2280 = vpop.f32.mrb[0].mxu0
        %v2281 = vadd.f32 0.0, %v2280
        %v2282 = vpop.f32.mrb[0].mxu0
        %2283 = vmatprep.mubr.f32.mxu0 0.0
        %2284 = vmatmul.mubr.f32.gmra.mrb[0].mxu0 %v1662
        %v2285 = vpop.f32.mrb[0].mxu0
        %v2286 = vadd.f32 0.0, %v2285
        %v2287 = vpop.f32.mrb[0].mxu0
        %2288 = vmatprep.mubr.f32.mxu0 0.0
        %2289 = vmatmul.mubr.f32.gmra.mrb[0].mxu0 %v1665
        %v2290 = vpop.f32.mrb[0].mxu0
        %v2291 = vadd.f32 0.0, %v2290
        %v2292 = vpop.f32.mrb[0].mxu0
        %2293 = vmatprep.mubr.f32.mxu0 0.0
        %2294 = vmatmul.mubr.f32.gmra.mrb[0].mxu0 %v1668
        %v2295 = vpop.f32.mrb[0].mxu0
        %v2296 = vadd.f32 0.0, %v2295
        %v2297 = vpop.f32.mrb[0].mxu0
        %2298 = vmatprep.mubr.f32.mxu0 0.0
        %2299 = vmatmul.mubr.f32.gmra.mrb[0].mxu0 %v1671
        %v2300 = vpop.f32.mrb[0].mxu0
        %v2301 = vadd.f32 0.0, %v2300
        %v2302 = vpop.f32.mrb[0].mxu0
        %2303 = vmatprep.mubr.f32.mxu0 0.0
        %2304 = vmatmul.mubr.f32.gmra.mrb[0].mxu0 %v1674
        %v2305 = vpop.f32.mrb[0].mxu0
        %v2306 = vadd.f32 0.0, %v2305
        %v2307 = vpop.f32.mrb[0].mxu0
        %2308 = vmatprep.mubr.f32.mxu0 0.0
        %2309 = vmatmul.mubr.f32.gmra.mrb[0].mxu0 %v1677
        %v2310 = vpop.f32.mrb[0].mxu0
        %v2311 = vadd.f32 0.0, %v2310
        %v2312 = vpop.f32.mrb[0].mxu0
        %2313 = vmatprep.mubr.f32.mxu0 0.0
        %2314 = vmatmul.mubr.f32.gmra.mrb[0].mxu0 %v1680
        %v2315 = vpop.f32.mrb[0].mxu0
        %v2316 = vadd.f32 0.0, %v2315
        %v2317 = vpop.f32.mrb[0].mxu0
        %2318 = vmatprep.mubr.f32.mxu0 0.0
        %2319 = vmatmul.mubr.f32.gmra.mrb[0].mxu0 %v1683
        %v2320 = vpop.f32.mrb[0].mxu0
        %v2321 = vadd.f32 0.0, %v2320
        %v2322 = vpop.f32.mrb[0].mxu0
        %2323 = vmatprep.mubr.f32.mxu0 0.0
        %2324 = vmatmul.mubr.f32.gmra.mrb[0].mxu0 %v1686
        %v2325 = vpop.f32.mrb[0].mxu0
        %v2326 = vadd.f32 0.0, %v2325
        %v2327 = vpop.f32.mrb[0].mxu0
        %2328 = vmatprep.mubr.f32.mxu0 0.0
        %2329 = vmatmul.mubr.f32.gmra.mrb[0].mxu0 %v1689
        %v2330 = vpop.f32.mrb[0].mxu0
        %v2331 = vadd.f32 0.0, %v2330
        %v2332 = vpop.f32.mrb[0].mxu0
        %2333 = vmatprep.mubr.f32.mxu0 0.0
        %2334 = vmatmul.mubr.f32.gmra.mrb[0].mxu0 %v1692
        %v2335 = vpop.f32.mrb[0].mxu0
        %v2336 = vadd.f32 0.0, %v2335
        %v2337 = vpop.f32.mrb[0].mxu0
        %2338 = vmatprep.mubr.f32.mxu0 0.0
        %2339 = vmatmul.mubr.f32.gmra.mrb[0].mxu0 %v1695
        %v2340 = vpop.f32.mrb[0].mxu0
        %v2341 = vadd.f32 0.0, %v2340
        %v2342 = vpop.f32.mrb[0].mxu0
        %2343 = vmatprep.mubr.f32.mxu0 0.0
        %2344 = vmatmul.mubr.f32.gmra.mrb[0].mxu0 %v1698
        %v2345 = vpop.f32.mrb[0].mxu0
        %v2346 = vadd.f32 0.0, %v2345
        %v2347 = vpop.f32.mrb[0].mxu0
        %2348 = vmatprep.mubr.f32.mxu0 0.0
        %2349 = vmatmul.mubr.f32.gmra.mrb[0].mxu0 %v1701
        %v2350 = vpop.f32.mrb[0].mxu0
        %v2351 = vadd.f32 0.0, %v2350
        %v2352 = vpop.f32.mrb[0].mxu0
        %2353 = vmatprep.mubr.f32.mxu0 0.0
        %2354 = vmatmul.mubr.f32.gmra.mrb[0].mxu0 %v1704
        %v2355 = vpop.f32.mrb[0].mxu0
        %v2356 = vadd.f32 0.0, %v2355
        %v2357 = vpop.f32.mrb[0].mxu0
        %2358 = vmatprep.mubr.f32.mxu0 0.0
        %2359 = vmatmul.mubr.f32.gmra.mrb[0].mxu0 %v1707
        %v2360 = vpop.f32.mrb[0].mxu0
        %v2361 = vadd.f32 0.0, %v2360
        %v2362 = vpop.f32.mrb[0].mxu0
        %2363 = vmatprep.mubr.f32.mxu0 0.0
        %2364 = vmatmul.mubr.f32.gmra.mrb[0].mxu0 %v1710
        %v2365 = vpop.f32.mrb[0].mxu0
        %v2366 = vadd.f32 0.0, %v2365
        %v2367 = vpop.f32.mrb[0].mxu0
        %2368 = vmatprep.mubr.f32.mxu0 0.0
        %2369 = vmatmul.mubr.f32.gmra.mrb[0].mxu0 %v1713
        %v2370 = vpop.f32.mrb[0].mxu0
        %v2371 = vadd.f32 0.0, %v2370
        %v2372 = vpop.f32.mrb[0].mxu0
        %2373 = vmatprep.mubr.f32.mxu0 0.0
        %2374 = vmatmul.mubr.f32.gmra.mrb[0].mxu0 %v1716
        %v2375 = vpop.f32.mrb[0].mxu0
        %v2376 = vadd.f32 0.0, %v2375
        %v2377 = vpop.f32.mrb[0].mxu0
        %2378 = vmatprep.mubr.f32.mxu0 0.0
        %2379 = vmatmul.mubr.f32.gmra.mrb[0].mxu0 %v1719
        %v2380 = vpop.f32.mrb[0].mxu0
        %v2381 = vadd.f32 0.0, %v2380
        %v2382 = vpop.f32.mrb[0].mxu0
        %2383 = vmatprep.mubr.f32.mxu0 0.0
        %2384 = vmatmul.mubr.f32.gmra.mrb[0].mxu0 %v1722
        %v2385 = vpop.f32.mrb[0].mxu0
        %v2386 = vadd.f32 0.0, %v2385
        %v2387 = vpop.f32.mrb[0].mxu0
        %2388 = vmatprep.mubr.f32.mxu0 0.0
        %2389 = vmatmul.mubr.f32.gmra.mrb[0].mxu0 %v1725
        %v2390 = vpop.f32.mrb[0].mxu0
        %v2391 = vadd.f32 0.0, %v2390
        %v2392 = vpop.f32.mrb[0].mxu0
        %2393 = vmatprep.mubr.f32.mxu0 0.0
        %2394 = vmatmul.mubr.f32.gmra.mrb[0].mxu0 %v1728
        %v2395 = vpop.f32.mrb[0].mxu0
        %v2396 = vadd.f32 0.0, %v2395
        %v2397 = vpop.f32.mrb[0].mxu0
        %2398 = vmatprep.mubr.f32.mxu0 0.0
        %2399 = vmatmul.mubr.f32.gmra.mrb[0].mxu0 %v1731
        %v2400 = vpop.f32.mrb[0].mxu0
        %v2401 = vadd.f32 0.0, %v2400
        %v2402 = vpop.f32.mrb[0].mxu0
        %2403 = vmatprep.mubr.f32.mxu0 0.0
        %2404 = vmatmul.mubr.f32.gmra.mrb[0].mxu0 %v1734
        %v2405 = vpop.f32.mrb[0].mxu0
        %v2406 = vadd.f32 0.0, %v2405
        %v2407 = vpop.f32.mrb[0].mxu0
        %2408 = vmatprep.mubr.f32.mxu0 0.0
        %2409 = vmatmul.mubr.f32.gmra.mrb[0].mxu0 %v1737
        %v2410 = vpop.f32.mrb[0].mxu0
        %v2411 = vadd.f32 0.0, %v2410
        %v2412 = vpop.f32.mrb[0].mxu0
        %2413 = vmatprep.mubr.f32.mxu0 0.0
        %2414 = vmatmul.mubr.f32.gmra.mrb[0].mxu0 %v1740
        %v2415 = vpop.f32.mrb[0].mxu0
        %v2416 = vadd.f32 0.0, %v2415
        %v2417 = vpop.f32.mrb[0].mxu0
        %2418 = vmatprep.mubr.f32.mxu0 0.0
        %2419 = vmatmul.mubr.f32.gmra.mrb[0].mxu0 %v1743
        %v2420 = vpop.f32.mrb[0].mxu0
        %v2421 = vadd.f32 0.0, %v2420
        %v2422 = vpop.f32.mrb[0].mxu0
        %2423 = vmatprep.mubr.f32.mxu0 0.0
        %2424 = vmatmul.mubr.f32.gmra.mrb[0].mxu0 %v1746
        %v2425 = vpop.f32.mrb[0].mxu0
        %v2426 = vadd.f32 0.0, %v2425
        %v2427 = vpop.f32.mrb[0].mxu0
        %2428 = vmatprep.mubr.f32.mxu0 0.0
        %2429 = vmatmul.mubr.f32.gmra.mrb[0].mxu0 %v1749
        %v2430 = vpop.f32.mrb[0].mxu0
        %v2431 = vadd.f32 0.0, %v2430
        %v2432 = vpop.f32.mrb[0].mxu0
        %2433 = vmatprep.mubr.f32.mxu0 0.0
        %2434 = vmatmul.mubr.f32.gmra.mrb[0].mxu0 %v1752
        %v2435 = vpop.f32.mrb[0].mxu0
        %v2436 = vadd.f32 0.0, %v2435
        %v2437 = vpop.f32.mrb[0].mxu0
        %2438 = vmatprep.mubr.f32.mxu0 0.0
        %2439 = vmatmul.mubr.f32.gmra.mrb[0].mxu0 %v1755
        %v2440 = vpop.f32.mrb[0].mxu0
        %v2441 = vadd.f32 0.0, %v2440
        %v2442 = vpop.f32.mrb[0].mxu0
        %2443 = vmatprep.mubr.f32.mxu0 0.0
        %2444 = vmatmul.mubr.f32.gmra.mrb[0].mxu0 %v1758
        %v2445 = vpop.f32.mrb[0].mxu0
        %v2446 = vadd.f32 0.0, %v2445
        %v2447 = vpop.f32.mrb[0].mxu0
        %2448 = vmatprep.mubr.f32.mxu0 0.0
        %2449 = vmatmul.mubr.f32.gmra.mrb[0].mxu0 %v1761
        %v2450 = vpop.f32.mrb[0].mxu0
        %v2451 = vadd.f32 0.0, %v2450
        %v2452 = vpop.f32.mrb[0].mxu0
        %2453 = vmatprep.mubr.f32.mxu0 0.0
        %2454 = vmatmul.mubr.f32.gmra.mrb[0].mxu0 %v1764
        %v2455 = vpop.f32.mrb[0].mxu0
        %v2456 = vadd.f32 0.0, %v2455
        %v2457 = vpop.f32.mrb[0].mxu0
        %2458 = vmatprep.mubr.f32.mxu0 0.0
        %2459 = vmatmul.mubr.f32.gmra.mrb[0].mxu0 %v1767
        %v2460 = vpop.f32.mrb[0].mxu0
        %v2461 = vadd.f32 0.0, %v2460
        %v2462 = vpop.f32.mrb[0].mxu0
        %2463 = vmatprep.mubr.f32.mxu0 0.0
        %2464 = vmatmul.mubr.f32.gmra.mrb[0].mxu0 %v1770
        %v2465 = vpop.f32.mrb[0].mxu0
        %v2466 = vadd.f32 0.0, %v2465
        %v2467 = vpop.f32.mrb[0].mxu0
        %2468 = vmatprep.mubr.f32.mxu0 0.0
        %2469 = vmatmul.mubr.f32.gmra.mrb[0].mxu0 %v1773
        %v2470 = vpop.f32.mrb[0].mxu0
        %v2471 = vadd.f32 0.0, %v2470
        %v2472 = vpop.f32.mrb[0].mxu0
        %2473 = vmatprep.mubr.f32.mxu0 0.0
        %2474 = vmatmul.mubr.f32.gmra.mrb[0].mxu0 %v1776
        %v2475 = vpop.f32.mrb[0].mxu0
        %v2476 = vadd.f32 0.0, %v2475
        %v2477 = vpop.f32.mrb[0].mxu0
        %2478 = vmatprep.mubr.f32.mxu0 0.0
        %2479 = vmatmul.mubr.f32.gmra.mrb[0].mxu0 %v1779
        %v2480 = vpop.f32.mrb[0].mxu0
        %v2481 = vadd.f32 0.0, %v2480
        %v2482 = vpop.f32.mrb[0].mxu0
        %2483 = vmatprep.mubr.f32.mxu0 0.0
        %2484 = vmatmul.mubr.f32.gmra.mrb[0].mxu0 %v1782
        %v2485 = vpop.f32.mrb[0].mxu0
        %v2486 = vadd.f32 0.0, %v2485
        %v2487 = vpop.f32.mrb[0].mxu0
        %2488 = vdwg.mxu0
        %v2489 = vlaneseq
        %v2490 = vshrl.u32 %v2489, 7
        %v2491 = vsub.s32 0, %v2490
        %v2492 = vrot.slane %v1052, %v2491
        %2494 = vbcast.lane.b32.xlu0 %v2492, 256
        %v2495 = vpop.permute.xlu0 %2494
        %s2497 = sor.u32 256, 8
        %2498 = vbcast.lane.b32.xlu0 %v2492, %s2497
        %v2499 = vpop.permute.xlu0 %2498
        %s2501 = sor.u32 256, 16
        %2502 = vbcast.lane.b32.xlu0 %v2492, %s2501
        %v2503 = vpop.permute.xlu0 %2502
        %s2505 = sor.u32 256, 24
        %2506 = vbcast.lane.b32.xlu0 %v2492, %s2505
        %v2507 = vpop.permute.xlu0 %2506
        %s2509 = sor.u32 256, 32
        %2510 = vbcast.lane.b32.xlu0 %v2492, %s2509
        %v2511 = vpop.permute.xlu0 %2510
        %s2513 = sor.u32 256, 40
        %2514 = vbcast.lane.b32.xlu0 %v2492, %s2513
        %v2515 = vpop.permute.xlu0 %2514
        %s2517 = sor.u32 256, 48
        %2518 = vbcast.lane.b32.xlu0 %v2492, %s2517
        %v2519 = vpop.permute.xlu0 %2518
        %s2521 = sor.u32 256, 56
        %2522 = vbcast.lane.b32.xlu0 %v2492, %s2521
        %v2523 = vpop.permute.xlu0 %2522
        %s2525 = sor.u32 256, 64
        %2526 = vbcast.lane.b32.xlu0 %v2492, %s2525
        %v2527 = vpop.permute.xlu0 %2526
        %s2529 = sor.u32 256, 72
        %2530 = vbcast.lane.b32.xlu0 %v2492, %s2529
        %v2531 = vpop.permute.xlu0 %2530
        %s2533 = sor.u32 256, 80
        %2534 = vbcast.lane.b32.xlu0 %v2492, %s2533
        %v2535 = vpop.permute.xlu0 %2534
        %s2537 = sor.u32 256, 88
        %2538 = vbcast.lane.b32.xlu0 %v2492, %s2537
        %v2539 = vpop.permute.xlu0 %2538
        %s2541 = sor.u32 256, 96
        %2542 = vbcast.lane.b32.xlu0 %v2492, %s2541
        %v2543 = vpop.permute.xlu0 %2542
        %s2545 = sor.u32 256, 104
        %2546 = vbcast.lane.b32.xlu0 %v2492, %s2545
        %v2547 = vpop.permute.xlu0 %2546
        %s2549 = sor.u32 256, 112
        %2550 = vbcast.lane.b32.xlu0 %v2492, %s2549
        %v2551 = vpop.permute.xlu0 %2550
        %s2553 = sor.u32 256, 120
        %2554 = vbcast.lane.b32.xlu0 %v2492, %s2553
        %v2555 = vpop.permute.xlu0 %2554
        %v2556 = vlaneseq
        %v2557 = vshrl.u32 %v2556, 7
        %v2558 = vsub.s32 1, %v2557
        %v2559 = vrot.slane %v1052, %v2558
        %2561 = vbcast.lane.b32.xlu0 %v2559, 256
        %v2562 = vpop.permute.xlu0 %2561
        %s2564 = sor.u32 256, 8
        %2565 = vbcast.lane.b32.xlu0 %v2559, %s2564
        %v2566 = vpop.permute.xlu0 %2565
        %s2568 = sor.u32 256, 16
        %2569 = vbcast.lane.b32.xlu0 %v2559, %s2568
        %v2570 = vpop.permute.xlu0 %2569
        %s2572 = sor.u32 256, 24
        %2573 = vbcast.lane.b32.xlu0 %v2559, %s2572
        %v2574 = vpop.permute.xlu0 %2573
        %s2576 = sor.u32 256, 32
        %2577 = vbcast.lane.b32.xlu0 %v2559, %s2576
        %v2578 = vpop.permute.xlu0 %2577
        %s2580 = sor.u32 256, 40
        %2581 = vbcast.lane.b32.xlu0 %v2559, %s2580
        %v2582 = vpop.permute.xlu0 %2581
        %s2584 = sor.u32 256, 48
        %2585 = vbcast.lane.b32.xlu0 %v2559, %s2584
        %v2586 = vpop.permute.xlu0 %2585
        %s2588 = sor.u32 256, 56
        %2589 = vbcast.lane.b32.xlu0 %v2559, %s2588
        %v2590 = vpop.permute.xlu0 %2589
        %s2592 = sor.u32 256, 64
        %2593 = vbcast.lane.b32.xlu0 %v2559, %s2592
        %v2594 = vpop.permute.xlu0 %2593
        %s2596 = sor.u32 256, 72
        %2597 = vbcast.lane.b32.xlu0 %v2559, %s2596
        %v2598 = vpop.permute.xlu0 %2597
        %s2600 = sor.u32 256, 80
        %2601 = vbcast.lane.b32.xlu0 %v2559, %s2600
        %v2602 = vpop.permute.xlu0 %2601
        %s2604 = sor.u32 256, 88
        %2605 = vbcast.lane.b32.xlu0 %v2559, %s2604
        %v2606 = vpop.permute.xlu0 %2605
        %s2608 = sor.u32 256, 96
        %2609 = vbcast.lane.b32.xlu0 %v2559, %s2608
        %v2610 = vpop.permute.xlu0 %2609
        %s2612 = sor.u32 256, 104
        %2613 = vbcast.lane.b32.xlu0 %v2559, %s2612
        %v2614 = vpop.permute.xlu0 %2613
        %s2616 = sor.u32 256, 112
        %2617 = vbcast.lane.b32.xlu0 %v2559, %s2616
        %v2618 = vpop.permute.xlu0 %2617
        %s2620 = sor.u32 256, 120
        %2621 = vbcast.lane.b32.xlu0 %v2559, %s2620
        %v2622 = vpop.permute.xlu0 %2621
        %v2623 = vlaneseq
        %v2624 = vshrl.u32 %v2623, 7
        %v2625 = vsub.s32 2, %v2624
        %v2626 = vrot.slane %v1052, %v2625
        %2628 = vbcast.lane.b32.xlu0 %v2626, 256
        %v2629 = vpop.permute.xlu0 %2628
        %s2631 = sor.u32 256, 8
        %2632 = vbcast.lane.b32.xlu0 %v2626, %s2631
        %v2633 = vpop.permute.xlu0 %2632
        %s2635 = sor.u32 256, 16
        %2636 = vbcast.lane.b32.xlu0 %v2626, %s2635
        %v2637 = vpop.permute.xlu0 %2636
        %s2639 = sor.u32 256, 24
        %2640 = vbcast.lane.b32.xlu0 %v2626, %s2639
        %v2641 = vpop.permute.xlu0 %2640
        %s2643 = sor.u32 256, 32
        %2644 = vbcast.lane.b32.xlu0 %v2626, %s2643
        %v2645 = vpop.permute.xlu0 %2644
        %s2647 = sor.u32 256, 40
        %2648 = vbcast.lane.b32.xlu0 %v2626, %s2647
        %v2649 = vpop.permute.xlu0 %2648
        %s2651 = sor.u32 256, 48
        %2652 = vbcast.lane.b32.xlu0 %v2626, %s2651
        %v2653 = vpop.permute.xlu0 %2652
        %s2655 = sor.u32 256, 56
        %2656 = vbcast.lane.b32.xlu0 %v2626, %s2655
        %v2657 = vpop.permute.xlu0 %2656
        %s2659 = sor.u32 256, 64
        %2660 = vbcast.lane.b32.xlu0 %v2626, %s2659
        %v2661 = vpop.permute.xlu0 %2660
        %s2663 = sor.u32 256, 72
        %2664 = vbcast.lane.b32.xlu0 %v2626, %s2663
        %v2665 = vpop.permute.xlu0 %2664
        %s2667 = sor.u32 256, 80
        %2668 = vbcast.lane.b32.xlu0 %v2626, %s2667
        %v2669 = vpop.permute.xlu0 %2668
        %s2671 = sor.u32 256, 88
        %2672 = vbcast.lane.b32.xlu0 %v2626, %s2671
        %v2673 = vpop.permute.xlu0 %2672
        %s2675 = sor.u32 256, 96
        %2676 = vbcast.lane.b32.xlu0 %v2626, %s2675
        %v2677 = vpop.permute.xlu0 %2676
        %s2679 = sor.u32 256, 104
        %2680 = vbcast.lane.b32.xlu0 %v2626, %s2679
        %v2681 = vpop.permute.xlu0 %2680
        %s2683 = sor.u32 256, 112
        %2684 = vbcast.lane.b32.xlu0 %v2626, %s2683
        %v2685 = vpop.permute.xlu0 %2684
        %s2687 = sor.u32 256, 120
        %2688 = vbcast.lane.b32.xlu0 %v2626, %s2687
        %v2689 = vpop.permute.xlu0 %2688
        %v2690 = vlaneseq
        %v2691 = vshrl.u32 %v2690, 7
        %v2692 = vsub.s32 3, %v2691
        %v2693 = vrot.slane %v1052, %v2692
        %2695 = vbcast.lane.b32.xlu0 %v2693, 256
        %v2696 = vpop.permute.xlu0 %2695
        %s2698 = sor.u32 256, 8
        %2699 = vbcast.lane.b32.xlu0 %v2693, %s2698
        %v2700 = vpop.permute.xlu0 %2699
        %s2702 = sor.u32 256, 16
        %2703 = vbcast.lane.b32.xlu0 %v2693, %s2702
        %v2704 = vpop.permute.xlu0 %2703
        %s2706 = sor.u32 256, 24
        %2707 = vbcast.lane.b32.xlu0 %v2693, %s2706
        %v2708 = vpop.permute.xlu0 %2707
        %s2710 = sor.u32 256, 32
        %2711 = vbcast.lane.b32.xlu0 %v2693, %s2710
        %v2712 = vpop.permute.xlu0 %2711
        %s2714 = sor.u32 256, 40
        %2715 = vbcast.lane.b32.xlu0 %v2693, %s2714
        %v2716 = vpop.permute.xlu0 %2715
        %s2718 = sor.u32 256, 48
        %2719 = vbcast.lane.b32.xlu0 %v2693, %s2718
        %v2720 = vpop.permute.xlu0 %2719
        %s2722 = sor.u32 256, 56
        %2723 = vbcast.lane.b32.xlu0 %v2693, %s2722
        %v2724 = vpop.permute.xlu0 %2723
        %s2726 = sor.u32 256, 64
        %2727 = vbcast.lane.b32.xlu0 %v2693, %s2726
        %v2728 = vpop.permute.xlu0 %2727
        %s2730 = sor.u32 256, 72
        %2731 = vbcast.lane.b32.xlu0 %v2693, %s2730
        %v2732 = vpop.permute.xlu0 %2731
        %s2734 = sor.u32 256, 80
        %2735 = vbcast.lane.b32.xlu0 %v2693, %s2734
        %v2736 = vpop.permute.xlu0 %2735
        %s2738 = sor.u32 256, 88
        %2739 = vbcast.lane.b32.xlu0 %v2693, %s2738
        %v2740 = vpop.permute.xlu0 %2739
        %s2742 = sor.u32 256, 96
        %2743 = vbcast.lane.b32.xlu0 %v2693, %s2742
        %v2744 = vpop.permute.xlu0 %2743
        %s2746 = sor.u32 256, 104
        %2747 = vbcast.lane.b32.xlu0 %v2693, %s2746
        %v2748 = vpop.permute.xlu0 %2747
        %s2750 = sor.u32 256, 112
        %2751 = vbcast.lane.b32.xlu0 %v2693, %s2750
        %v2752 = vpop.permute.xlu0 %2751
        %s2754 = sor.u32 256, 120
        %2755 = vbcast.lane.b32.xlu0 %v2693, %s2754
        %v2756 = vpop.permute.xlu0 %2755
        %v2757 = vlaneseq
        %v2758 = vshrl.u32 %v2757, 7
        %v2759 = vsub.s32 4, %v2758
        %v2760 = vrot.slane %v1052, %v2759
        %2762 = vbcast.lane.b32.xlu0 %v2760, 256
        %v2763 = vpop.permute.xlu0 %2762
        %s2765 = sor.u32 256, 8
        %2766 = vbcast.lane.b32.xlu0 %v2760, %s2765
        %v2767 = vpop.permute.xlu0 %2766
        %s2769 = sor.u32 256, 16
        %2770 = vbcast.lane.b32.xlu0 %v2760, %s2769
        %v2771 = vpop.permute.xlu0 %2770
        %s2773 = sor.u32 256, 24
        %2774 = vbcast.lane.b32.xlu0 %v2760, %s2773
        %v2775 = vpop.permute.xlu0 %2774
        %s2777 = sor.u32 256, 32
        %2778 = vbcast.lane.b32.xlu0 %v2760, %s2777
        %v2779 = vpop.permute.xlu0 %2778
        %s2781 = sor.u32 256, 40
        %2782 = vbcast.lane.b32.xlu0 %v2760, %s2781
        %v2783 = vpop.permute.xlu0 %2782
        %s2785 = sor.u32 256, 48
        %2786 = vbcast.lane.b32.xlu0 %v2760, %s2785
        %v2787 = vpop.permute.xlu0 %2786
        %s2789 = sor.u32 256, 56
        %2790 = vbcast.lane.b32.xlu0 %v2760, %s2789
        %v2791 = vpop.permute.xlu0 %2790
        %s2793 = sor.u32 256, 64
        %2794 = vbcast.lane.b32.xlu0 %v2760, %s2793
        %v2795 = vpop.permute.xlu0 %2794
        %s2797 = sor.u32 256, 72
        %2798 = vbcast.lane.b32.xlu0 %v2760, %s2797
        %v2799 = vpop.permute.xlu0 %2798
        %s2801 = sor.u32 256, 80
        %2802 = vbcast.lane.b32.xlu0 %v2760, %s2801
        %v2803 = vpop.permute.xlu0 %2802
        %s2805 = sor.u32 256, 88
        %2806 = vbcast.lane.b32.xlu0 %v2760, %s2805
        %v2807 = vpop.permute.xlu0 %2806
        %s2809 = sor.u32 256, 96
        %2810 = vbcast.lane.b32.xlu0 %v2760, %s2809
        %v2811 = vpop.permute.xlu0 %2810
        %s2813 = sor.u32 256, 104
        %2814 = vbcast.lane.b32.xlu0 %v2760, %s2813
        %v2815 = vpop.permute.xlu0 %2814
        %s2817 = sor.u32 256, 112
        %2818 = vbcast.lane.b32.xlu0 %v2760, %s2817
        %v2819 = vpop.permute.xlu0 %2818
        %s2821 = sor.u32 256, 120
        %2822 = vbcast.lane.b32.xlu0 %v2760, %s2821
        %v2823 = vpop.permute.xlu0 %2822
        %v2824 = vlaneseq
        %v2825 = vshrl.u32 %v2824, 7
        %v2826 = vsub.s32 5, %v2825
        %v2827 = vrot.slane %v1052, %v2826
        %2829 = vbcast.lane.b32.xlu0 %v2827, 256
        %v2830 = vpop.permute.xlu0 %2829
        %s2832 = sor.u32 256, 8
        %2833 = vbcast.lane.b32.xlu0 %v2827, %s2832
        %v2834 = vpop.permute.xlu0 %2833
        %s2836 = sor.u32 256, 16
        %2837 = vbcast.lane.b32.xlu0 %v2827, %s2836
        %v2838 = vpop.permute.xlu0 %2837
        %s2840 = sor.u32 256, 24
        %2841 = vbcast.lane.b32.xlu0 %v2827, %s2840
        %v2842 = vpop.permute.xlu0 %2841
        %s2844 = sor.u32 256, 32
        %2845 = vbcast.lane.b32.xlu0 %v2827, %s2844
        %v2846 = vpop.permute.xlu0 %2845
        %s2848 = sor.u32 256, 40
        %2849 = vbcast.lane.b32.xlu0 %v2827, %s2848
        %v2850 = vpop.permute.xlu0 %2849
        %s2852 = sor.u32 256, 48
        %2853 = vbcast.lane.b32.xlu0 %v2827, %s2852
        %v2854 = vpop.permute.xlu0 %2853
        %s2856 = sor.u32 256, 56
        %2857 = vbcast.lane.b32.xlu0 %v2827, %s2856
        %v2858 = vpop.permute.xlu0 %2857
        %s2860 = sor.u32 256, 64
        %2861 = vbcast.lane.b32.xlu0 %v2827, %s2860
        %v2862 = vpop.permute.xlu0 %2861
        %s2864 = sor.u32 256, 72
        %2865 = vbcast.lane.b32.xlu0 %v2827, %s2864
        %v2866 = vpop.permute.xlu0 %2865
        %s2868 = sor.u32 256, 80
        %2869 = vbcast.lane.b32.xlu0 %v2827, %s2868
        %v2870 = vpop.permute.xlu0 %2869
        %s2872 = sor.u32 256, 88
        %2873 = vbcast.lane.b32.xlu0 %v2827, %s2872
        %v2874 = vpop.permute.xlu0 %2873
        %s2876 = sor.u32 256, 96
        %2877 = vbcast.lane.b32.xlu0 %v2827, %s2876
        %v2878 = vpop.permute.xlu0 %2877
        %s2880 = sor.u32 256, 104
        %2881 = vbcast.lane.b32.xlu0 %v2827, %s2880
        %v2882 = vpop.permute.xlu0 %2881
        %s2884 = sor.u32 256, 112
        %2885 = vbcast.lane.b32.xlu0 %v2827, %s2884
        %v2886 = vpop.permute.xlu0 %2885
        %s2888 = sor.u32 256, 120
        %2889 = vbcast.lane.b32.xlu0 %v2827, %s2888
        %v2890 = vpop.permute.xlu0 %2889
        %v2891 = vlaneseq
        %v2892 = vshrl.u32 %v2891, 7
        %v2893 = vsub.s32 6, %v2892
        %v2894 = vrot.slane %v1052, %v2893
        %2896 = vbcast.lane.b32.xlu0 %v2894, 256
        %v2897 = vpop.permute.xlu0 %2896
        %s2899 = sor.u32 256, 8
        %2900 = vbcast.lane.b32.xlu0 %v2894, %s2899
        %v2901 = vpop.permute.xlu0 %2900
        %s2903 = sor.u32 256, 16
        %2904 = vbcast.lane.b32.xlu0 %v2894, %s2903
        %v2905 = vpop.permute.xlu0 %2904
        %s2907 = sor.u32 256, 24
        %2908 = vbcast.lane.b32.xlu0 %v2894, %s2907
        %v2909 = vpop.permute.xlu0 %2908
        %s2911 = sor.u32 256, 32
        %2912 = vbcast.lane.b32.xlu0 %v2894, %s2911
        %v2913 = vpop.permute.xlu0 %2912
        %s2915 = sor.u32 256, 40
        %2916 = vbcast.lane.b32.xlu0 %v2894, %s2915
        %v2917 = vpop.permute.xlu0 %2916
        %s2919 = sor.u32 256, 48
        %2920 = vbcast.lane.b32.xlu0 %v2894, %s2919
        %v2921 = vpop.permute.xlu0 %2920
        %s2923 = sor.u32 256, 56
        %2924 = vbcast.lane.b32.xlu0 %v2894, %s2923
        %v2925 = vpop.permute.xlu0 %2924
        %s2927 = sor.u32 256, 64
        %2928 = vbcast.lane.b32.xlu0 %v2894, %s2927
        %v2929 = vpop.permute.xlu0 %2928
        %s2931 = sor.u32 256, 72
        %2932 = vbcast.lane.b32.xlu0 %v2894, %s2931
        %v2933 = vpop.permute.xlu0 %2932
        %s2935 = sor.u32 256, 80
        %2936 = vbcast.lane.b32.xlu0 %v2894, %s2935
        %v2937 = vpop.permute.xlu0 %2936
        %s2939 = sor.u32 256, 88
        %2940 = vbcast.lane.b32.xlu0 %v2894, %s2939
        %v2941 = vpop.permute.xlu0 %2940
        %s2943 = sor.u32 256, 96
        %2944 = vbcast.lane.b32.xlu0 %v2894, %s2943
        %v2945 = vpop.permute.xlu0 %2944
        %s2947 = sor.u32 256, 104
        %2948 = vbcast.lane.b32.xlu0 %v2894, %s2947
        %v2949 = vpop.permute.xlu0 %2948
        %s2951 = sor.u32 256, 112
        %2952 = vbcast.lane.b32.xlu0 %v2894, %s2951
        %v2953 = vpop.permute.xlu0 %2952
        %s2955 = sor.u32 256, 120
        %2956 = vbcast.lane.b32.xlu0 %v2894, %s2955
        %v2957 = vpop.permute.xlu0 %2956
        %v2958 = vlaneseq
        %v2959 = vshrl.u32 %v2958, 7
        %v2960 = vsub.s32 7, %v2959
        %v2961 = vrot.slane %v1052, %v2960
        %2963 = vbcast.lane.b32.xlu0 %v2961, 256
        %v2964 = vpop.permute.xlu0 %2963
        %s2966 = sor.u32 256, 8
        %2967 = vbcast.lane.b32.xlu0 %v2961, %s2966
        %v2968 = vpop.permute.xlu0 %2967
        %s2970 = sor.u32 256, 16
        %2971 = vbcast.lane.b32.xlu0 %v2961, %s2970
        %v2972 = vpop.permute.xlu0 %2971
        %s2974 = sor.u32 256, 24
        %2975 = vbcast.lane.b32.xlu0 %v2961, %s2974
        %v2976 = vpop.permute.xlu0 %2975
        %s2978 = sor.u32 256, 32
        %2979 = vbcast.lane.b32.xlu0 %v2961, %s2978
        %v2980 = vpop.permute.xlu0 %2979
        %s2982 = sor.u32 256, 40
        %2983 = vbcast.lane.b32.xlu0 %v2961, %s2982
        %v2984 = vpop.permute.xlu0 %2983
        %s2986 = sor.u32 256, 48
        %2987 = vbcast.lane.b32.xlu0 %v2961, %s2986
        %v2988 = vpop.permute.xlu0 %2987
        %s2990 = sor.u32 256, 56
        %2991 = vbcast.lane.b32.xlu0 %v2961, %s2990
        %v2992 = vpop.permute.xlu0 %2991
        %s2994 = sor.u32 256, 64
        %2995 = vbcast.lane.b32.xlu0 %v2961, %s2994
        %v2996 = vpop.permute.xlu0 %2995
        %s2998 = sor.u32 256, 72
        %2999 = vbcast.lane.b32.xlu0 %v2961, %s2998
        %v3000 = vpop.permute.xlu0 %2999
        %s3002 = sor.u32 256, 80
        %3003 = vbcast.lane.b32.xlu0 %v2961, %s3002
        %v3004 = vpop.permute.xlu0 %3003
        %s3006 = sor.u32 256, 88
        %3007 = vbcast.lane.b32.xlu0 %v2961, %s3006
        %v3008 = vpop.permute.xlu0 %3007
        %s3010 = sor.u32 256, 96
        %3011 = vbcast.lane.b32.xlu0 %v2961, %s3010
        %v3012 = vpop.permute.xlu0 %3011
        %s3014 = sor.u32 256, 104
        %3015 = vbcast.lane.b32.xlu0 %v2961, %s3014
        %v3016 = vpop.permute.xlu0 %3015
        %s3018 = sor.u32 256, 112
        %3019 = vbcast.lane.b32.xlu0 %v2961, %s3018
        %v3020 = vpop.permute.xlu0 %3019
        %s3022 = sor.u32 256, 120
        %3023 = vbcast.lane.b32.xlu0 %v2961, %s3022
        %v3024 = vpop.permute.xlu0 %3023
        %v3025 = vadd.f32 %v1851, %v2495
        %v3026 = vadd.f32 %v1856, %v2499
        %v3027 = vadd.f32 %v1861, %v2503
        %v3028 = vadd.f32 %v1866, %v2507
        %v3029 = vadd.f32 %v1871, %v2511
        %v3030 = vadd.f32 %v1876, %v2515
        %v3031 = vadd.f32 %v1881, %v2519
        %v3032 = vadd.f32 %v1886, %v2523
        %v3033 = vadd.f32 %v1891, %v2527
        %v3034 = vadd.f32 %v1896, %v2531
        %v3035 = vadd.f32 %v1901, %v2535
        %v3036 = vadd.f32 %v1906, %v2539
        %v3037 = vadd.f32 %v1911, %v2543
        %v3038 = vadd.f32 %v1916, %v2547
        %v3039 = vadd.f32 %v1921, %v2551
        %v3040 = vadd.f32 %v1926, %v2555
        %v3041 = vadd.f32 %v1931, %v2562
        %v3042 = vadd.f32 %v1936, %v2566
        %v3043 = vadd.f32 %v1941, %v2570
        %v3044 = vadd.f32 %v1946, %v2574
        %v3045 = vadd.f32 %v1951, %v2578
        %v3046 = vadd.f32 %v1956, %v2582
        %v3047 = vadd.f32 %v1961, %v2586
        %v3048 = vadd.f32 %v1966, %v2590
        %v3049 = vadd.f32 %v1971, %v2594
        %v3050 = vadd.f32 %v1976, %v2598
        %v3051 = vadd.f32 %v1981, %v2602
        %v3052 = vadd.f32 %v1986, %v2606
        %v3053 = vadd.f32 %v1991, %v2610
        %v3054 = vadd.f32 %v1996, %v2614
        %v3055 = vadd.f32 %v2001, %v2618
        %v3056 = vadd.f32 %v2006, %v2622
        %v3057 = vadd.f32 %v2011, %v2629
        %v3058 = vadd.f32 %v2016, %v2633
        %v3059 = vadd.f32 %v2021, %v2637
        %v3060 = vadd.f32 %v2026, %v2641
        %v3061 = vadd.f32 %v2031, %v2645
        %v3062 = vadd.f32 %v2036, %v2649
        %v3063 = vadd.f32 %v2041, %v2653
        %v3064 = vadd.f32 %v2046, %v2657
        %v3065 = vadd.f32 %v2051, %v2661
        %v3066 = vadd.f32 %v2056, %v2665
        %v3067 = vadd.f32 %v2061, %v2669
        %v3068 = vadd.f32 %v2066, %v2673
        %v3069 = vadd.f32 %v2071, %v2677
        %v3070 = vadd.f32 %v2076, %v2681
        %v3071 = vadd.f32 %v2081, %v2685
        %v3072 = vadd.f32 %v2086, %v2689
        %v3073 = vadd.f32 %v2091, %v2696
        %v3074 = vadd.f32 %v2096, %v2700
        %v3075 = vadd.f32 %v2101, %v2704
        %v3076 = vadd.f32 %v2106, %v2708
        %v3077 = vadd.f32 %v2111, %v2712
        %v3078 = vadd.f32 %v2116, %v2716
        %v3079 = vadd.f32 %v2121, %v2720
        %v3080 = vadd.f32 %v2126, %v2724
        %v3081 = vadd.f32 %v2131, %v2728
        %v3082 = vadd.f32 %v2136, %v2732
        %v3083 = vadd.f32 %v2141, %v2736
        %v3084 = vadd.f32 %v2146, %v2740
        %v3085 = vadd.f32 %v2151, %v2744
        %v3086 = vadd.f32 %v2156, %v2748
        %v3087 = vadd.f32 %v2161, %v2752
        %v3088 = vadd.f32 %v2166, %v2756
        %v3089 = vadd.f32 %v2171, %v2763
        %v3090 = vadd.f32 %v2176, %v2767
        %v3091 = vadd.f32 %v2181, %v2771
        %v3092 = vadd.f32 %v2186, %v2775
        %v3093 = vadd.f32 %v2191, %v2779
        %v3094 = vadd.f32 %v2196, %v2783
        %v3095 = vadd.f32 %v2201, %v2787
        %v3096 = vadd.f32 %v2206, %v2791
        %v3097 = vadd.f32 %v2211, %v2795
        %v3098 = vadd.f32 %v2216, %v2799
        %v3099 = vadd.f32 %v2221, %v2803
        %v3100 = vadd.f32 %v2226, %v2807
        %v3101 = vadd.f32 %v2231, %v2811
        %v3102 = vadd.f32 %v2236, %v2815
        %v3103 = vadd.f32 %v2241, %v2819
        %v3104 = vadd.f32 %v2246, %v2823
        %v3105 = vadd.f32 %v2251, %v2830
        %v3106 = vadd.f32 %v2256, %v2834
        %v3107 = vadd.f32 %v2261, %v2838
        %v3108 = vadd.f32 %v2266, %v2842
        %v3109 = vadd.f32 %v2271, %v2846
        %v3110 = vadd.f32 %v2276, %v2850
        %v3111 = vadd.f32 %v2281, %v2854
        %v3112 = vadd.f32 %v2286, %v2858
        %v3113 = vadd.f32 %v2291, %v2862
        %v3114 = vadd.f32 %v2296, %v2866
        %v3115 = vadd.f32 %v2301, %v2870
        %v3116 = vadd.f32 %v2306, %v2874
        %v3117 = vadd.f32 %v2311, %v2878
        %v3118 = vadd.f32 %v2316, %v2882
        %v3119 = vadd.f32 %v2321, %v2886
        %v3120 = vadd.f32 %v2326, %v2890
        %v3121 = vadd.f32 %v2331, %v2897
        %v3122 = vadd.f32 %v2336, %v2901
        %v3123 = vadd.f32 %v2341, %v2905
        %v3124 = vadd.f32 %v2346, %v2909
        %v3125 = vadd.f32 %v2351, %v2913
        %v3126 = vadd.f32 %v2356, %v2917
        %v3127 = vadd.f32 %v2361, %v2921
        %v3128 = vadd.f32 %v2366, %v2925
        %v3129 = vadd.f32 %v2371, %v2929
        %v3130 = vadd.f32 %v2376, %v2933
        %v3131 = vadd.f32 %v2381, %v2937
        %v3132 = vadd.f32 %v2386, %v2941
        %v3133 = vadd.f32 %v2391, %v2945
        %v3134 = vadd.f32 %v2396, %v2949
        %v3135 = vadd.f32 %v2401, %v2953
        %v3136 = vadd.f32 %v2406, %v2957
        %v3137 = vadd.f32 %v2411, %v2964
        %v3138 = vadd.f32 %v2416, %v2968
        %v3139 = vadd.f32 %v2421, %v2972
        %v3140 = vadd.f32 %v2426, %v2976
        %v3141 = vadd.f32 %v2431, %v2980
        %v3142 = vadd.f32 %v2436, %v2984
        %v3143 = vadd.f32 %v2441, %v2988
        %v3144 = vadd.f32 %v2446, %v2992
        %v3145 = vadd.f32 %v2451, %v2996
        %v3146 = vadd.f32 %v2456, %v3000
        %v3147 = vadd.f32 %v2461, %v3004
        %v3148 = vadd.f32 %v2466, %v3008
        %v3149 = vadd.f32 %v2471, %v3012
        %v3150 = vadd.f32 %v2476, %v3016
        %v3151 = vadd.f32 %v2481, %v3020
        %v3152 = vadd.f32 %v2486, %v3024
        %v3153 = vmax.f32 %v3025, %v3026
        %v3154 = vmax.f32 %v3153, %v3027
        %v3155 = vmax.f32 %v3154, %v3028
        %v3156 = vmax.f32 %v3155, %v3029
        %v3157 = vmax.f32 %v3156, %v3030
        %v3158 = vmax.f32 %v3157, %v3031
        %v3159 = vmax.f32 %v3158, %v3032
        %v3160 = vmax.f32 %v3159, %v3033
        %v3161 = vmax.f32 %v3160, %v3034
        %v3162 = vmax.f32 %v3161, %v3035
        %v3163 = vmax.f32 %v3162, %v3036
        %v3164 = vmax.f32 %v3163, %v3037
        %v3165 = vmax.f32 %v3164, %v3038
        %v3166 = vmax.f32 %v3165, %v3039
        %v3167 = vmax.f32 %v3166, %v3040
        %v3168 = vrot.slane %v3167, 4
        %v3169 = vmax.f32 %v3167, %v3168
        %v3170 = vrot.slane %v3169, 2
        %v3171 = vmax.f32 %v3169, %v3170
        %v3172 = vrot.slane %v3171, 1
        %v3173 = vmax.f32 %v3171, %v3172
        %v3174 = vmax.f32 %v3041, %v3042
        %v3175 = vmax.f32 %v3174, %v3043
        %v3176 = vmax.f32 %v3175, %v3044
        %v3177 = vmax.f32 %v3176, %v3045
        %v3178 = vmax.f32 %v3177, %v3046
        %v3179 = vmax.f32 %v3178, %v3047
        %v3180 = vmax.f32 %v3179, %v3048
        %v3181 = vmax.f32 %v3180, %v3049
        %v3182 = vmax.f32 %v3181, %v3050
        %v3183 = vmax.f32 %v3182, %v3051
        %v3184 = vmax.f32 %v3183, %v3052
        %v3185 = vmax.f32 %v3184, %v3053
        %v3186 = vmax.f32 %v3185, %v3054
        %v3187 = vmax.f32 %v3186, %v3055
        %v3188 = vmax.f32 %v3187, %v3056
        %v3189 = vrot.slane %v3188, 4
        %v3190 = vmax.f32 %v3188, %v3189
        %v3191 = vrot.slane %v3190, 2
        %v3192 = vmax.f32 %v3190, %v3191
        %v3193 = vrot.slane %v3192, 1
        %v3194 = vmax.f32 %v3192, %v3193
        %v3195 = vmax.f32 %v3057, %v3058
        %v3196 = vmax.f32 %v3195, %v3059
        %v3197 = vmax.f32 %v3196, %v3060
        %v3198 = vmax.f32 %v3197, %v3061
        %v3199 = vmax.f32 %v3198, %v3062
        %v3200 = vmax.f32 %v3199, %v3063
        %v3201 = vmax.f32 %v3200, %v3064
        %v3202 = vmax.f32 %v3201, %v3065
        %v3203 = vmax.f32 %v3202, %v3066
        %v3204 = vmax.f32 %v3203, %v3067
        %v3205 = vmax.f32 %v3204, %v3068
        %v3206 = vmax.f32 %v3205, %v3069
        %v3207 = vmax.f32 %v3206, %v3070
        %v3208 = vmax.f32 %v3207, %v3071
        %v3209 = vmax.f32 %v3208, %v3072
        %v3210 = vrot.slane %v3209, 4
        %v3211 = vmax.f32 %v3209, %v3210
        %v3212 = vrot.slane %v3211, 2
        %v3213 = vmax.f32 %v3211, %v3212
        %v3214 = vrot.slane %v3213, 1
        %v3215 = vmax.f32 %v3213, %v3214
        %v3216 = vmax.f32 %v3073, %v3074
        %v3217 = vmax.f32 %v3216, %v3075
        %v3218 = vmax.f32 %v3217, %v3076
        %v3219 = vmax.f32 %v3218, %v3077
        %v3220 = vmax.f32 %v3219, %v3078
        %v3221 = vmax.f32 %v3220, %v3079
        %v3222 = vmax.f32 %v3221, %v3080
        %v3223 = vmax.f32 %v3222, %v3081
        %v3224 = vmax.f32 %v3223, %v3082
        %v3225 = vmax.f32 %v3224, %v3083
        %v3226 = vmax.f32 %v3225, %v3084
        %v3227 = vmax.f32 %v3226, %v3085
        %v3228 = vmax.f32 %v3227, %v3086
        %v3229 = vmax.f32 %v3228, %v3087
        %v3230 = vmax.f32 %v3229, %v3088
        %v3231 = vrot.slane %v3230, 4
        %v3232 = vmax.f32 %v3230, %v3231
        %v3233 = vrot.slane %v3232, 2
        %v3234 = vmax.f32 %v3232, %v3233
        %v3235 = vrot.slane %v3234, 1
        %v3236 = vmax.f32 %v3234, %v3235
        %v3237 = vmax.f32 %v3089, %v3090
        %v3238 = vmax.f32 %v3237, %v3091
        %v3239 = vmax.f32 %v3238, %v3092
        %v3240 = vmax.f32 %v3239, %v3093
        %v3241 = vmax.f32 %v3240, %v3094
        %v3242 = vmax.f32 %v3241, %v3095
        %v3243 = vmax.f32 %v3242, %v3096
        %v3244 = vmax.f32 %v3243, %v3097
        %v3245 = vmax.f32 %v3244, %v3098
        %v3246 = vmax.f32 %v3245, %v3099
        %v3247 = vmax.f32 %v3246, %v3100
        %v3248 = vmax.f32 %v3247, %v3101
        %v3249 = vmax.f32 %v3248, %v3102
        %v3250 = vmax.f32 %v3249, %v3103
        %v3251 = vmax.f32 %v3250, %v3104
        %v3252 = vrot.slane %v3251, 4
        %v3253 = vmax.f32 %v3251, %v3252
        %v3254 = vrot.slane %v3253, 2
        %v3255 = vmax.f32 %v3253, %v3254
        %v3256 = vrot.slane %v3255, 1
        %v3257 = vmax.f32 %v3255, %v3256
        %v3258 = vmax.f32 %v3105, %v3106
        %v3259 = vmax.f32 %v3258, %v3107
        %v3260 = vmax.f32 %v3259, %v3108
        %v3261 = vmax.f32 %v3260, %v3109
        %v3262 = vmax.f32 %v3261, %v3110
        %v3263 = vmax.f32 %v3262, %v3111
        %v3264 = vmax.f32 %v3263, %v3112
        %v3265 = vmax.f32 %v3264, %v3113
        %v3266 = vmax.f32 %v3265, %v3114
        %v3267 = vmax.f32 %v3266, %v3115
        %v3268 = vmax.f32 %v3267, %v3116
        %v3269 = vmax.f32 %v3268, %v3117
        %v3270 = vmax.f32 %v3269, %v3118
        %v3271 = vmax.f32 %v3270, %v3119
        %v3272 = vmax.f32 %v3271, %v3120
        %v3273 = vrot.slane %v3272, 4
        %v3274 = vmax.f32 %v3272, %v3273
        %v3275 = vrot.slane %v3274, 2
        %v3276 = vmax.f32 %v3274, %v3275
        %v3277 = vrot.slane %v3276, 1
        %v3278 = vmax.f32 %v3276, %v3277
        %v3279 = vmax.f32 %v3121, %v3122
        %v3280 = vmax.f32 %v3279, %v3123
        %v3281 = vmax.f32 %v3280, %v3124
        %v3282 = vmax.f32 %v3281, %v3125
        %v3283 = vmax.f32 %v3282, %v3126
        %v3284 = vmax.f32 %v3283, %v3127
        %v3285 = vmax.f32 %v3284, %v3128
        %v3286 = vmax.f32 %v3285, %v3129
        %v3287 = vmax.f32 %v3286, %v3130
        %v3288 = vmax.f32 %v3287, %v3131
        %v3289 = vmax.f32 %v3288, %v3132
        %v3290 = vmax.f32 %v3289, %v3133
        %v3291 = vmax.f32 %v3290, %v3134
        %v3292 = vmax.f32 %v3291, %v3135
        %v3293 = vmax.f32 %v3292, %v3136
        %v3294 = vrot.slane %v3293, 4
        %v3295 = vmax.f32 %v3293, %v3294
        %v3296 = vrot.slane %v3295, 2
        %v3297 = vmax.f32 %v3295, %v3296
        %v3298 = vrot.slane %v3297, 1
        %v3299 = vmax.f32 %v3297, %v3298
        %v3300 = vmax.f32 %v3137, %v3138
        %v3301 = vmax.f32 %v3300, %v3139
        %v3302 = vmax.f32 %v3301, %v3140
        %v3303 = vmax.f32 %v3302, %v3141
        %v3304 = vmax.f32 %v3303, %v3142
        %v3305 = vmax.f32 %v3304, %v3143
        %v3306 = vmax.f32 %v3305, %v3144
        %v3307 = vmax.f32 %v3306, %v3145
        %v3308 = vmax.f32 %v3307, %v3146
        %v3309 = vmax.f32 %v3308, %v3147
        %v3310 = vmax.f32 %v3309, %v3148
        %v3311 = vmax.f32 %v3310, %v3149
        %v3312 = vmax.f32 %v3311, %v3150
        %v3313 = vmax.f32 %v3312, %v3151
        %v3314 = vmax.f32 %v3313, %v3152
        %v3315 = vrot.slane %v3314, 4
        %v3316 = vmax.f32 %v3314, %v3315
        %v3317 = vrot.slane %v3316, 2
        %v3318 = vmax.f32 %v3316, %v3317
        %v3319 = vrot.slane %v3318, 1
        %v3320 = vmax.f32 %v3318, %v3319
        %v3321 = vmax.f32 %v3173, -1e+30
        %v3322 = vmax.f32 %v3194, -1e+30
        %v3323 = vmax.f32 %v3215, -1e+30
        %v3324 = vmax.f32 %v3236, -1e+30
        %v3325 = vmax.f32 %v3257, -1e+30
        %v3326 = vmax.f32 %v3278, -1e+30
        %v3327 = vmax.f32 %v3299, -1e+30
        %v3328 = vmax.f32 %v3320, -1e+30
        %v3329 = vld [vmem:[%s7] sm:$0x1]
        %v3331 = vlaneseq
        %v3332 = vshrl.u32 %v3331, 7
        %v3333 = vsub.s32 0, %v3332
        %v3334 = vrot.slane %v3329, %v3333
        %v3336 = vadd.f32 %v3321, %v3334
        %v3337 = vadd.f32 %v3322, %v3334
        %v3338 = vadd.f32 %v3323, %v3334
        %v3339 = vadd.f32 %v3324, %v3334
        %v3340 = vadd.f32 %v3325, %v3334
        %v3341 = vadd.f32 %v3326, %v3334
        %v3342 = vadd.f32 %v3327, %v3334
        %v3343 = vadd.f32 %v3328, %v3334
        %v3352 = vrot.slane %v3337, 7
        %vm3353 = vcmask 1041409
        %v3354 = vsel %vm3353, %v3352, %v3336
        %v3355 = vrot.slane %v3338, 6
        %vm3356 = vcmask 1042434
        %v3357 = vsel %vm3356, %v3355, %v3354
        %v3358 = vrot.slane %v3339, 5
        %vm3359 = vcmask 1043459
        %v3360 = vsel %vm3359, %v3358, %v3357
        %v3361 = vrot.slane %v3340, 4
        %vm3362 = vcmask 1044484
        %v3363 = vsel %vm3362, %v3361, %v3360
        %v3364 = vrot.slane %v3341, 3
        %vm3365 = vcmask 1045509
        %v3366 = vsel %vm3365, %v3364, %v3363
        %v3367 = vrot.slane %v3342, 2
        %vm3368 = vcmask 1046534
        %v3369 = vsel %vm3368, %v3367, %v3366
        %v3370 = vrot.slane %v3343, 1
        %vm3371 = vcmask 1047559
        %v3372 = vsel %vm3371, %v3370, %v3369
        %3374 = vst [vmem:[%s354] sm:$0xff] %v3372
        %s3375 = sand.u32 %s233, 1
        %s3376 = scalar_lea.sflag [#allocation4], %s3375
        %s3377 = sand.u32 %s233, 1
        %s3378 = smul.addr %s3377, 8
        %s3379 = scalar_lea.vmem [#allocation3], %s3378
        // Predicated region
        $region57: #{tpu_custom_call.1} parent=51 // pred_check
          %p3380 = pneg %p243
        $region58: #{tpu_custom_call.1} parent=51 // pred_check_branch
          %3382 = sbr.rel (%p3380) target = $region60
        $region59: #{tpu_custom_call.1} parent=51 // pred_region
          %s3383 = smul.u32 %s26, 16
          %s3384 = sadd.s32 %s3383, %s27
          %s3386 = ssub.s32 128, 128
          %3387 = vsyncadd %s3376, %s3386
          %s3388 = smul.addr %s3384, 128
          %s3389 = scalar_lea.hbm %s8, %s3388
          %s3391 = sshll.u32 %s3379, 4
          %s3392 = int_to_ptr.vmem [resolvable:$true] %s3391
          %3394 = dma.vmem_to_hbm [thread:$0]  %s3392, 128, %s3389, %s3376
        $region60: #{tpu_custom_call.1} parent=51 // pred_fallthru
          _
      $region52: #{tpu_custom_call.1} parent=5 // pred_fallthru
        _
      %p3395 = scmp.le.s32.totalorder 2, %s17
      // Predicated region
      $region61: #{tpu_custom_call.1} parent=5 // pred_check
        %p3396 = pneg %p3395
      $region62: #{tpu_custom_call.1} parent=5 // pred_check_branch
        %3398 = sbr.rel (%p3396) target = $region64
      $region63: #{tpu_custom_call.1} parent=5 // pred_region
        %s3399 = ssub.s32 %s17, 2
        // Predicated region
        $region65: #{tpu_custom_call.1} parent=63 // pred_check
          %p3400 = pneg %p249
        $region66: #{tpu_custom_call.1} parent=63 // pred_check_branch
          %3402 = sbr.rel (%p3400) target = $region68
        $region67: #{tpu_custom_call.1} parent=63 // pred_region
          %s3403 = sand.u32 %s234, 1
          %s3404 = scalar_lea.sflag [#allocation4], %s3403
          %s3405 = sand.u32 %s234, 1
          %s3406 = smul.addr %s3405, 8
          %s3407 = scalar_lea.vmem [#allocation3], %s3406
          %3408 = dma.done %s3404, 128
        $region68: #{tpu_custom_call.1} parent=63 // pred_fallthru
          _
      $region64: #{tpu_custom_call.1} parent=5 // pred_fallthru
        _
    $region6: #{tpu_custom_call.1} parent=1 // loop_footer
      %s21 = sadd.s32 1, %s17
    $region7: #{tpu_custom_call.1} parent=1 // loop_footer_branch
      %16 = sbr.rel target = $region3
    $region8: #{tpu_custom_call.1} parent=1 // loop_exit
      _
    %3409 = vsyncpa [#allocation4], 1
    %s3410 = scalar_lea.sflag [#allocation4], 1
    %3411 = vsyncpa %s3410, 1

</llo_original>
